<compile_context>
chip_gen: v7x
topology: tpu7x:2x2x1
jax: 0.10.0
libtpu: 0.0.40
codegen_flags: <defaults>
</compile_context>

<pallas_src>
import functools

import numpy as np
import jax
import jax.numpy as jnp
from jax.experimental import pallas as pl
from jax.experimental.pallas import tpu as pltpu

EPS = 1e-5
BLK = 24          # per-sample sublane block height (multiple of 8, >= max seq len 20)


# ------------------------------ in-kernel helpers ----------------------------------

def _iota_eye(rows, cols):
    """f32 eye(rows, cols) built from 2-D iotas (rows >= cols -> zero pad rows)."""
    r = jax.lax.broadcasted_iota(jnp.int32, (rows, cols), 0)
    c = jax.lax.broadcasted_iota(jnp.int32, (rows, cols), 1)
    return (r == c).astype(jnp.float32)


def _row_mask(valid, batch):
    """(batch*BLK, 1) f32 mask: 1.0 for rows l < valid inside each BLK-row block."""
    l = jax.lax.broadcasted_iota(jnp.int32, (BLK, 1), 0)
    pattern = (l < valid).astype(jnp.float32)
    return jnp.concatenate([pattern] * batch, axis=0)


def _tree_sum(parts):
    """Pairwise sum so the partial matmuls stay independent (no serial add chain)."""
    while len(parts) > 1:
        nxt = [parts[i] + parts[i + 1] for i in range(0, len(parts) - 1, 2)]
        if len(parts) % 2:
            nxt.append(parts[-1])
        parts = nxt
    return parts[0]


def _stack_nlc(x_ref, batch, seq_len):
    """NCL (batch, Cin, L) ref -> batch-stacked length-major (batch*BLK, Cin) slab.

    The transpose is done on the MXU as eye(BLK, L) @ x_b^T (trans-rhs dot_general,
    same dimension numbers as q @ k.T); rows >= L come out exactly zero.
    """
    eye_pad = _iota_eye(BLK, seq_len)                       # (BLK, L)
    dn = (((1,), (1,)), ((), ()))                           # contract both lane dims
    blocks = [jax.lax.dot_general(eye_pad, x_ref[b], dn,
                                  preferred_element_type=jnp.float32)
              for b in range(batch)]                        # each (BLK, Cin)
    return jnp.concatenate(blocks, axis=0)                  # (batch*BLK, Cin)


def _conv_bn_relu(h, w_all, gb, l_out, batch):
    """One ConvBatchNorm layer on a batch-stacked (batch*BLK, Cin) slab.

    w_all: (K, Cin, Cout) conv weights (conv bias omitted: cancels under BN).
    gb:    (2, Cout) packed [gamma; beta].
    Valid rows per block are 0..l_out-1; pad/garbage rows are masked out of the
    training-mode BatchNorm statistics and are never consumed by valid rows downstream.
    """
    K, cin, cout = w_all.shape
    rows = batch * BLK

    # Extend with a zero chunk so the shifted row slices never read out of bounds.
    pad_rows = ((K - 1 + 7) // 8) * 8
    h_ext = jnp.concatenate([h, jnp.zeros((pad_rows, cin), jnp.float32)], axis=0) \
        if pad_rows else h

    # K independent tap partials (shift-and-matmul), tree-summed.
    parts = [jnp.dot(h_ext[k:k + rows, :], w_all[k],
                     preferred_element_type=jnp.float32) for k in range(K)]
    z = _tree_sum(parts)                                    # (rows, Cout)

    # Training-mode BatchNorm over (batch, valid positions), biased variance, eps=1e-5.
    mask = _row_mask(l_out, batch)                          # (rows, 1)
    inv_n = 1.0 / float(batch * l_out)
    zm = z * mask
    s = jnp.sum(zm, axis=0, keepdims=True)                  # (1, Cout)
    ss = jnp.sum(zm * z, axis=0, keepdims=True)             # (1, Cout)
    mean = s * inv_n
    var = jnp.maximum(ss * inv_n - mean * mean, 0.0)        # guard tiny negative
    scale = gb[0:1, :] * jax.lax.rsqrt(var + EPS)           # gamma / sqrt(var + eps)
    shift = gb[1:2, :] - mean * scale                       # beta - mean * scale
    return jnp.maximum(z * scale + shift, 0.0)              # fused BN + ReLU


def _fc(ha, hb, pa, pb, bf, batch):
    """Fused flatten + concat + Linear on the stacked activations.

    ha/hb: (batch*BLK, C) final branch activations (pad rows arbitrary).
    pa/pb: (n_out, BLK, C) weight planes in torch channel-major flatten order,
           zero on pad rows.  bf: (1, n_out) bias.
    """
    n_out = pa.shape[0]
    rows = batch * BLK

    cols = None
    for o in range(n_out):
        pa_t = jnp.concatenate([pa[o]] * batch, axis=0)     # (rows, C), aligned concat
        pb_t = jnp.concatenate([pb[o]] * batch, axis=0)
        c_o = jnp.sum(ha * pa_t + hb * pb_t, axis=1, keepdims=True)   # (rows, 1) VPU+XLU
        one = (jax.lax.broadcasted_iota(jnp.int32, (1, n_out), 1) == o
               ).astype(jnp.float32)
        col = c_o * one                                      # place into column o
        cols = col if cols is None else cols + col           # (rows, n_out)

    # Per-sample segment sums with one tiny selection matmul.
    r_idx = jax.lax.broadcasted_iota(jnp.int32, (batch, rows), 1)
    b_idx = jax.lax.broadcasted_iota(jnp.int32, (batch, rows), 0)
    sel = jnp.logical_and(r_idx >= b_idx * BLK,
                          r_idx < b_idx * BLK + BLK).astype(jnp.float32)
    return jnp.dot(sel, cols, preferred_element_type=jnp.float32) + bf   # (batch, n_out)


# ----------------------------- fused Pallas kernel ---------------------------------

def fused_forward_kernel(xa_ref, xb_ref,
                         w1a_ref, gb1a_ref, w2a_ref, gb2a_ref,
                         w1b_ref, gb1b_ref, w2b_ref, gb2b_ref,
                         pa_ref, pb_ref, bf_ref,
                         o_ref, *, batch, len_a, len_b):
    k1a, k2a = w1a_ref.shape[0], w2a_ref.shape[0]
    k1b, k2b = w1b_ref.shape[0], w2b_ref.shape[0]
    la1 = len_a - (k1a - 1)
    la2 = la1 - (k2a - 1)
    lb1 = len_b - (k1b - 1)
    lb2 = lb1 - (k2b - 1)

    # Branch A: stack batch into one length-major slab, then two ConvBatchNorm layers.
    ha = _stack_nlc(xa_ref, batch, len_a)                            # (B*BLK, 21)
    ha = _conv_bn_relu(ha, w1a_ref[...], gb1a_ref[...], la1, batch)  # (B*BLK, 16)
    ha = _conv_bn_relu(ha, w2a_ref[...], gb2a_ref[...], la2, batch)  # (B*BLK, 8)

    # Branch B.
    hb = _stack_nlc(xb_ref, batch, len_b)
    hb = _conv_bn_relu(hb, w1b_ref[...], gb1b_ref[...], lb1, batch)
    hb = _conv_bn_relu(hb, w2b_ref[...], gb2b_ref[...], lb2, batch)  # (B*BLK, 8)

    # Fused flatten + concat + final Linear; single output store.
    o_ref[...] = _fc(ha, hb, pa_ref[...], pb_ref[...], bf_ref[...], batch)


# ----------------------------- wrappers (glue) -------------------------------------

def prepare_params(params, len_a=19, len_b=20):
    """One-time rearrangement of PyTorch-layout parameters into kernel layouts."""
    def prep_branch(ps):
        out = []
        for (w, _b, gamma, beta) in ps:          # conv bias dropped (cancels under BN)
            out.append((jnp.transpose(w, (2, 1, 0)).astype(jnp.float32),   # (K, Cin, Cout)
                        jnp.stack([gamma, beta], axis=0).astype(jnp.float32)))  # (2, Cout)
        return out

    conv_a = prep_branch(params["conv_a"])
    conv_b = prep_branch(params["conv_b"])
    shrink = sum(w.shape[0] - 1 for (w, _) in conv_a)
    la2, lb2 = len_a - shrink, len_b - shrink
    c_fin = conv_a[-1][0].shape[-1]
    n_out = params["fc_w"].shape[0]
    fa = c_fin * la2
    # PyTorch flattens (B, C, L) channel-major: feature f = c*L + l.
    # plane[o, l, c] = fc_w[o, c*L + l]; rows l >= L_out zero-padded to BLK.
    wa = jnp.transpose(params["fc_w"][:, :fa].reshape(n_out, c_fin, la2), (0, 2, 1))
    wb = jnp.transpose(params["fc_w"][:, fa:].reshape(n_out, c_fin, lb2), (0, 2, 1))
    pa = jnp.zeros((n_out, BLK, c_fin), jnp.float32).at[:, :la2, :].set(wa)
    pb = jnp.zeros((n_out, BLK, c_fin), jnp.float32).at[:, :lb2, :].set(wb)
    return {"conv_a": conv_a, "conv_b": conv_b, "pa": pa, "pb": pb,
            "bf": params["fc_b"].reshape(1, n_out).astype(jnp.float32)}


@jax.jit
def two_part_forward(tcr_a, tcr_b, prepped):
    B, _, len_a = tcr_a.shape
    len_b = tcr_b.shape[2]
    xa = tcr_a.astype(jnp.float32)          # raw NCL; layout prep happens in-kernel
    xb = tcr_b.astype(jnp.float32)
    (w1a, gb1a), (w2a, gb2a) = prepped["conv_a"]
    (w1b, gb1b), (w2b, gb2b) = prepped["conv_b"]
    n_out = prepped["bf"].shape[1]

    kernel = functools.partial(fused_forward_kernel,
                               batch=B, len_a=len_a, len_b=len_b)
    return pl.pallas_call(
        kernel,
        out_shape=jax.ShapeDtypeStruct((B, n_out), jnp.float32),
        in_specs=[pl.BlockSpec(memory_space=pltpu.MemorySpace.VMEM) for _ in range(13)],
        out_specs=pl.BlockSpec(memory_space=pltpu.MemorySpace.VMEM),
    )(xa, xb, w1a, gb1a, w2a, gb2a, w1b, gb1b, w2b, gb2b,
      prepped["pa"], prepped["pb"], prepped["bf"])


# ----------------------------- parameters ------------------------------------------

def init_params(key, channels=(21, 16, 8), kernel_sizes=(6, 6),
                n_output=2, len_a=19, len_b=20):
    def conv_stack(key):
        ps = []
        for i, (cin, cout) in enumerate(zip(channels[:-1], channels[1:])):
            key, k1, k2 = jax.random.split(key, 3)
            ksz = kernel_sizes[i]
            bound = 1.0 / np.sqrt(cin * ksz)
            w = jax.random.uniform(k1, (cout, cin, ksz), jnp.float32, -bound, bound)
            b = jax.random.uniform(k2, (cout,), jnp.float32, -bound, bound)
            gamma = jnp.ones((cout,), jnp.float32)           # BatchNorm1d defaults
            beta = jnp.zeros((cout,), jnp.float32)
            ps.append((w, b, gamma, beta))
        return key, ps

    key, conv_a = conv_stack(key)
    key, conv_b = conv_stack(key)
    shrink = sum(k - 1 for k in kernel_sizes)
    in_features = channels[-1] * (len_a - shrink) + channels[-1] * (len_b - shrink)
    key, k1, k2 = jax.random.split(key, 3)
    bound = 1.0 / np.sqrt(in_features)
    fc_w = jax.random.uniform(k1, (n_output, in_features), jnp.float32, -bound, bound)
    fc_b = jax.random.uniform(k2, (n_output,), jnp.float32, -bound, bound)
    return {"conv_a": conv_a, "conv_b": conv_b, "fc_w": fc_w, "fc_b": fc_b}


# ----------------------------- pure-JAX reference -----------------------------------

def ref_forward(tcr_a, tcr_b, params):
    def cbr(x, w, b, g, beta):                               # x: NCL
        z = jax.lax.conv_general_dilated(
            x, w, (1,), "VALID", dimension_numbers=("NCH", "OIH", "NCH"))
        z = z + b[None, :, None]                             # bias kept in the ref
        mean = jnp.mean(z, axis=(0, 2), keepdims=True)
        var = jnp.mean((z - mean) ** 2, axis=(0, 2), keepdims=True)
        y = (z - mean) / jnp.sqrt(var + EPS) * g[None, :, None] + beta[None, :, None]
        return jnp.maximum(y, 0.0)

    def branch(x, ps):
        for (w, b, g, beta) in ps:
            x = cbr(x, w, b, g, beta)
        return x

    B = tcr_a.shape[0]
    a = branch(tcr_a, params["conv_a"]).reshape(B, -1)
    b_ = branch(tcr_b, params["conv_b"]).reshape(B, -1)
    enc = jnp.concatenate([a, b_], axis=-1)
    return enc @ params["fc_w"].T + params["fc_b"]


# ----------------------------- main --------------------------------------------------

if __name__ == "__main__":
    key = jax.random.PRNGKey(0)
    kp, ka, kb = jax.random.split(key, 3)
    params = init_params(kp)
    prepped = prepare_params(params)                         # one-time weight prep

    B = 2
    # PyTorch NCL inputs: TCR-A length 19, TCR-B length 20, 21 one-hot-ish channels.
    tcr_a = jax.random.normal(ka, (B, 21, 19), jnp.float32)
    tcr_b = jax.random.normal(kb, (B, 21, 20), jnp.float32)

    out = jax.block_until_ready(two_part_forward(tcr_a, tcr_b, prepped))
    assert out.shape == (B, 2), out.shape

    ref = jax.block_until_ready(ref_forward(tcr_a, tcr_b, params))
    if not jnp.allclose(out, ref, rtol=1e-3, atol=1e-3):
        raise AssertionError(f"mismatch: kernel={out} ref={ref}")

    print("KERNEL_OK")
</pallas_src>

<mosaic_0001>
module attributes {stable_mosaic.version = 11 : i64} {
  func.func @fused_forward_kernel(%arg0: memref<2x21x19xf32, #tpu.memory_space<vmem>>, %arg1: memref<2x21x20xf32, #tpu.memory_space<vmem>>, %arg2: memref<6x21x16xf32, #tpu.memory_space<vmem>>, %arg3: memref<2x16xf32, #tpu.memory_space<vmem>>, %arg4: memref<6x16x8xf32, #tpu.memory_space<vmem>>, %arg5: memref<2x8xf32, #tpu.memory_space<vmem>>, %arg6: memref<6x21x16xf32, #tpu.memory_space<vmem>>, %arg7: memref<2x16xf32, #tpu.memory_space<vmem>>, %arg8: memref<6x16x8xf32, #tpu.memory_space<vmem>>, %arg9: memref<2x8xf32, #tpu.memory_space<vmem>>, %arg10: memref<2x24x8xf32, #tpu.memory_space<vmem>>, %arg11: memref<2x24x8xf32, #tpu.memory_space<vmem>>, %arg12: memref<1x2xf32, #tpu.memory_space<vmem>>, %arg13: memref<2x2xf32, #tpu.memory_space<vmem>>) attributes {dimension_semantics = [], scalar_prefetch = 0 : i64, scratch_operands = 0 : i64, tpu.core_type = #tpu.core_type<tc>} {
    %0 = tpu.iota {dimensions = array<i32: 0>} : vector<24x19xi32>
    %1 = tpu.iota {dimensions = array<i32: 1>} : vector<24x19xi32>
    %2 = arith.cmpi eq, %0, %1 : vector<24x19xi32>
    %3 = arith.extui %2 : vector<24x19xi1> to vector<24x19xi32>
    %4 = arith.sitofp %3 : vector<24x19xi32> to vector<24x19xf32>
    %c0 = arith.constant 0 : index
    %c0_0 = arith.constant 0 : index
    %c0_1 = arith.constant 0 : index
    %5 = vector.load %arg0[%c0, %c0_0, %c0_1] : memref<2x21x19xf32, #tpu.memory_space<vmem>>, vector<1x21x19xf32>
    %6 = vector.shape_cast %5 : vector<1x21x19xf32> to vector<21x19xf32>
    %cst = arith.constant dense<0.000000e+00> : vector<24x21xf32>
    %7 = tpu.matmul %4, %6, %cst {dimension_numbers = #tpu.dot_dimension_numbers<[1], [1], [0], [0], [0, 0, 1, 0], [], []>} : vector<24x19xf32>, vector<21x19xf32>, vector<24x21xf32> -> vector<24x21xf32>
    %c1 = arith.constant 1 : index
    %c0_2 = arith.constant 0 : index
    %c0_3 = arith.constant 0 : index
    %8 = vector.load %arg0[%c1, %c0_2, %c0_3] : memref<2x21x19xf32, #tpu.memory_space<vmem>>, vector<1x21x19xf32>
    %9 = vector.shape_cast %8 : vector<1x21x19xf32> to vector<21x19xf32>
    %cst_4 = arith.constant dense<0.000000e+00> : vector<24x21xf32>
    %10 = tpu.matmul %4, %9, %cst_4 {dimension_numbers = #tpu.dot_dimension_numbers<[1], [1], [0], [0], [0, 0, 1, 0], [], []>} : vector<24x19xf32>, vector<21x19xf32>, vector<24x21xf32> -> vector<24x21xf32>
    %11 = tpu.concatenate %7, %10 in 0 : vector<24x21xf32>, vector<24x21xf32> -> vector<48x21xf32>
    %c0_5 = arith.constant 0 : index
    %c0_6 = arith.constant 0 : index
    %c0_7 = arith.constant 0 : index
    %12 = vector.load %arg2[%c0_5, %c0_6, %c0_7] : memref<6x21x16xf32, #tpu.memory_space<vmem>>, vector<6x21x16xf32>
    %c0_8 = arith.constant 0 : index
    %c0_9 = arith.constant 0 : index
    %13 = vector.load %arg3[%c0_8, %c0_9] : memref<2x16xf32, #tpu.memory_space<vmem>>, vector<2x16xf32>
    %cst_10 = arith.constant 0.000000e+00 : f32
    %14 = vector.broadcast %cst_10 : f32 to vector<8x21xf32>
    %15 = tpu.concatenate %11, %14 in 0 : vector<48x21xf32>, vector<8x21xf32> -> vector<56x21xf32>
    %16 = vector.extract_strided_slice %15 {offsets = [0, 0], sizes = [48, 21], strides = [1, 1]} : vector<56x21xf32> to vector<48x21xf32>
    %17 = vector.extract_strided_slice %12 {offsets = [0, 0, 0], sizes = [1, 21, 16], strides = [1, 1, 1]} : vector<6x21x16xf32> to vector<1x21x16xf32>
    %18 = vector.shape_cast %17 : vector<1x21x16xf32> to vector<21x16xf32>
    %cst_11 = arith.constant dense<0.000000e+00> : vector<48x16xf32>
    %19 = tpu.matmul %16, %18, %cst_11 {dimension_numbers = #tpu.dot_dimension_numbers<[1], [0], [0], [1], [0, 0, 1, 1], [], []>} : vector<48x21xf32>, vector<21x16xf32>, vector<48x16xf32> -> vector<48x16xf32>
    %20 = vector.extract_strided_slice %15 {offsets = [1, 0], sizes = [48, 21], strides = [1, 1]} : vector<56x21xf32> to vector<48x21xf32>
    %21 = vector.extract_strided_slice %12 {offsets = [1, 0, 0], sizes = [1, 21, 16], strides = [1, 1, 1]} : vector<6x21x16xf32> to vector<1x21x16xf32>
    %22 = vector.shape_cast %21 : vector<1x21x16xf32> to vector<21x16xf32>
    %cst_12 = arith.constant dense<0.000000e+00> : vector<48x16xf32>
    %23 = tpu.matmul %20, %22, %cst_12 {dimension_numbers = #tpu.dot_dimension_numbers<[1], [0], [0], [1], [0, 0, 1, 1], [], []>} : vector<48x21xf32>, vector<21x16xf32>, vector<48x16xf32> -> vector<48x16xf32>
    %24 = vector.extract_strided_slice %15 {offsets = [2, 0], sizes = [48, 21], strides = [1, 1]} : vector<56x21xf32> to vector<48x21xf32>
    %25 = vector.extract_strided_slice %12 {offsets = [2, 0, 0], sizes = [1, 21, 16], strides = [1, 1, 1]} : vector<6x21x16xf32> to vector<1x21x16xf32>
    %26 = vector.shape_cast %25 : vector<1x21x16xf32> to vector<21x16xf32>
    %cst_13 = arith.constant dense<0.000000e+00> : vector<48x16xf32>
    %27 = tpu.matmul %24, %26, %cst_13 {dimension_numbers = #tpu.dot_dimension_numbers<[1], [0], [0], [1], [0, 0, 1, 1], [], []>} : vector<48x21xf32>, vector<21x16xf32>, vector<48x16xf32> -> vector<48x16xf32>
    %28 = vector.extract_strided_slice %15 {offsets = [3, 0], sizes = [48, 21], strides = [1, 1]} : vector<56x21xf32> to vector<48x21xf32>
    %29 = vector.extract_strided_slice %12 {offsets = [3, 0, 0], sizes = [1, 21, 16], strides = [1, 1, 1]} : vector<6x21x16xf32> to vector<1x21x16xf32>
    %30 = vector.shape_cast %29 : vector<1x21x16xf32> to vector<21x16xf32>
    %cst_14 = arith.constant dense<0.000000e+00> : vector<48x16xf32>
    %31 = tpu.matmul %28, %30, %cst_14 {dimension_numbers = #tpu.dot_dimension_numbers<[1], [0], [0], [1], [0, 0, 1, 1], [], []>} : vector<48x21xf32>, vector<21x16xf32>, vector<48x16xf32> -> vector<48x16xf32>
    %32 = vector.extract_strided_slice %15 {offsets = [4, 0], sizes = [48, 21], strides = [1, 1]} : vector<56x21xf32> to vector<48x21xf32>
    %33 = vector.extract_strided_slice %12 {offsets = [4, 0, 0], sizes = [1, 21, 16], strides = [1, 1, 1]} : vector<6x21x16xf32> to vector<1x21x16xf32>
    %34 = vector.shape_cast %33 : vector<1x21x16xf32> to vector<21x16xf32>
    %cst_15 = arith.constant dense<0.000000e+00> : vector<48x16xf32>
    %35 = tpu.matmul %32, %34, %cst_15 {dimension_numbers = #tpu.dot_dimension_numbers<[1], [0], [0], [1], [0, 0, 1, 1], [], []>} : vector<48x21xf32>, vector<21x16xf32>, vector<48x16xf32> -> vector<48x16xf32>
    %36 = vector.extract_strided_slice %15 {offsets = [5, 0], sizes = [48, 21], strides = [1, 1]} : vector<56x21xf32> to vector<48x21xf32>
    %37 = vector.extract_strided_slice %12 {offsets = [5, 0, 0], sizes = [1, 21, 16], strides = [1, 1, 1]} : vector<6x21x16xf32> to vector<1x21x16xf32>
    %38 = vector.shape_cast %37 : vector<1x21x16xf32> to vector<21x16xf32>
    %cst_16 = arith.constant dense<0.000000e+00> : vector<48x16xf32>
    %39 = tpu.matmul %36, %38, %cst_16 {dimension_numbers = #tpu.dot_dimension_numbers<[1], [0], [0], [1], [0, 0, 1, 1], [], []>} : vector<48x21xf32>, vector<21x16xf32>, vector<48x16xf32> -> vector<48x16xf32>
    %40 = arith.addf %19, %23 : vector<48x16xf32>
    %41 = arith.addf %27, %31 : vector<48x16xf32>
    %42 = arith.addf %35, %39 : vector<48x16xf32>
    %43 = arith.addf %40, %41 : vector<48x16xf32>
    %44 = arith.addf %43, %42 : vector<48x16xf32>
    %45 = tpu.iota {dimensions = array<i32: 0>} : vector<24x1xi32>
    %c14_i32 = arith.constant 14 : i32
    %46 = vector.broadcast %c14_i32 : i32 to vector<24x1xi32>
    %47 = arith.cmpi slt, %45, %46 : vector<24x1xi32>
    %48 = arith.extui %47 : vector<24x1xi1> to vector<24x1xi32>
    %49 = arith.sitofp %48 : vector<24x1xi32> to vector<24x1xf32>
    %50 = tpu.concatenate %49, %49 in 0 : vector<24x1xf32>, vector<24x1xf32> -> vector<48x1xf32>
    %51 = vector.broadcast %50 : vector<48x1xf32> to vector<48x16xf32>
    %52 = arith.mulf %44, %51 : vector<48x16xf32>
    %cst_17 = arith.constant dense<0.000000e+00> : vector<16xf32>
    %53 = vector.multi_reduction <add>, %52, %cst_17 [0] : vector<48x16xf32> to vector<16xf32>
    %54 = vector.shape_cast %53 : vector<16xf32> to vector<1x16xf32>
    %55 = arith.mulf %52, %44 : vector<48x16xf32>
    %cst_18 = arith.constant dense<0.000000e+00> : vector<16xf32>
    %56 = vector.multi_reduction <add>, %55, %cst_18 [0] : vector<48x16xf32> to vector<16xf32>
    %57 = vector.shape_cast %56 : vector<16xf32> to vector<1x16xf32>
    %cst_19 = arith.constant 0.0357142873 : f32
    %58 = vector.broadcast %cst_19 : f32 to vector<1x16xf32>
    %59 = arith.mulf %54, %58 : vector<1x16xf32>
    %cst_20 = arith.constant 0.0357142873 : f32
    %60 = vector.broadcast %cst_20 : f32 to vector<1x16xf32>
    %61 = arith.mulf %57, %60 : vector<1x16xf32>
    %62 = arith.mulf %59, %59 : vector<1x16xf32>
    %63 = arith.subf %61, %62 : vector<1x16xf32>
    %cst_21 = arith.constant 0.000000e+00 : f32
    %64 = vector.broadcast %cst_21 : f32 to vector<1x16xf32>
    %65 = arith.maximumf %63, %64 : vector<1x16xf32>
    %66 = vector.extract_strided_slice %13 {offsets = [0, 0], sizes = [1, 16], strides = [1, 1]} : vector<2x16xf32> to vector<1x16xf32>
    %cst_22 = arith.constant 9.99999974E-6 : f32
    %67 = vector.broadcast %cst_22 : f32 to vector<1x16xf32>
    %68 = arith.addf %65, %67 : vector<1x16xf32>
    %69 = math.rsqrt %68 : vector<1x16xf32>
    %70 = arith.mulf %66, %69 : vector<1x16xf32>
    %71 = vector.extract_strided_slice %13 {offsets = [1, 0], sizes = [1, 16], strides = [1, 1]} : vector<2x16xf32> to vector<1x16xf32>
    %72 = arith.mulf %59, %70 : vector<1x16xf32>
    %73 = arith.subf %71, %72 : vector<1x16xf32>
    %74 = vector.broadcast %70 : vector<1x16xf32> to vector<48x16xf32>
    %75 = arith.mulf %44, %74 : vector<48x16xf32>
    %76 = vector.broadcast %73 : vector<1x16xf32> to vector<48x16xf32>
    %77 = arith.addf %75, %76 : vector<48x16xf32>
    %cst_23 = arith.constant 0.000000e+00 : f32
    %78 = vector.broadcast %cst_23 : f32 to vector<48x16xf32>
    %79 = arith.maximumf %77, %78 : vector<48x16xf32>
    %c0_24 = arith.constant 0 : index
    %c0_25 = arith.constant 0 : index
    %c0_26 = arith.constant 0 : index
    %80 = vector.load %arg4[%c0_24, %c0_25, %c0_26] : memref<6x16x8xf32, #tpu.memory_space<vmem>>, vector<6x16x8xf32>
    %c0_27 = arith.constant 0 : index
    %c0_28 = arith.constant 0 : index
    %81 = vector.load %arg5[%c0_27, %c0_28] : memref<2x8xf32, #tpu.memory_space<vmem>>, vector<2x8xf32>
    %cst_29 = arith.constant 0.000000e+00 : f32
    %82 = vector.broadcast %cst_29 : f32 to vector<8x16xf32>
    %83 = tpu.concatenate %79, %82 in 0 : vector<48x16xf32>, vector<8x16xf32> -> vector<56x16xf32>
    %84 = vector.extract_strided_slice %83 {offsets = [0, 0], sizes = [48, 16], strides = [1, 1]} : vector<56x16xf32> to vector<48x16xf32>
    %85 = vector.extract_strided_slice %80 {offsets = [0, 0, 0], sizes = [1, 16, 8], strides = [1, 1, 1]} : vector<6x16x8xf32> to vector<1x16x8xf32>
    %86 = vector.shape_cast %85 : vector<1x16x8xf32> to vector<16x8xf32>
    %cst_30 = arith.constant dense<0.000000e+00> : vector<48x8xf32>
    %87 = tpu.matmul %84, %86, %cst_30 {dimension_numbers = #tpu.dot_dimension_numbers<[1], [0], [0], [1], [0, 0, 1, 1], [], []>} : vector<48x16xf32>, vector<16x8xf32>, vector<48x8xf32> -> vector<48x8xf32>
    %88 = vector.extract_strided_slice %83 {offsets = [1, 0], sizes = [48, 16], strides = [1, 1]} : vector<56x16xf32> to vector<48x16xf32>
    %89 = vector.extract_strided_slice %80 {offsets = [1, 0, 0], sizes = [1, 16, 8], strides = [1, 1, 1]} : vector<6x16x8xf32> to vector<1x16x8xf32>
    %90 = vector.shape_cast %89 : vector<1x16x8xf32> to vector<16x8xf32>
    %cst_31 = arith.constant dense<0.000000e+00> : vector<48x8xf32>
    %91 = tpu.matmul %88, %90, %cst_31 {dimension_numbers = #tpu.dot_dimension_numbers<[1], [0], [0], [1], [0, 0, 1, 1], [], []>} : vector<48x16xf32>, vector<16x8xf32>, vector<48x8xf32> -> vector<48x8xf32>
    %92 = vector.extract_strided_slice %83 {offsets = [2, 0], sizes = [48, 16], strides = [1, 1]} : vector<56x16xf32> to vector<48x16xf32>
    %93 = vector.extract_strided_slice %80 {offsets = [2, 0, 0], sizes = [1, 16, 8], strides = [1, 1, 1]} : vector<6x16x8xf32> to vector<1x16x8xf32>
    %94 = vector.shape_cast %93 : vector<1x16x8xf32> to vector<16x8xf32>
    %cst_32 = arith.constant dense<0.000000e+00> : vector<48x8xf32>
    %95 = tpu.matmul %92, %94, %cst_32 {dimension_numbers = #tpu.dot_dimension_numbers<[1], [0], [0], [1], [0, 0, 1, 1], [], []>} : vector<48x16xf32>, vector<16x8xf32>, vector<48x8xf32> -> vector<48x8xf32>
    %96 = vector.extract_strided_slice %83 {offsets = [3, 0], sizes = [48, 16], strides = [1, 1]} : vector<56x16xf32> to vector<48x16xf32>
    %97 = vector.extract_strided_slice %80 {offsets = [3, 0, 0], sizes = [1, 16, 8], strides = [1, 1, 1]} : vector<6x16x8xf32> to vector<1x16x8xf32>
    %98 = vector.shape_cast %97 : vector<1x16x8xf32> to vector<16x8xf32>
    %cst_33 = arith.constant dense<0.000000e+00> : vector<48x8xf32>
    %99 = tpu.matmul %96, %98, %cst_33 {dimension_numbers = #tpu.dot_dimension_numbers<[1], [0], [0], [1], [0, 0, 1, 1], [], []>} : vector<48x16xf32>, vector<16x8xf32>, vector<48x8xf32> -> vector<48x8xf32>
    %100 = vector.extract_strided_slice %83 {offsets = [4, 0], sizes = [48, 16], strides = [1, 1]} : vector<56x16xf32> to vector<48x16xf32>
    %101 = vector.extract_strided_slice %80 {offsets = [4, 0, 0], sizes = [1, 16, 8], strides = [1, 1, 1]} : vector<6x16x8xf32> to vector<1x16x8xf32>
    %102 = vector.shape_cast %101 : vector<1x16x8xf32> to vector<16x8xf32>
    %cst_34 = arith.constant dense<0.000000e+00> : vector<48x8xf32>
    %103 = tpu.matmul %100, %102, %cst_34 {dimension_numbers = #tpu.dot_dimension_numbers<[1], [0], [0], [1], [0, 0, 1, 1], [], []>} : vector<48x16xf32>, vector<16x8xf32>, vector<48x8xf32> -> vector<48x8xf32>
    %104 = vector.extract_strided_slice %83 {offsets = [5, 0], sizes = [48, 16], strides = [1, 1]} : vector<56x16xf32> to vector<48x16xf32>
    %105 = vector.extract_strided_slice %80 {offsets = [5, 0, 0], sizes = [1, 16, 8], strides = [1, 1, 1]} : vector<6x16x8xf32> to vector<1x16x8xf32>
    %106 = vector.shape_cast %105 : vector<1x16x8xf32> to vector<16x8xf32>
    %cst_35 = arith.constant dense<0.000000e+00> : vector<48x8xf32>
    %107 = tpu.matmul %104, %106, %cst_35 {dimension_numbers = #tpu.dot_dimension_numbers<[1], [0], [0], [1], [0, 0, 1, 1], [], []>} : vector<48x16xf32>, vector<16x8xf32>, vector<48x8xf32> -> vector<48x8xf32>
    %108 = arith.addf %87, %91 : vector<48x8xf32>
    %109 = arith.addf %95, %99 : vector<48x8xf32>
    %110 = arith.addf %103, %107 : vector<48x8xf32>
    %111 = arith.addf %108, %109 : vector<48x8xf32>
    %112 = arith.addf %111, %110 : vector<48x8xf32>
    %113 = tpu.iota {dimensions = array<i32: 0>} : vector<24x1xi32>
    %c9_i32 = arith.constant 9 : i32
    %114 = vector.broadcast %c9_i32 : i32 to vector<24x1xi32>
    %115 = arith.cmpi slt, %113, %114 : vector<24x1xi32>
    %116 = arith.extui %115 : vector<24x1xi1> to vector<24x1xi32>
    %117 = arith.sitofp %116 : vector<24x1xi32> to vector<24x1xf32>
    %118 = tpu.concatenate %117, %117 in 0 : vector<24x1xf32>, vector<24x1xf32> -> vector<48x1xf32>
    %119 = vector.broadcast %118 : vector<48x1xf32> to vector<48x8xf32>
    %120 = arith.mulf %112, %119 : vector<48x8xf32>
    %cst_36 = arith.constant dense<0.000000e+00> : vector<8xf32>
    %121 = vector.multi_reduction <add>, %120, %cst_36 [0] : vector<48x8xf32> to vector<8xf32>
    %122 = vector.shape_cast %121 : vector<8xf32> to vector<1x8xf32>
    %123 = arith.mulf %120, %112 : vector<48x8xf32>
    %cst_37 = arith.constant dense<0.000000e+00> : vector<8xf32>
    %124 = vector.multi_reduction <add>, %123, %cst_37 [0] : vector<48x8xf32> to vector<8xf32>
    %125 = vector.shape_cast %124 : vector<8xf32> to vector<1x8xf32>
    %cst_38 = arith.constant 0.055555556 : f32
    %126 = vector.broadcast %cst_38 : f32 to vector<1x8xf32>
    %127 = arith.mulf %122, %126 : vector<1x8xf32>
    %cst_39 = arith.constant 0.055555556 : f32
    %128 = vector.broadcast %cst_39 : f32 to vector<1x8xf32>
    %129 = arith.mulf %125, %128 : vector<1x8xf32>
    %130 = arith.mulf %127, %127 : vector<1x8xf32>
    %131 = arith.subf %129, %130 : vector<1x8xf32>
    %cst_40 = arith.constant 0.000000e+00 : f32
    %132 = vector.broadcast %cst_40 : f32 to vector<1x8xf32>
    %133 = arith.maximumf %131, %132 : vector<1x8xf32>
    %134 = vector.extract_strided_slice %81 {offsets = [0, 0], sizes = [1, 8], strides = [1, 1]} : vector<2x8xf32> to vector<1x8xf32>
    %cst_41 = arith.constant 9.99999974E-6 : f32
    %135 = vector.broadcast %cst_41 : f32 to vector<1x8xf32>
    %136 = arith.addf %133, %135 : vector<1x8xf32>
    %137 = math.rsqrt %136 : vector<1x8xf32>
    %138 = arith.mulf %134, %137 : vector<1x8xf32>
    %139 = vector.extract_strided_slice %81 {offsets = [1, 0], sizes = [1, 8], strides = [1, 1]} : vector<2x8xf32> to vector<1x8xf32>
    %140 = arith.mulf %127, %138 : vector<1x8xf32>
    %141 = arith.subf %139, %140 : vector<1x8xf32>
    %142 = vector.broadcast %138 : vector<1x8xf32> to vector<48x8xf32>
    %143 = arith.mulf %112, %142 : vector<48x8xf32>
    %144 = vector.broadcast %141 : vector<1x8xf32> to vector<48x8xf32>
    %145 = arith.addf %143, %144 : vector<48x8xf32>
    %cst_42 = arith.constant 0.000000e+00 : f32
    %146 = vector.broadcast %cst_42 : f32 to vector<48x8xf32>
    %147 = arith.maximumf %145, %146 : vector<48x8xf32>
    %148 = tpu.iota {dimensions = array<i32: 0>} : vector<24x20xi32>
    %149 = tpu.iota {dimensions = array<i32: 1>} : vector<24x20xi32>
    %150 = arith.cmpi eq, %148, %149 : vector<24x20xi32>
    %151 = arith.extui %150 : vector<24x20xi1> to vector<24x20xi32>
    %152 = arith.sitofp %151 : vector<24x20xi32> to vector<24x20xf32>
    %c0_43 = arith.constant 0 : index
    %c0_44 = arith.constant 0 : index
    %c0_45 = arith.constant 0 : index
    %153 = vector.load %arg1[%c0_43, %c0_44, %c0_45] : memref<2x21x20xf32, #tpu.memory_space<vmem>>, vector<1x21x20xf32>
    %154 = vector.shape_cast %153 : vector<1x21x20xf32> to vector<21x20xf32>
    %cst_46 = arith.constant dense<0.000000e+00> : vector<24x21xf32>
    %155 = tpu.matmul %152, %154, %cst_46 {dimension_numbers = #tpu.dot_dimension_numbers<[1], [1], [0], [0], [0, 0, 1, 0], [], []>} : vector<24x20xf32>, vector<21x20xf32>, vector<24x21xf32> -> vector<24x21xf32>
    %c1_47 = arith.constant 1 : index
    %c0_48 = arith.constant 0 : index
    %c0_49 = arith.constant 0 : index
    %156 = vector.load %arg1[%c1_47, %c0_48, %c0_49] : memref<2x21x20xf32, #tpu.memory_space<vmem>>, vector<1x21x20xf32>
    %157 = vector.shape_cast %156 : vector<1x21x20xf32> to vector<21x20xf32>
    %cst_50 = arith.constant dense<0.000000e+00> : vector<24x21xf32>
    %158 = tpu.matmul %152, %157, %cst_50 {dimension_numbers = #tpu.dot_dimension_numbers<[1], [1], [0], [0], [0, 0, 1, 0], [], []>} : vector<24x20xf32>, vector<21x20xf32>, vector<24x21xf32> -> vector<24x21xf32>
    %159 = tpu.concatenate %155, %158 in 0 : vector<24x21xf32>, vector<24x21xf32> -> vector<48x21xf32>
    %c0_51 = arith.constant 0 : index
    %c0_52 = arith.constant 0 : index
    %c0_53 = arith.constant 0 : index
    %160 = vector.load %arg6[%c0_51, %c0_52, %c0_53] : memref<6x21x16xf32, #tpu.memory_space<vmem>>, vector<6x21x16xf32>
    %c0_54 = arith.constant 0 : index
    %c0_55 = arith.constant 0 : index
    %161 = vector.load %arg7[%c0_54, %c0_55] : memref<2x16xf32, #tpu.memory_space<vmem>>, vector<2x16xf32>
    %cst_56 = arith.constant 0.000000e+00 : f32
    %162 = vector.broadcast %cst_56 : f32 to vector<8x21xf32>
    %163 = tpu.concatenate %159, %162 in 0 : vector<48x21xf32>, vector<8x21xf32> -> vector<56x21xf32>
    %164 = vector.extract_strided_slice %163 {offsets = [0, 0], sizes = [48, 21], strides = [1, 1]} : vector<56x21xf32> to vector<48x21xf32>
    %165 = vector.extract_strided_slice %160 {offsets = [0, 0, 0], sizes = [1, 21, 16], strides = [1, 1, 1]} : vector<6x21x16xf32> to vector<1x21x16xf32>
    %166 = vector.shape_cast %165 : vector<1x21x16xf32> to vector<21x16xf32>
    %cst_57 = arith.constant dense<0.000000e+00> : vector<48x16xf32>
    %167 = tpu.matmul %164, %166, %cst_57 {dimension_numbers = #tpu.dot_dimension_numbers<[1], [0], [0], [1], [0, 0, 1, 1], [], []>} : vector<48x21xf32>, vector<21x16xf32>, vector<48x16xf32> -> vector<48x16xf32>
    %168 = vector.extract_strided_slice %163 {offsets = [1, 0], sizes = [48, 21], strides = [1, 1]} : vector<56x21xf32> to vector<48x21xf32>
    %169 = vector.extract_strided_slice %160 {offsets = [1, 0, 0], sizes = [1, 21, 16], strides = [1, 1, 1]} : vector<6x21x16xf32> to vector<1x21x16xf32>
    %170 = vector.shape_cast %169 : vector<1x21x16xf32> to vector<21x16xf32>
    %cst_58 = arith.constant dense<0.000000e+00> : vector<48x16xf32>
    %171 = tpu.matmul %168, %170, %cst_58 {dimension_numbers = #tpu.dot_dimension_numbers<[1], [0], [0], [1], [0, 0, 1, 1], [], []>} : vector<48x21xf32>, vector<21x16xf32>, vector<48x16xf32> -> vector<48x16xf32>
    %172 = vector.extract_strided_slice %163 {offsets = [2, 0], sizes = [48, 21], strides = [1, 1]} : vector<56x21xf32> to vector<48x21xf32>
    %173 = vector.extract_strided_slice %160 {offsets = [2, 0, 0], sizes = [1, 21, 16], strides = [1, 1, 1]} : vector<6x21x16xf32> to vector<1x21x16xf32>
    %174 = vector.shape_cast %173 : vector<1x21x16xf32> to vector<21x16xf32>
    %cst_59 = arith.constant dense<0.000000e+00> : vector<48x16xf32>
    %175 = tpu.matmul %172, %174, %cst_59 {dimension_numbers = #tpu.dot_dimension_numbers<[1], [0], [0], [1], [0, 0, 1, 1], [], []>} : vector<48x21xf32>, vector<21x16xf32>, vector<48x16xf32> -> vector<48x16xf32>
    %176 = vector.extract_strided_slice %163 {offsets = [3, 0], sizes = [48, 21], strides = [1, 1]} : vector<56x21xf32> to vector<48x21xf32>
    %177 = vector.extract_strided_slice %160 {offsets = [3, 0, 0], sizes = [1, 21, 16], strides = [1, 1, 1]} : vector<6x21x16xf32> to vector<1x21x16xf32>
    %178 = vector.shape_cast %177 : vector<1x21x16xf32> to vector<21x16xf32>
    %cst_60 = arith.constant dense<0.000000e+00> : vector<48x16xf32>
    %179 = tpu.matmul %176, %178, %cst_60 {dimension_numbers = #tpu.dot_dimension_numbers<[1], [0], [0], [1], [0, 0, 1, 1], [], []>} : vector<48x21xf32>, vector<21x16xf32>, vector<48x16xf32> -> vector<48x16xf32>
    %180 = vector.extract_strided_slice %163 {offsets = [4, 0], sizes = [48, 21], strides = [1, 1]} : vector<56x21xf32> to vector<48x21xf32>
    %181 = vector.extract_strided_slice %160 {offsets = [4, 0, 0], sizes = [1, 21, 16], strides = [1, 1, 1]} : vector<6x21x16xf32> to vector<1x21x16xf32>
    %182 = vector.shape_cast %181 : vector<1x21x16xf32> to vector<21x16xf32>
    %cst_61 = arith.constant dense<0.000000e+00> : vector<48x16xf32>
    %183 = tpu.matmul %180, %182, %cst_61 {dimension_numbers = #tpu.dot_dimension_numbers<[1], [0], [0], [1], [0, 0, 1, 1], [], []>} : vector<48x21xf32>, vector<21x16xf32>, vector<48x16xf32> -> vector<48x16xf32>
    %184 = vector.extract_strided_slice %163 {offsets = [5, 0], sizes = [48, 21], strides = [1, 1]} : vector<56x21xf32> to vector<48x21xf32>
    %185 = vector.extract_strided_slice %160 {offsets = [5, 0, 0], sizes = [1, 21, 16], strides = [1, 1, 1]} : vector<6x21x16xf32> to vector<1x21x16xf32>
    %186 = vector.shape_cast %185 : vector<1x21x16xf32> to vector<21x16xf32>
    %cst_62 = arith.constant dense<0.000000e+00> : vector<48x16xf32>
    %187 = tpu.matmul %184, %186, %cst_62 {dimension_numbers = #tpu.dot_dimension_numbers<[1], [0], [0], [1], [0, 0, 1, 1], [], []>} : vector<48x21xf32>, vector<21x16xf32>, vector<48x16xf32> -> vector<48x16xf32>
    %188 = arith.addf %167, %171 : vector<48x16xf32>
    %189 = arith.addf %175, %179 : vector<48x16xf32>
    %190 = arith.addf %183, %187 : vector<48x16xf32>
    %191 = arith.addf %188, %189 : vector<48x16xf32>
    %192 = arith.addf %191, %190 : vector<48x16xf32>
    %193 = tpu.iota {dimensions = array<i32: 0>} : vector<24x1xi32>
    %c15_i32 = arith.constant 15 : i32
    %194 = vector.broadcast %c15_i32 : i32 to vector<24x1xi32>
    %195 = arith.cmpi slt, %193, %194 : vector<24x1xi32>
    %196 = arith.extui %195 : vector<24x1xi1> to vector<24x1xi32>
    %197 = arith.sitofp %196 : vector<24x1xi32> to vector<24x1xf32>
    %198 = tpu.concatenate %197, %197 in 0 : vector<24x1xf32>, vector<24x1xf32> -> vector<48x1xf32>
    %199 = vector.broadcast %198 : vector<48x1xf32> to vector<48x16xf32>
    %200 = arith.mulf %192, %199 : vector<48x16xf32>
    %cst_63 = arith.constant dense<0.000000e+00> : vector<16xf32>
    %201 = vector.multi_reduction <add>, %200, %cst_63 [0] : vector<48x16xf32> to vector<16xf32>
    %202 = vector.shape_cast %201 : vector<16xf32> to vector<1x16xf32>
    %203 = arith.mulf %200, %192 : vector<48x16xf32>
    %cst_64 = arith.constant dense<0.000000e+00> : vector<16xf32>
    %204 = vector.multi_reduction <add>, %203, %cst_64 [0] : vector<48x16xf32> to vector<16xf32>
    %205 = vector.shape_cast %204 : vector<16xf32> to vector<1x16xf32>
    %cst_65 = arith.constant 0.0333333351 : f32
    %206 = vector.broadcast %cst_65 : f32 to vector<1x16xf32>
    %207 = arith.mulf %202, %206 : vector<1x16xf32>
    %cst_66 = arith.constant 0.0333333351 : f32
    %208 = vector.broadcast %cst_66 : f32 to vector<1x16xf32>
    %209 = arith.mulf %205, %208 : vector<1x16xf32>
    %210 = arith.mulf %207, %207 : vector<1x16xf32>
    %211 = arith.subf %209, %210 : vector<1x16xf32>
    %cst_67 = arith.constant 0.000000e+00 : f32
    %212 = vector.broadcast %cst_67 : f32 to vector<1x16xf32>
    %213 = arith.maximumf %211, %212 : vector<1x16xf32>
    %214 = vector.extract_strided_slice %161 {offsets = [0, 0], sizes = [1, 16], strides = [1, 1]} : vector<2x16xf32> to vector<1x16xf32>
    %cst_68 = arith.constant 9.99999974E-6 : f32
    %215 = vector.broadcast %cst_68 : f32 to vector<1x16xf32>
    %216 = arith.addf %213, %215 : vector<1x16xf32>
    %217 = math.rsqrt %216 : vector<1x16xf32>
    %218 = arith.mulf %214, %217 : vector<1x16xf32>
    %219 = vector.extract_strided_slice %161 {offsets = [1, 0], sizes = [1, 16], strides = [1, 1]} : vector<2x16xf32> to vector<1x16xf32>
    %220 = arith.mulf %207, %218 : vector<1x16xf32>
    %221 = arith.subf %219, %220 : vector<1x16xf32>
    %222 = vector.broadcast %218 : vector<1x16xf32> to vector<48x16xf32>
    %223 = arith.mulf %192, %222 : vector<48x16xf32>
    %224 = vector.broadcast %221 : vector<1x16xf32> to vector<48x16xf32>
    %225 = arith.addf %223, %224 : vector<48x16xf32>
    %cst_69 = arith.constant 0.000000e+00 : f32
    %226 = vector.broadcast %cst_69 : f32 to vector<48x16xf32>
    %227 = arith.maximumf %225, %226 : vector<48x16xf32>
    %c0_70 = arith.constant 0 : index
    %c0_71 = arith.constant 0 : index
    %c0_72 = arith.constant 0 : index
    %228 = vector.load %arg8[%c0_70, %c0_71, %c0_72] : memref<6x16x8xf32, #tpu.memory_space<vmem>>, vector<6x16x8xf32>
    %c0_73 = arith.constant 0 : index
    %c0_74 = arith.constant 0 : index
    %229 = vector.load %arg9[%c0_73, %c0_74] : memref<2x8xf32, #tpu.memory_space<vmem>>, vector<2x8xf32>
    %cst_75 = arith.constant 0.000000e+00 : f32
    %230 = vector.broadcast %cst_75 : f32 to vector<8x16xf32>
    %231 = tpu.concatenate %227, %230 in 0 : vector<48x16xf32>, vector<8x16xf32> -> vector<56x16xf32>
    %232 = vector.extract_strided_slice %231 {offsets = [0, 0], sizes = [48, 16], strides = [1, 1]} : vector<56x16xf32> to vector<48x16xf32>
    %233 = vector.extract_strided_slice %228 {offsets = [0, 0, 0], sizes = [1, 16, 8], strides = [1, 1, 1]} : vector<6x16x8xf32> to vector<1x16x8xf32>
    %234 = vector.shape_cast %233 : vector<1x16x8xf32> to vector<16x8xf32>
    %cst_76 = arith.constant dense<0.000000e+00> : vector<48x8xf32>
    %235 = tpu.matmul %232, %234, %cst_76 {dimension_numbers = #tpu.dot_dimension_numbers<[1], [0], [0], [1], [0, 0, 1, 1], [], []>} : vector<48x16xf32>, vector<16x8xf32>, vector<48x8xf32> -> vector<48x8xf32>
    %236 = vector.extract_strided_slice %231 {offsets = [1, 0], sizes = [48, 16], strides = [1, 1]} : vector<56x16xf32> to vector<48x16xf32>
    %237 = vector.extract_strided_slice %228 {offsets = [1, 0, 0], sizes = [1, 16, 8], strides = [1, 1, 1]} : vector<6x16x8xf32> to vector<1x16x8xf32>
    %238 = vector.shape_cast %237 : vector<1x16x8xf32> to vector<16x8xf32>
    %cst_77 = arith.constant dense<0.000000e+00> : vector<48x8xf32>
    %239 = tpu.matmul %236, %238, %cst_77 {dimension_numbers = #tpu.dot_dimension_numbers<[1], [0], [0], [1], [0, 0, 1, 1], [], []>} : vector<48x16xf32>, vector<16x8xf32>, vector<48x8xf32> -> vector<48x8xf32>
    %240 = vector.extract_strided_slice %231 {offsets = [2, 0], sizes = [48, 16], strides = [1, 1]} : vector<56x16xf32> to vector<48x16xf32>
    %241 = vector.extract_strided_slice %228 {offsets = [2, 0, 0], sizes = [1, 16, 8], strides = [1, 1, 1]} : vector<6x16x8xf32> to vector<1x16x8xf32>
    %242 = vector.shape_cast %241 : vector<1x16x8xf32> to vector<16x8xf32>
    %cst_78 = arith.constant dense<0.000000e+00> : vector<48x8xf32>
    %243 = tpu.matmul %240, %242, %cst_78 {dimension_numbers = #tpu.dot_dimension_numbers<[1], [0], [0], [1], [0, 0, 1, 1], [], []>} : vector<48x16xf32>, vector<16x8xf32>, vector<48x8xf32> -> vector<48x8xf32>
    %244 = vector.extract_strided_slice %231 {offsets = [3, 0], sizes = [48, 16], strides = [1, 1]} : vector<56x16xf32> to vector<48x16xf32>
    %245 = vector.extract_strided_slice %228 {offsets = [3, 0, 0], sizes = [1, 16, 8], strides = [1, 1, 1]} : vector<6x16x8xf32> to vector<1x16x8xf32>
    %246 = vector.shape_cast %245 : vector<1x16x8xf32> to vector<16x8xf32>
    %cst_79 = arith.constant dense<0.000000e+00> : vector<48x8xf32>
    %247 = tpu.matmul %244, %246, %cst_79 {dimension_numbers = #tpu.dot_dimension_numbers<[1], [0], [0], [1], [0, 0, 1, 1], [], []>} : vector<48x16xf32>, vector<16x8xf32>, vector<48x8xf32> -> vector<48x8xf32>
    %248 = vector.extract_strided_slice %231 {offsets = [4, 0], sizes = [48, 16], strides = [1, 1]} : vector<56x16xf32> to vector<48x16xf32>
    %249 = vector.extract_strided_slice %228 {offsets = [4, 0, 0], sizes = [1, 16, 8], strides = [1, 1, 1]} : vector<6x16x8xf32> to vector<1x16x8xf32>
    %250 = vector.shape_cast %249 : vector<1x16x8xf32> to vector<16x8xf32>
    %cst_80 = arith.constant dense<0.000000e+00> : vector<48x8xf32>
    %251 = tpu.matmul %248, %250, %cst_80 {dimension_numbers = #tpu.dot_dimension_numbers<[1], [0], [0], [1], [0, 0, 1, 1], [], []>} : vector<48x16xf32>, vector<16x8xf32>, vector<48x8xf32> -> vector<48x8xf32>
    %252 = vector.extract_strided_slice %231 {offsets = [5, 0], sizes = [48, 16], strides = [1, 1]} : vector<56x16xf32> to vector<48x16xf32>
    %253 = vector.extract_strided_slice %228 {offsets = [5, 0, 0], sizes = [1, 16, 8], strides = [1, 1, 1]} : vector<6x16x8xf32> to vector<1x16x8xf32>
    %254 = vector.shape_cast %253 : vector<1x16x8xf32> to vector<16x8xf32>
    %cst_81 = arith.constant dense<0.000000e+00> : vector<48x8xf32>
    %255 = tpu.matmul %252, %254, %cst_81 {dimension_numbers = #tpu.dot_dimension_numbers<[1], [0], [0], [1], [0, 0, 1, 1], [], []>} : vector<48x16xf32>, vector<16x8xf32>, vector<48x8xf32> -> vector<48x8xf32>
    %256 = arith.addf %235, %239 : vector<48x8xf32>
    %257 = arith.addf %243, %247 : vector<48x8xf32>
    %258 = arith.addf %251, %255 : vector<48x8xf32>
    %259 = arith.addf %256, %257 : vector<48x8xf32>
    %260 = arith.addf %259, %258 : vector<48x8xf32>
    %261 = tpu.iota {dimensions = array<i32: 0>} : vector<24x1xi32>
    %c10_i32 = arith.constant 10 : i32
    %262 = vector.broadcast %c10_i32 : i32 to vector<24x1xi32>
    %263 = arith.cmpi slt, %261, %262 : vector<24x1xi32>
    %264 = arith.extui %263 : vector<24x1xi1> to vector<24x1xi32>
    %265 = arith.sitofp %264 : vector<24x1xi32> to vector<24x1xf32>
    %266 = tpu.concatenate %265, %265 in 0 : vector<24x1xf32>, vector<24x1xf32> -> vector<48x1xf32>
    %267 = vector.broadcast %266 : vector<48x1xf32> to vector<48x8xf32>
    %268 = arith.mulf %260, %267 : vector<48x8xf32>
    %cst_82 = arith.constant dense<0.000000e+00> : vector<8xf32>
    %269 = vector.multi_reduction <add>, %268, %cst_82 [0] : vector<48x8xf32> to vector<8xf32>
    %270 = vector.shape_cast %269 : vector<8xf32> to vector<1x8xf32>
    %271 = arith.mulf %268, %260 : vector<48x8xf32>
    %cst_83 = arith.constant dense<0.000000e+00> : vector<8xf32>
    %272 = vector.multi_reduction <add>, %271, %cst_83 [0] : vector<48x8xf32> to vector<8xf32>
    %273 = vector.shape_cast %272 : vector<8xf32> to vector<1x8xf32>
    %cst_84 = arith.constant 5.000000e-02 : f32
    %274 = vector.broadcast %cst_84 : f32 to vector<1x8xf32>
    %275 = arith.mulf %270, %274 : vector<1x8xf32>
    %cst_85 = arith.constant 5.000000e-02 : f32
    %276 = vector.broadcast %cst_85 : f32 to vector<1x8xf32>
    %277 = arith.mulf %273, %276 : vector<1x8xf32>
    %278 = arith.mulf %275, %275 : vector<1x8xf32>
    %279 = arith.subf %277, %278 : vector<1x8xf32>
    %cst_86 = arith.constant 0.000000e+00 : f32
    %280 = vector.broadcast %cst_86 : f32 to vector<1x8xf32>
    %281 = arith.maximumf %279, %280 : vector<1x8xf32>
    %282 = vector.extract_strided_slice %229 {offsets = [0, 0], sizes = [1, 8], strides = [1, 1]} : vector<2x8xf32> to vector<1x8xf32>
    %cst_87 = arith.constant 9.99999974E-6 : f32
    %283 = vector.broadcast %cst_87 : f32 to vector<1x8xf32>
    %284 = arith.addf %281, %283 : vector<1x8xf32>
    %285 = math.rsqrt %284 : vector<1x8xf32>
    %286 = arith.mulf %282, %285 : vector<1x8xf32>
    %287 = vector.extract_strided_slice %229 {offsets = [1, 0], sizes = [1, 8], strides = [1, 1]} : vector<2x8xf32> to vector<1x8xf32>
    %288 = arith.mulf %275, %286 : vector<1x8xf32>
    %289 = arith.subf %287, %288 : vector<1x8xf32>
    %290 = vector.broadcast %286 : vector<1x8xf32> to vector<48x8xf32>
    %291 = arith.mulf %260, %290 : vector<48x8xf32>
    %292 = vector.broadcast %289 : vector<1x8xf32> to vector<48x8xf32>
    %293 = arith.addf %291, %292 : vector<48x8xf32>
    %cst_88 = arith.constant 0.000000e+00 : f32
    %294 = vector.broadcast %cst_88 : f32 to vector<48x8xf32>
    %295 = arith.maximumf %293, %294 : vector<48x8xf32>
    %c0_89 = arith.constant 0 : index
    %c0_90 = arith.constant 0 : index
    %c0_91 = arith.constant 0 : index
    %296 = vector.load %arg10[%c0_89, %c0_90, %c0_91] : memref<2x24x8xf32, #tpu.memory_space<vmem>>, vector<2x24x8xf32>
    %c0_92 = arith.constant 0 : index
    %c0_93 = arith.constant 0 : index
    %c0_94 = arith.constant 0 : index
    %297 = vector.load %arg11[%c0_92, %c0_93, %c0_94] : memref<2x24x8xf32, #tpu.memory_space<vmem>>, vector<2x24x8xf32>
    %c0_95 = arith.constant 0 : index
    %c0_96 = arith.constant 0 : index
    %298 = vector.load %arg12[%c0_95, %c0_96] : memref<1x2xf32, #tpu.memory_space<vmem>>, vector<1x2xf32>
    %299 = vector.extract_strided_slice %296 {offsets = [0, 0, 0], sizes = [1, 24, 8], strides = [1, 1, 1]} : vector<2x24x8xf32> to vector<1x24x8xf32>
    %300 = vector.shape_cast %299 : vector<1x24x8xf32> to vector<24x8xf32>
    %301 = tpu.concatenate %300, %300 in 0 : vector<24x8xf32>, vector<24x8xf32> -> vector<48x8xf32>
    %302 = vector.extract_strided_slice %297 {offsets = [0, 0, 0], sizes = [1, 24, 8], strides = [1, 1, 1]} : vector<2x24x8xf32> to vector<1x24x8xf32>
    %303 = vector.shape_cast %302 : vector<1x24x8xf32> to vector<24x8xf32>
    %304 = tpu.concatenate %303, %303 in 0 : vector<24x8xf32>, vector<24x8xf32> -> vector<48x8xf32>
    %305 = arith.mulf %147, %301 : vector<48x8xf32>
    %306 = arith.mulf %295, %304 : vector<48x8xf32>
    %307 = arith.addf %305, %306 : vector<48x8xf32>
    %cst_97 = arith.constant dense<0.000000e+00> : vector<48xf32>
    %308 = vector.multi_reduction <add>, %307, %cst_97 [1] : vector<48x8xf32> to vector<48xf32>
    %309 = vector.shape_cast %308 : vector<48xf32> to vector<48x1xf32>
    %310 = tpu.iota {dimensions = array<i32: 1>} : vector<1x2xi32>
    %c0_i32 = arith.constant 0 : i32
    %311 = vector.broadcast %c0_i32 : i32 to vector<1x2xi32>
    %312 = arith.cmpi eq, %310, %311 : vector<1x2xi32>
    %313 = arith.extui %312 : vector<1x2xi1> to vector<1x2xi32>
    %314 = arith.sitofp %313 : vector<1x2xi32> to vector<1x2xf32>
    %315 = vector.broadcast %309 : vector<48x1xf32> to vector<48x2xf32>
    %316 = vector.broadcast %314 : vector<1x2xf32> to vector<48x2xf32>
    %317 = arith.mulf %315, %316 : vector<48x2xf32>
    %318 = vector.extract_strided_slice %296 {offsets = [1, 0, 0], sizes = [1, 24, 8], strides = [1, 1, 1]} : vector<2x24x8xf32> to vector<1x24x8xf32>
    %319 = vector.shape_cast %318 : vector<1x24x8xf32> to vector<24x8xf32>
    %320 = tpu.concatenate %319, %319 in 0 : vector<24x8xf32>, vector<24x8xf32> -> vector<48x8xf32>
    %321 = vector.extract_strided_slice %297 {offsets = [1, 0, 0], sizes = [1, 24, 8], strides = [1, 1, 1]} : vector<2x24x8xf32> to vector<1x24x8xf32>
    %322 = vector.shape_cast %321 : vector<1x24x8xf32> to vector<24x8xf32>
    %323 = tpu.concatenate %322, %322 in 0 : vector<24x8xf32>, vector<24x8xf32> -> vector<48x8xf32>
    %324 = arith.mulf %147, %320 : vector<48x8xf32>
    %325 = arith.mulf %295, %323 : vector<48x8xf32>
    %326 = arith.addf %324, %325 : vector<48x8xf32>
    %cst_98 = arith.constant dense<0.000000e+00> : vector<48xf32>
    %327 = vector.multi_reduction <add>, %326, %cst_98 [1] : vector<48x8xf32> to vector<48xf32>
    %328 = vector.shape_cast %327 : vector<48xf32> to vector<48x1xf32>
    %329 = tpu.iota {dimensions = array<i32: 1>} : vector<1x2xi32>
    %c1_i32 = arith.constant 1 : i32
    %330 = vector.broadcast %c1_i32 : i32 to vector<1x2xi32>
    %331 = arith.cmpi eq, %329, %330 : vector<1x2xi32>
    %332 = arith.extui %331 : vector<1x2xi1> to vector<1x2xi32>
    %333 = arith.sitofp %332 : vector<1x2xi32> to vector<1x2xf32>
    %334 = vector.broadcast %328 : vector<48x1xf32> to vector<48x2xf32>
    %335 = vector.broadcast %333 : vector<1x2xf32> to vector<48x2xf32>
    %336 = arith.mulf %334, %335 : vector<48x2xf32>
    %337 = arith.addf %317, %336 : vector<48x2xf32>
    %338 = tpu.iota {dimensions = array<i32: 1>} : vector<2x48xi32>
    %339 = tpu.iota {dimensions = array<i32: 0>} : vector<2x48xi32>
    %c24_i32 = arith.constant 24 : i32
    %340 = vector.broadcast %c24_i32 : i32 to vector<2x48xi32>
    %341 = arith.muli %339, %340 : vector<2x48xi32>
    %342 = arith.cmpi sge, %338, %341 : vector<2x48xi32>
    %c24_i32_99 = arith.constant 24 : i32
    %343 = vector.broadcast %c24_i32_99 : i32 to vector<2x48xi32>
    %344 = arith.muli %339, %343 : vector<2x48xi32>
    %c24_i32_100 = arith.constant 24 : i32
    %345 = vector.broadcast %c24_i32_100 : i32 to vector<2x48xi32>
    %346 = arith.addi %344, %345 : vector<2x48xi32>
    %347 = arith.cmpi slt, %338, %346 : vector<2x48xi32>
    %348 = arith.andi %342, %347 : vector<2x48xi1>
    %349 = arith.extui %348 : vector<2x48xi1> to vector<2x48xi32>
    %350 = arith.sitofp %349 : vector<2x48xi32> to vector<2x48xf32>
    %cst_101 = arith.constant dense<0.000000e+00> : vector<2x2xf32>
    %351 = tpu.matmul %350, %337, %cst_101 {dimension_numbers = #tpu.dot_dimension_numbers<[1], [0], [0], [1], [0, 0, 1, 1], [], []>} : vector<2x48xf32>, vector<48x2xf32>, vector<2x2xf32> -> vector<2x2xf32>
    %352 = vector.broadcast %298 : vector<1x2xf32> to vector<2x2xf32>
    %353 = arith.addf %351, %352 : vector<2x2xf32>
    %c0_102 = arith.constant 0 : index
    %c0_103 = arith.constant 0 : index
    %354 = vector.load %arg13[%c0_102, %c0_103] : memref<2x2xf32, #tpu.memory_space<vmem>>, vector<2x2xf32>
    tpu.vector_store %arg13[%c0_102, %c0_103], %353 {strides = array<i32>} : memref<2x2xf32, #tpu.memory_space<vmem>>, vector<2x2xf32>,
    return
  }
}

</mosaic_0001>

<llo_original>
// kernel: two_part_forward.1
$region0: #{two_part_forward.1}
  #allocation0 [shape = 'u32[]', space=smem, size = 0x4, offset = 0x4, fixed_abs, tag = 'smem constant byte address 0x4 - core index']
  #allocation1 [shape = 'u32[144,128]{1,0:T(1,128)}', space=vmem, size = 0x12000, scoped, tag = 'internal scratch']
  %s0 = inlined_call_operand.vmem [shape: f32[2,21,19], index: 0, kind: input, shape index: {}]
  %s1 = inlined_call_operand.vmem [shape: f32[2,21,20], index: 1, kind: input, shape index: {}]
  %s2 = inlined_call_operand.vmem [shape: f32[6,21,16], index: 2, kind: input, shape index: {}]
  %s3 = inlined_call_operand.vmem [shape: f32[2,16], index: 3, kind: input, shape index: {}]
  %s4 = inlined_call_operand.vmem [shape: f32[6,16,8], index: 4, kind: input, shape index: {}]
  %s5 = inlined_call_operand.vmem [shape: f32[2,8], index: 5, kind: input, shape index: {}]
  %s6 = inlined_call_operand.vmem [shape: f32[6,21,16], index: 6, kind: input, shape index: {}]
  %s7 = inlined_call_operand.vmem [shape: f32[2,16], index: 7, kind: input, shape index: {}]
  %s8 = inlined_call_operand.vmem [shape: f32[6,16,8], index: 8, kind: input, shape index: {}]
  %s9 = inlined_call_operand.vmem [shape: f32[2,8], index: 9, kind: input, shape index: {}]
  %s10 = inlined_call_operand.vmem [shape: f32[2,24,8], index: 10, kind: input, shape index: {}]
  %s11 = inlined_call_operand.vmem [shape: f32[2,24,8], index: 11, kind: input, shape index: {}]
  %s12 = inlined_call_operand.vmem [shape: f32[1,2], index: 12, kind: input, shape index: {}]
  %s13 = inlined_call_operand.hbm [shape: f32[2,2], index: 13, kind: output, shape index: {}]
  %s14 = sld [smem:[#allocation0]]
  $region62: #{two_part_forward.1} parent=0
    _
  %s16 = ssub.s32 1, %s14
  %s17 = scalar_select 0, %s16, %s14
  $region1: #{two_part_forward.1} parent=0
    #allocation2 [shape = 'u8[1024]{0}', space=vmem, size = 0x400, scoped, tag = 'output window, operand 0, single buffered']
    #allocation3 [shape = 's32[1]{0}', space=sflag, size = 0x4, scoped, tag = 'scoped memory for two_part_forward.1']
    %18 = vsyncpa [#allocation3], 0
    // Predicated region
    $region2: #{two_part_forward.1} parent=1 // pred_check
      _
    $region3: #{two_part_forward.1} parent=1 // pred_check_branch
      %20 = sbr.rel (0) target = $region5
    $region4: #{two_part_forward.1} parent=1 // pred_region
      _
    $region5: #{two_part_forward.1} parent=1 // pred_fallthru
      _
    // Predicated region
    $region6: #{two_part_forward.1} parent=1 // pred_check
      _
    $region7: #{two_part_forward.1} parent=1 // pred_check_branch
      %22 = sbr.rel (0) target = $region9
    $region8: #{two_part_forward.1} parent=1 // pred_region
      _
    $region9: #{two_part_forward.1} parent=1 // pred_fallthru
      _
    // Predicated region
    $region10: #{two_part_forward.1} parent=1 // pred_check
      _
    $region11: #{two_part_forward.1} parent=1 // pred_check_branch
      %24 = sbr.rel (0) target = $region13
    $region12: #{two_part_forward.1} parent=1 // pred_region
      _
    $region13: #{two_part_forward.1} parent=1 // pred_fallthru
      _
    // Predicated region
    $region14: #{two_part_forward.1} parent=1 // pred_check
      _
    $region15: #{two_part_forward.1} parent=1 // pred_check_branch
      %26 = sbr.rel (0) target = $region17
    $region16: #{two_part_forward.1} parent=1 // pred_region
      _
    $region17: #{two_part_forward.1} parent=1 // pred_fallthru
      _
    // Predicated region
    $region18: #{two_part_forward.1} parent=1 // pred_check
      _
    $region19: #{two_part_forward.1} parent=1 // pred_check_branch
      %28 = sbr.rel (0) target = $region21
    $region20: #{two_part_forward.1} parent=1 // pred_region
      _
    $region21: #{two_part_forward.1} parent=1 // pred_fallthru
      _
    // Predicated region
    $region22: #{two_part_forward.1} parent=1 // pred_check
      _
    $region23: #{two_part_forward.1} parent=1 // pred_check_branch
      %30 = sbr.rel (0) target = $region25
    $region24: #{two_part_forward.1} parent=1 // pred_region
      _
    $region25: #{two_part_forward.1} parent=1 // pred_fallthru
      _
    // Predicated region
    $region26: #{two_part_forward.1} parent=1 // pred_check
      _
    $region27: #{two_part_forward.1} parent=1 // pred_check_branch
      %32 = sbr.rel (0) target = $region29
    $region28: #{two_part_forward.1} parent=1 // pred_region
      _
    $region29: #{two_part_forward.1} parent=1 // pred_fallthru
      _
    // Predicated region
    $region30: #{two_part_forward.1} parent=1 // pred_check
      _
    $region31: #{two_part_forward.1} parent=1 // pred_check_branch
      %34 = sbr.rel (0) target = $region33
    $region32: #{two_part_forward.1} parent=1 // pred_region
      _
    $region33: #{two_part_forward.1} parent=1 // pred_fallthru
      _
    // Predicated region
    $region34: #{two_part_forward.1} parent=1 // pred_check
      _
    $region35: #{two_part_forward.1} parent=1 // pred_check_branch
      %36 = sbr.rel (0) target = $region37
    $region36: #{two_part_forward.1} parent=1 // pred_region
      _
    $region37: #{two_part_forward.1} parent=1 // pred_fallthru
      _
    // Predicated region
    $region38: #{two_part_forward.1} parent=1 // pred_check
      _
    $region39: #{two_part_forward.1} parent=1 // pred_check_branch
      %38 = sbr.rel (0) target = $region41
    $region40: #{two_part_forward.1} parent=1 // pred_region
      _
    $region41: #{two_part_forward.1} parent=1 // pred_fallthru
      _
    // Predicated region
    $region42: #{two_part_forward.1} parent=1 // pred_check
      _
    $region43: #{two_part_forward.1} parent=1 // pred_check_branch
      %40 = sbr.rel (0) target = $region45
    $region44: #{two_part_forward.1} parent=1 // pred_region
      _
    $region45: #{two_part_forward.1} parent=1 // pred_fallthru
      _
    // Predicated region
    $region46: #{two_part_forward.1} parent=1 // pred_check
      _
    $region47: #{two_part_forward.1} parent=1 // pred_check_branch
      %42 = sbr.rel (0) target = $region49
    $region48: #{two_part_forward.1} parent=1 // pred_region
      _
    $region49: #{two_part_forward.1} parent=1 // pred_fallthru
      _
    // Predicated region
    $region50: #{two_part_forward.1} parent=1 // pred_check
      _
    $region51: #{two_part_forward.1} parent=1 // pred_check_branch
      %44 = sbr.rel (0) target = $region53
    $region52: #{two_part_forward.1} parent=1 // pred_region
      _
    $region53: #{two_part_forward.1} parent=1 // pred_fallthru
      _
    %v45 = vlaneseq
    %v46 = vshrl.u32 %v45, 7
    %v47 = vadd.s32 %v46, 8
    %v48 = vadd.s32 %v46, 16
    %v49 = vlaneseq
    %v50 = vand.u32 %v49, 127
    %vm51 = vcmp.eq.s32.totalorder %v46, %v50
    %vm52 = vcmp.eq.s32.totalorder %v47, %v50
    %vm53 = vcmp.eq.s32.totalorder %v48, %v50
    %v54 = vsel %vm51, 1, 0
    %v55 = vsel %vm52, 1, 0
    %v56 = vsel %vm53, 1, 0
    %v57 = vcvt.s32.f32 %v54
    %v58 = vcvt.s32.f32 %v55
    %v59 = vcvt.s32.f32 %v56
    %v60 = vld [vmem:[%s0] sm:$0xff]
    %v61 = vld [vmem:[%s0 + $0x8] sm:$0xff]
    %v62 = vld [vmem:[%s0 + $0x10] sm:$0x1f]
    %vm63 = vcmask 154624
    %v65 = vsel %vm63, %v57, 0
    %v68 = vsel %vm63, %v58, 0
    %v71 = vsel %vm63, %v59, 0
    %v74 = vsel %vm63, %v60, 0
    %v77 = vsel %vm63, %v61, 0
    %v80 = vsel %vm63, %v62, 0
    %82 = vmatprep.subr.mxu0 0.0
    %83 = vmatpush1.xpose.msra.mxu0 %v74
    %84 = vmatprep.subr.mxu0 0.0
    %85 = vmatpush1.xpose.msra.mxu0 %v77
    %86 = vmatprep.subr.mxu0 0.0
    %87 = vmatpush1.xpose.msra.mxu0 %v80
    %88 = vmatprep.subr.mxu0 0.0
    %89 = vmatpush1.xpose.msra.mxu0 0.0
    %90 = vmatprep.subr.mxu0 0.0
    %91 = vmatpush1.xpose.msra.mxu0 0.0
    %92 = vmatprep.subr.mxu0 0.0
    %93 = vmatpush1.xpose.msra.mxu0 0.0
    %94 = vmatprep.subr.mxu0 0.0
    %95 = vmatpush1.xpose.msra.mxu0 0.0
    %96 = vmatprep.subr.mxu0 0.0
    %97 = vmatpush1.xpose.msra.mxu0 0.0
    %98 = vmatprep.subr.mxu0 0.0
    %99 = vmatpush1.xpose.msra.mxu0 0.0
    %100 = vmatprep.subr.mxu0 0.0
    %101 = vmatpush1.xpose.msra.mxu0 0.0
    %102 = vmatprep.subr.mxu0 0.0
    %103 = vmatpush1.xpose.msra.mxu0 0.0
    %104 = vmatprep.subr.mxu0 0.0
    %105 = vmatpush1.xpose.msra.mxu0 0.0
    %106 = vmatprep.subr.mxu0 0.0
    %107 = vmatpush1.xpose.msra.mxu0 0.0
    %108 = vmatprep.subr.mxu0 0.0
    %109 = vmatpush1.xpose.msra.mxu0 0.0
    %110 = vmatprep.subr.mxu0 0.0
    %111 = vmatpush1.xpose.msra.mxu0 0.0
    %112 = vmatprep.subr.mxu0 0.0
    %113 = vmatpush1.xpose.msra.mxu0 0.0
    %114 = vmatprep.subr.mxu0 0.0
    %115 = vmatpush1.xpose.msra.mxu0 0.0
    %116 = vmatprep.subr.mxu0 0.0
    %117 = vmatpush1.xpose.msra.mxu0 0.0
    %118 = vmatprep.subr.mxu0 0.0
    %119 = vmatpush1.xpose.msra.mxu0 0.0
    %120 = vmatprep.subr.mxu0 0.0
    %121 = vmatpush1.xpose.msra.mxu0 0.0
    %122 = vmatprep.subr.mxu0 0.0
    %123 = vmatpush1.xpose.msra.mxu0 0.0
    %124 = vmatprep.subr.mxu0 0.0
    %125 = vmatpush1.xpose.msra.mxu0 0.0
    %126 = vmatprep.subr.mxu0 0.0
    %127 = vmatpush1.xpose.msra.mxu0 0.0
    %128 = vmatprep.subr.mxu0 0.0
    %129 = vmatpush1.xpose.msra.mxu0 0.0
    %130 = vmatprep.subr.mxu0 0.0
    %131 = vmatpush1.xpose.msra.mxu0 0.0
    %132 = vmatprep.subr.mxu0 0.0
    %133 = vmatpush1.xpose.msra.mxu0 0.0
    %134 = vmatprep.subr.mxu0 0.0
    %135 = vmatpush1.xpose.msra.mxu0 0.0
    %136 = vmatprep.subr.mxu0 0.0
    %137 = vmatpush1.xpose.msra.mxu0 0.0
    %138 = vmatprep.subr.mxu0 0.0
    %139 = vmatpush1.xpose.msra.mxu0 0.0
    %140 = vmatprep.subr.mxu0 0.0
    %141 = vmatpush1.xpose.msra.mxu0 0.0
    %142 = vmatprep.subr.mxu0 0.0
    %143 = vmatpush1.xpose.msra.mxu0 0.0
    %144 = vmatprep.subr.mxu0 0.0
    %145 = vmatpush1.xpose.msra.mxu0 0.0
    %146 = vmatprep.mubr.f32.mxu0 0.0
    %147 = vmatmul.mubr.f32.gmra.mrb[0].mxu0 %v65
    %v148 = vpop.f32.mrb[0].mxu0
    %v149 = vadd.f32 0.0, %v148
    %v150 = vpop.f32.mrb[0].mxu0
    %151 = vmatprep.mubr.f32.mxu0 0.0
    %152 = vmatmul.mubr.f32.gmra.mrb[0].mxu0 %v68
    %v153 = vpop.f32.mrb[0].mxu0
    %v154 = vadd.f32 0.0, %v153
    %v155 = vpop.f32.mrb[0].mxu0
    %156 = vmatprep.mubr.f32.mxu0 0.0
    %157 = vmatmul.mubr.f32.gmra.mrb[0].mxu0 %v71
    %v158 = vpop.f32.mrb[0].mxu0
    %v159 = vadd.f32 0.0, %v158
    %v160 = vpop.f32.mrb[0].mxu0
    %161 = vdwg.mxu0
    %s162 = scalar_lea.vmem %s0, 24
    %v163 = vld [vmem:[%s162] sm:$0xff]
    %v164 = vld [vmem:[%s162 + $0x8] sm:$0xff]
    %v165 = vld [vmem:[%s162 + $0x10] sm:$0x1f]
    %v167 = vsel %vm63, %v163, 0
    %v170 = vsel %vm63, %v164, 0
    %v173 = vsel %vm63, %v165, 0
    %175 = vmatprep.subr.mxu0 0.0
    %176 = vmatpush1.xpose.msra.mxu0 %v167
    %177 = vmatprep.subr.mxu0 0.0
    %178 = vmatpush1.xpose.msra.mxu0 %v170
    %179 = vmatprep.subr.mxu0 0.0
    %180 = vmatpush1.xpose.msra.mxu0 %v173
    %181 = vmatprep.subr.mxu0 0.0
    %182 = vmatpush1.xpose.msra.mxu0 0.0
    %183 = vmatprep.subr.mxu0 0.0
    %184 = vmatpush1.xpose.msra.mxu0 0.0
    %185 = vmatprep.subr.mxu0 0.0
    %186 = vmatpush1.xpose.msra.mxu0 0.0
    %187 = vmatprep.subr.mxu0 0.0
    %188 = vmatpush1.xpose.msra.mxu0 0.0
    %189 = vmatprep.subr.mxu0 0.0
    %190 = vmatpush1.xpose.msra.mxu0 0.0
    %191 = vmatprep.subr.mxu0 0.0
    %192 = vmatpush1.xpose.msra.mxu0 0.0
    %193 = vmatprep.subr.mxu0 0.0
    %194 = vmatpush1.xpose.msra.mxu0 0.0
    %195 = vmatprep.subr.mxu0 0.0
    %196 = vmatpush1.xpose.msra.mxu0 0.0
    %197 = vmatprep.subr.mxu0 0.0
    %198 = vmatpush1.xpose.msra.mxu0 0.0
    %199 = vmatprep.subr.mxu0 0.0
    %200 = vmatpush1.xpose.msra.mxu0 0.0
    %201 = vmatprep.subr.mxu0 0.0
    %202 = vmatpush1.xpose.msra.mxu0 0.0
    %203 = vmatprep.subr.mxu0 0.0
    %204 = vmatpush1.xpose.msra.mxu0 0.0
    %205 = vmatprep.subr.mxu0 0.0
    %206 = vmatpush1.xpose.msra.mxu0 0.0
    %207 = vmatprep.subr.mxu0 0.0
    %208 = vmatpush1.xpose.msra.mxu0 0.0
    %209 = vmatprep.subr.mxu0 0.0
    %210 = vmatpush1.xpose.msra.mxu0 0.0
    %211 = vmatprep.subr.mxu0 0.0
    %212 = vmatpush1.xpose.msra.mxu0 0.0
    %213 = vmatprep.subr.mxu0 0.0
    %214 = vmatpush1.xpose.msra.mxu0 0.0
    %215 = vmatprep.subr.mxu0 0.0
    %216 = vmatpush1.xpose.msra.mxu0 0.0
    %217 = vmatprep.subr.mxu0 0.0
    %218 = vmatpush1.xpose.msra.mxu0 0.0
    %219 = vmatprep.subr.mxu0 0.0
    %220 = vmatpush1.xpose.msra.mxu0 0.0
    %221 = vmatprep.subr.mxu0 0.0
    %222 = vmatpush1.xpose.msra.mxu0 0.0
    %223 = vmatprep.subr.mxu0 0.0
    %224 = vmatpush1.xpose.msra.mxu0 0.0
    %225 = vmatprep.subr.mxu0 0.0
    %226 = vmatpush1.xpose.msra.mxu0 0.0
    %227 = vmatprep.subr.mxu0 0.0
    %228 = vmatpush1.xpose.msra.mxu0 0.0
    %229 = vmatprep.subr.mxu0 0.0
    %230 = vmatpush1.xpose.msra.mxu0 0.0
    %231 = vmatprep.subr.mxu0 0.0
    %232 = vmatpush1.xpose.msra.mxu0 0.0
    %233 = vmatprep.subr.mxu0 0.0
    %234 = vmatpush1.xpose.msra.mxu0 0.0
    %235 = vmatprep.subr.mxu0 0.0
    %236 = vmatpush1.xpose.msra.mxu0 0.0
    %237 = vmatprep.subr.mxu0 0.0
    %238 = vmatpush1.xpose.msra.mxu0 0.0
    %239 = vmatprep.mubr.f32.mxu0 0.0
    %240 = vmatmul.mubr.f32.gmra.mrb[0].mxu0 %v65
    %v241 = vpop.f32.mrb[0].mxu0
    %v242 = vadd.f32 0.0, %v241
    %v243 = vpop.f32.mrb[0].mxu0
    %244 = vmatprep.mubr.f32.mxu0 0.0
    %245 = vmatmul.mubr.f32.gmra.mrb[0].mxu0 %v68
    %v246 = vpop.f32.mrb[0].mxu0
    %v247 = vadd.f32 0.0, %v246
    %v248 = vpop.f32.mrb[0].mxu0
    %249 = vmatprep.mubr.f32.mxu0 0.0
    %250 = vmatmul.mubr.f32.gmra.mrb[0].mxu0 %v71
    %v251 = vpop.f32.mrb[0].mxu0
    %v252 = vadd.f32 0.0, %v251
    %v253 = vpop.f32.mrb[0].mxu0
    %254 = vdwg.mxu0
    %v255 = vld [vmem:[%s2] sm:$0xff]
    %v256 = vld [vmem:[%s2 + $0x8] sm:$0xff]
    %v257 = vld [vmem:[%s2 + $0x10] sm:$0x1f]
    %v258 = vld [vmem:[%s2 + $0x18] sm:$0xff]
    %v259 = vld [vmem:[%s2 + $0x20] sm:$0xff]
    %v260 = vld [vmem:[%s2 + $0x28] sm:$0x1f]
    %v261 = vld [vmem:[%s2 + $0x30] sm:$0xff]
    %v262 = vld [vmem:[%s2 + $0x38] sm:$0xff]
    %v263 = vld [vmem:[%s2 + $0x40] sm:$0x1f]
    %v264 = vld [vmem:[%s2 + $0x48] sm:$0xff]
    %v265 = vld [vmem:[%s2 + $0x50] sm:$0xff]
    %v266 = vld [vmem:[%s2 + $0x58] sm:$0x1f]
    %v267 = vld [vmem:[%s2 + $0x60] sm:$0xff]
    %v268 = vld [vmem:[%s2 + $0x68] sm:$0xff]
    %v269 = vld [vmem:[%s2 + $0x70] sm:$0x1f]
    %v270 = vld [vmem:[%s2 + $0x78] sm:$0xff]
    %v271 = vld [vmem:[%s2 + $0x80] sm:$0xff]
    %v272 = vld [vmem:[%s2 + $0x88] sm:$0x1f]
    %v273 = vld [vmem:[%s3] sm:$0x3]
    %vm281 = vcmask 1046528
    %v282 = vrot.slane %v149, 1
    %v283 = vrot.slane %v154, 1
    %v284 = vsel %vm281, %v282, %v283
    %v285 = vrot.slane %v159, 1
    %v286 = vsel %vm281, %v283, %v285
    %v287 = vrot.slane %v242, 1
    %v288 = vsel %vm281, %v285, %v287
    %v289 = vrot.slane %v247, 1
    %v290 = vsel %vm281, %v287, %v289
    %v291 = vrot.slane %v252, 1
    %v292 = vsel %vm281, %v289, %v291
    %v293 = vrot.slane 0.0, 1
    %v294 = vsel %vm281, %v291, %v293
    %vm295 = vcmask 171008
    %v296 = vsel %vm295, %v284, 0
    %v298 = vsel %vm295, %v286, 0
    %v300 = vsel %vm295, %v288, 0
    %v302 = vsel %vm295, %v290, 0
    %v304 = vsel %vm295, %v292, 0
    %v306 = vsel %vm295, %v294, 0
    %vm308 = vcmask 1044480
    %v310 = vsel %vm308, %v260, 0
    %312 = vmatprep.subr.mxu0 0.0
    %313 = vmatpush1.msra.mxu0 %v258
    %314 = vmatprep.subr.mxu0 0.0
    %315 = vmatpush1.msra.mxu0 %v259
    %316 = vmatprep.subr.mxu0 0.0
    %317 = vmatpush1.msra.mxu0 %v310
    %318 = vmatprep.subr.mxu0 0.0
    %319 = vmatpush1.msra.mxu0 0.0
    %320 = vmatprep.subr.mxu0 0.0
    %321 = vmatpush1.msra.mxu0 0.0
    %322 = vmatprep.subr.mxu0 0.0
    %323 = vmatpush1.msra.mxu0 0.0
    %324 = vmatprep.subr.mxu0 0.0
    %325 = vmatpush1.msra.mxu0 0.0
    %326 = vmatprep.subr.mxu0 0.0
    %327 = vmatpush1.msra.mxu0 0.0
    %328 = vmatprep.subr.mxu0 0.0
    %329 = vmatpush1.msra.mxu0 0.0
    %330 = vmatprep.subr.mxu0 0.0
    %331 = vmatpush1.msra.mxu0 0.0
    %332 = vmatprep.subr.mxu0 0.0
    %333 = vmatpush1.msra.mxu0 0.0
    %334 = vmatprep.subr.mxu0 0.0
    %335 = vmatpush1.msra.mxu0 0.0
    %336 = vmatprep.subr.mxu0 0.0
    %337 = vmatpush1.msra.mxu0 0.0
    %338 = vmatprep.subr.mxu0 0.0
    %339 = vmatpush1.msra.mxu0 0.0
    %340 = vmatprep.subr.mxu0 0.0
    %341 = vmatpush1.msra.mxu0 0.0
    %342 = vmatprep.subr.mxu0 0.0
    %343 = vmatpush1.msra.mxu0 0.0
    %344 = vmatprep.subr.mxu0 0.0
    %345 = vmatpush1.msra.mxu0 0.0
    %346 = vmatprep.subr.mxu0 0.0
    %347 = vmatpush1.msra.mxu0 0.0
    %348 = vmatprep.subr.mxu0 0.0
    %349 = vmatpush1.msra.mxu0 0.0
    %350 = vmatprep.subr.mxu0 0.0
    %351 = vmatpush1.msra.mxu0 0.0
    %352 = vmatprep.subr.mxu0 0.0
    %353 = vmatpush1.msra.mxu0 0.0
    %354 = vmatprep.subr.mxu0 0.0
    %355 = vmatpush1.msra.mxu0 0.0
    %356 = vmatprep.subr.mxu0 0.0
    %357 = vmatpush1.msra.mxu0 0.0
    %358 = vmatprep.subr.mxu0 0.0
    %359 = vmatpush1.msra.mxu0 0.0
    %360 = vmatprep.subr.mxu0 0.0
    %361 = vmatpush1.msra.mxu0 0.0
    %362 = vmatprep.subr.mxu0 0.0
    %363 = vmatpush1.msra.mxu0 0.0
    %364 = vmatprep.subr.mxu0 0.0
    %365 = vmatpush1.msra.mxu0 0.0
    %366 = vmatprep.subr.mxu0 0.0
    %367 = vmatpush1.msra.mxu0 0.0
    %368 = vmatprep.subr.mxu0 0.0
    %369 = vmatpush1.msra.mxu0 0.0
    %370 = vmatprep.subr.mxu0 0.0
    %371 = vmatpush1.msra.mxu0 0.0
    %372 = vmatprep.subr.mxu0 0.0
    %373 = vmatpush1.msra.mxu0 0.0
    %374 = vmatprep.subr.mxu0 0.0
    %375 = vmatpush1.msra.mxu0 0.0
    %376 = vmatprep.mubr.f32.mxu0 0.0
    %377 = vmatmul.mubr.f32.gmra.mrb[0].mxu0 %v296
    %v378 = vpop.f32.mrb[0].mxu0
    %v379 = vadd.f32 0.0, %v378
    %v380 = vpop.f32.mrb[0].mxu0
    %381 = vmatprep.mubr.f32.mxu0 0.0
    %382 = vmatmul.mubr.f32.gmra.mrb[0].mxu0 %v298
    %v383 = vpop.f32.mrb[0].mxu0
    %v384 = vadd.f32 0.0, %v383
    %v385 = vpop.f32.mrb[0].mxu0
    %386 = vmatprep.mubr.f32.mxu0 0.0
    %387 = vmatmul.mubr.f32.gmra.mrb[0].mxu0 %v300
    %v388 = vpop.f32.mrb[0].mxu0
    %v389 = vadd.f32 0.0, %v388
    %v390 = vpop.f32.mrb[0].mxu0
    %391 = vmatprep.mubr.f32.mxu0 0.0
    %392 = vmatmul.mubr.f32.gmra.mrb[0].mxu0 %v302
    %v393 = vpop.f32.mrb[0].mxu0
    %v394 = vadd.f32 0.0, %v393
    %v395 = vpop.f32.mrb[0].mxu0
    %396 = vmatprep.mubr.f32.mxu0 0.0
    %397 = vmatmul.mubr.f32.gmra.mrb[0].mxu0 %v304
    %v398 = vpop.f32.mrb[0].mxu0
    %v399 = vadd.f32 0.0, %v398
    %v400 = vpop.f32.mrb[0].mxu0
    %401 = vmatprep.mubr.f32.mxu0 0.0
    %402 = vmatmul.mubr.f32.gmra.mrb[0].mxu0 %v306
    %v403 = vpop.f32.mrb[0].mxu0
    %v404 = vadd.f32 0.0, %v403
    %v405 = vpop.f32.mrb[0].mxu0
    %406 = vdwg.mxu0
    %v407 = vrot.slane %v149, 3
    %v408 = vrot.slane %v154, 3
    %v409 = vsel %vm308, %v407, %v408
    %v410 = vrot.slane %v159, 3
    %v411 = vsel %vm308, %v408, %v410
    %v412 = vrot.slane %v242, 3
    %v413 = vsel %vm308, %v410, %v412
    %v414 = vrot.slane %v247, 3
    %v415 = vsel %vm308, %v412, %v414
    %v416 = vrot.slane %v252, 3
    %v417 = vsel %vm308, %v414, %v416
    %v418 = vrot.slane 0.0, 3
    %v419 = vsel %vm308, %v416, %v418
    %v420 = vsel %vm295, %v409, 0
    %v422 = vsel %vm295, %v411, 0
    %v424 = vsel %vm295, %v413, 0
    %v426 = vsel %vm295, %v415, 0
    %v428 = vsel %vm295, %v417, 0
    %v430 = vsel %vm295, %v419, 0
    %v433 = vsel %vm308, %v266, 0
    %435 = vmatprep.subr.mxu0 0.0
    %436 = vmatpush1.msra.mxu0 %v264
    %437 = vmatprep.subr.mxu0 0.0
    %438 = vmatpush1.msra.mxu0 %v265
    %439 = vmatprep.subr.mxu0 0.0
    %440 = vmatpush1.msra.mxu0 %v433
    %441 = vmatprep.subr.mxu0 0.0
    %442 = vmatpush1.msra.mxu0 0.0
    %443 = vmatprep.subr.mxu0 0.0
    %444 = vmatpush1.msra.mxu0 0.0
    %445 = vmatprep.subr.mxu0 0.0
    %446 = vmatpush1.msra.mxu0 0.0
    %447 = vmatprep.subr.mxu0 0.0
    %448 = vmatpush1.msra.mxu0 0.0
    %449 = vmatprep.subr.mxu0 0.0
    %450 = vmatpush1.msra.mxu0 0.0
    %451 = vmatprep.subr.mxu0 0.0
    %452 = vmatpush1.msra.mxu0 0.0
    %453 = vmatprep.subr.mxu0 0.0
    %454 = vmatpush1.msra.mxu0 0.0
    %455 = vmatprep.subr.mxu0 0.0
    %456 = vmatpush1.msra.mxu0 0.0
    %457 = vmatprep.subr.mxu0 0.0
    %458 = vmatpush1.msra.mxu0 0.0
    %459 = vmatprep.subr.mxu0 0.0
    %460 = vmatpush1.msra.mxu0 0.0
    %461 = vmatprep.subr.mxu0 0.0
    %462 = vmatpush1.msra.mxu0 0.0
    %463 = vmatprep.subr.mxu0 0.0
    %464 = vmatpush1.msra.mxu0 0.0
    %465 = vmatprep.subr.mxu0 0.0
    %466 = vmatpush1.msra.mxu0 0.0
    %467 = vmatprep.subr.mxu0 0.0
    %468 = vmatpush1.msra.mxu0 0.0
    %469 = vmatprep.subr.mxu0 0.0
    %470 = vmatpush1.msra.mxu0 0.0
    %471 = vmatprep.subr.mxu0 0.0
    %472 = vmatpush1.msra.mxu0 0.0
    %473 = vmatprep.subr.mxu0 0.0
    %474 = vmatpush1.msra.mxu0 0.0
    %475 = vmatprep.subr.mxu0 0.0
    %476 = vmatpush1.msra.mxu0 0.0
    %477 = vmatprep.subr.mxu0 0.0
    %478 = vmatpush1.msra.mxu0 0.0
    %479 = vmatprep.subr.mxu0 0.0
    %480 = vmatpush1.msra.mxu0 0.0
    %481 = vmatprep.subr.mxu0 0.0
    %482 = vmatpush1.msra.mxu0 0.0
    %483 = vmatprep.subr.mxu0 0.0
    %484 = vmatpush1.msra.mxu0 0.0
    %485 = vmatprep.subr.mxu0 0.0
    %486 = vmatpush1.msra.mxu0 0.0
    %487 = vmatprep.subr.mxu0 0.0
    %488 = vmatpush1.msra.mxu0 0.0
    %489 = vmatprep.subr.mxu0 0.0
    %490 = vmatpush1.msra.mxu0 0.0
    %491 = vmatprep.subr.mxu0 0.0
    %492 = vmatpush1.msra.mxu0 0.0
    %493 = vmatprep.subr.mxu0 0.0
    %494 = vmatpush1.msra.mxu0 0.0
    %495 = vmatprep.subr.mxu0 0.0
    %496 = vmatpush1.msra.mxu0 0.0
    %497 = vmatprep.subr.mxu0 0.0
    %498 = vmatpush1.msra.mxu0 0.0
    %499 = vmatprep.mubr.f32.mxu0 0.0
    %500 = vmatmul.mubr.f32.gmra.mrb[0].mxu0 %v420
    %v501 = vpop.f32.mrb[0].mxu0
    %v502 = vadd.f32 0.0, %v501
    %v503 = vpop.f32.mrb[0].mxu0
    %504 = vmatprep.mubr.f32.mxu0 0.0
    %505 = vmatmul.mubr.f32.gmra.mrb[0].mxu0 %v422
    %v506 = vpop.f32.mrb[0].mxu0
    %v507 = vadd.f32 0.0, %v506
    %v508 = vpop.f32.mrb[0].mxu0
    %509 = vmatprep.mubr.f32.mxu0 0.0
    %510 = vmatmul.mubr.f32.gmra.mrb[0].mxu0 %v424
    %v511 = vpop.f32.mrb[0].mxu0
    %v512 = vadd.f32 0.0, %v511
    %v513 = vpop.f32.mrb[0].mxu0
    %514 = vmatprep.mubr.f32.mxu0 0.0
    %515 = vmatmul.mubr.f32.gmra.mrb[0].mxu0 %v426
    %v516 = vpop.f32.mrb[0].mxu0
    %v517 = vadd.f32 0.0, %v516
    %v518 = vpop.f32.mrb[0].mxu0
    %519 = vmatprep.mubr.f32.mxu0 0.0
    %520 = vmatmul.mubr.f32.gmra.mrb[0].mxu0 %v428
    %v521 = vpop.f32.mrb[0].mxu0
    %v522 = vadd.f32 0.0, %v521
    %v523 = vpop.f32.mrb[0].mxu0
    %524 = vmatprep.mubr.f32.mxu0 0.0
    %525 = vmatmul.mubr.f32.gmra.mrb[0].mxu0 %v430
    %v526 = vpop.f32.mrb[0].mxu0
    %v527 = vadd.f32 0.0, %v526
    %v528 = vpop.f32.mrb[0].mxu0
    %529 = vdwg.mxu0
    %vm530 = vcmask 1042432
    %v531 = vrot.slane %v149, 5
    %v532 = vrot.slane %v154, 5
    %v533 = vsel %vm530, %v531, %v532
    %v534 = vrot.slane %v159, 5
    %v535 = vsel %vm530, %v532, %v534
    %v536 = vrot.slane %v242, 5
    %v537 = vsel %vm530, %v534, %v536
    %v538 = vrot.slane %v247, 5
    %v539 = vsel %vm530, %v536, %v538
    %v540 = vrot.slane %v252, 5
    %v541 = vsel %vm530, %v538, %v540
    %v542 = vrot.slane 0.0, 5
    %v543 = vsel %vm530, %v540, %v542
    %v544 = vsel %vm295, %v533, 0
    %v546 = vsel %vm295, %v535, 0
    %v548 = vsel %vm295, %v537, 0
    %v550 = vsel %vm295, %v539, 0
    %v552 = vsel %vm295, %v541, 0
    %v554 = vsel %vm295, %v543, 0
    %v557 = vsel %vm308, %v272, 0
    %559 = vmatprep.subr.mxu0 0.0
    %560 = vmatpush1.msra.mxu0 %v270
    %561 = vmatprep.subr.mxu0 0.0
    %562 = vmatpush1.msra.mxu0 %v271
    %563 = vmatprep.subr.mxu0 0.0
    %564 = vmatpush1.msra.mxu0 %v557
    %565 = vmatprep.subr.mxu0 0.0
    %566 = vmatpush1.msra.mxu0 0.0
    %567 = vmatprep.subr.mxu0 0.0
    %568 = vmatpush1.msra.mxu0 0.0
    %569 = vmatprep.subr.mxu0 0.0
    %570 = vmatpush1.msra.mxu0 0.0
    %571 = vmatprep.subr.mxu0 0.0
    %572 = vmatpush1.msra.mxu0 0.0
    %573 = vmatprep.subr.mxu0 0.0
    %574 = vmatpush1.msra.mxu0 0.0
    %575 = vmatprep.subr.mxu0 0.0
    %576 = vmatpush1.msra.mxu0 0.0
    %577 = vmatprep.subr.mxu0 0.0
    %578 = vmatpush1.msra.mxu0 0.0
    %579 = vmatprep.subr.mxu0 0.0
    %580 = vmatpush1.msra.mxu0 0.0
    %581 = vmatprep.subr.mxu0 0.0
    %582 = vmatpush1.msra.mxu0 0.0
    %583 = vmatprep.subr.mxu0 0.0
    %584 = vmatpush1.msra.mxu0 0.0
    %585 = vmatprep.subr.mxu0 0.0
    %586 = vmatpush1.msra.mxu0 0.0
    %587 = vmatprep.subr.mxu0 0.0
    %588 = vmatpush1.msra.mxu0 0.0
    %589 = vmatprep.subr.mxu0 0.0
    %590 = vmatpush1.msra.mxu0 0.0
    %591 = vmatprep.subr.mxu0 0.0
    %592 = vmatpush1.msra.mxu0 0.0
    %593 = vmatprep.subr.mxu0 0.0
    %594 = vmatpush1.msra.mxu0 0.0
    %595 = vmatprep.subr.mxu0 0.0
    %596 = vmatpush1.msra.mxu0 0.0
    %597 = vmatprep.subr.mxu0 0.0
    %598 = vmatpush1.msra.mxu0 0.0
    %599 = vmatprep.subr.mxu0 0.0
    %600 = vmatpush1.msra.mxu0 0.0
    %601 = vmatprep.subr.mxu0 0.0
    %602 = vmatpush1.msra.mxu0 0.0
    %603 = vmatprep.subr.mxu0 0.0
    %604 = vmatpush1.msra.mxu0 0.0
    %605 = vmatprep.subr.mxu0 0.0
    %606 = vmatpush1.msra.mxu0 0.0
    %607 = vmatprep.subr.mxu0 0.0
    %608 = vmatpush1.msra.mxu0 0.0
    %609 = vmatprep.subr.mxu0 0.0
    %610 = vmatpush1.msra.mxu0 0.0
    %611 = vmatprep.subr.mxu0 0.0
    %612 = vmatpush1.msra.mxu0 0.0
    %613 = vmatprep.subr.mxu0 0.0
    %614 = vmatpush1.msra.mxu0 0.0
    %615 = vmatprep.subr.mxu0 0.0
    %616 = vmatpush1.msra.mxu0 0.0
    %617 = vmatprep.subr.mxu0 0.0
    %618 = vmatpush1.msra.mxu0 0.0
    %619 = vmatprep.subr.mxu0 0.0
    %620 = vmatpush1.msra.mxu0 0.0
    %621 = vmatprep.subr.mxu0 0.0
    %622 = vmatpush1.msra.mxu0 0.0
    %623 = vmatprep.mubr.f32.mxu0 0.0
    %624 = vmatmul.mubr.f32.gmra.mrb[0].mxu0 %v544
    %v625 = vpop.f32.mrb[0].mxu0
    %v626 = vadd.f32 0.0, %v625
    %v627 = vpop.f32.mrb[0].mxu0
    %628 = vmatprep.mubr.f32.mxu0 0.0
    %629 = vmatmul.mubr.f32.gmra.mrb[0].mxu0 %v546
    %v630 = vpop.f32.mrb[0].mxu0
    %v631 = vadd.f32 0.0, %v630
    %v632 = vpop.f32.mrb[0].mxu0
    %633 = vmatprep.mubr.f32.mxu0 0.0
    %634 = vmatmul.mubr.f32.gmra.mrb[0].mxu0 %v548
    %v635 = vpop.f32.mrb[0].mxu0
    %v636 = vadd.f32 0.0, %v635
    %v637 = vpop.f32.mrb[0].mxu0
    %638 = vmatprep.mubr.f32.mxu0 0.0
    %639 = vmatmul.mubr.f32.gmra.mrb[0].mxu0 %v550
    %v640 = vpop.f32.mrb[0].mxu0
    %v641 = vadd.f32 0.0, %v640
    %v642 = vpop.f32.mrb[0].mxu0
    %643 = vmatprep.mubr.f32.mxu0 0.0
    %644 = vmatmul.mubr.f32.gmra.mrb[0].mxu0 %v552
    %v645 = vpop.f32.mrb[0].mxu0
    %v646 = vadd.f32 0.0, %v645
    %v647 = vpop.f32.mrb[0].mxu0
    %648 = vmatprep.mubr.f32.mxu0 0.0
    %649 = vmatmul.mubr.f32.gmra.mrb[0].mxu0 %v554
    %v650 = vpop.f32.mrb[0].mxu0
    %v651 = vadd.f32 0.0, %v650
    %v652 = vpop.f32.mrb[0].mxu0
    %653 = vdwg.mxu0
    %v654 = vsel %vm295, %v149, 0
    %v656 = vsel %vm295, %v154, 0
    %v658 = vsel %vm295, %v159, 0
    %v660 = vsel %vm295, %v242, 0
    %v662 = vsel %vm295, %v247, 0
    %v664 = vsel %vm295, %v252, 0
    %v667 = vsel %vm308, %v257, 0
    %669 = vmatprep.subr.mxu0 0.0
    %670 = vmatpush1.msra.mxu0 %v255
    %671 = vmatprep.subr.mxu0 0.0
    %672 = vmatpush1.msra.mxu0 %v256
    %673 = vmatprep.subr.mxu0 0.0
    %674 = vmatpush1.msra.mxu0 %v667
    %675 = vmatprep.subr.mxu0 0.0
    %676 = vmatpush1.msra.mxu0 0.0
    %677 = vmatprep.subr.mxu0 0.0
    %678 = vmatpush1.msra.mxu0 0.0
    %679 = vmatprep.subr.mxu0 0.0
    %680 = vmatpush1.msra.mxu0 0.0
    %681 = vmatprep.subr.mxu0 0.0
    %682 = vmatpush1.msra.mxu0 0.0
    %683 = vmatprep.subr.mxu0 0.0
    %684 = vmatpush1.msra.mxu0 0.0
    %685 = vmatprep.subr.mxu0 0.0
    %686 = vmatpush1.msra.mxu0 0.0
    %687 = vmatprep.subr.mxu0 0.0
    %688 = vmatpush1.msra.mxu0 0.0
    %689 = vmatprep.subr.mxu0 0.0
    %690 = vmatpush1.msra.mxu0 0.0
    %691 = vmatprep.subr.mxu0 0.0
    %692 = vmatpush1.msra.mxu0 0.0
    %693 = vmatprep.subr.mxu0 0.0
    %694 = vmatpush1.msra.mxu0 0.0
    %695 = vmatprep.subr.mxu0 0.0
    %696 = vmatpush1.msra.mxu0 0.0
    %697 = vmatprep.subr.mxu0 0.0
    %698 = vmatpush1.msra.mxu0 0.0
    %699 = vmatprep.subr.mxu0 0.0
    %700 = vmatpush1.msra.mxu0 0.0
    %701 = vmatprep.subr.mxu0 0.0
    %702 = vmatpush1.msra.mxu0 0.0
    %703 = vmatprep.subr.mxu0 0.0
    %704 = vmatpush1.msra.mxu0 0.0
    %705 = vmatprep.subr.mxu0 0.0
    %706 = vmatpush1.msra.mxu0 0.0
    %707 = vmatprep.subr.mxu0 0.0
    %708 = vmatpush1.msra.mxu0 0.0
    %709 = vmatprep.subr.mxu0 0.0
    %710 = vmatpush1.msra.mxu0 0.0
    %711 = vmatprep.subr.mxu0 0.0
    %712 = vmatpush1.msra.mxu0 0.0
    %713 = vmatprep.subr.mxu0 0.0
    %714 = vmatpush1.msra.mxu0 0.0
    %715 = vmatprep.subr.mxu0 0.0
    %716 = vmatpush1.msra.mxu0 0.0
    %717 = vmatprep.subr.mxu0 0.0
    %718 = vmatpush1.msra.mxu0 0.0
    %719 = vmatprep.subr.mxu0 0.0
    %720 = vmatpush1.msra.mxu0 0.0
    %721 = vmatprep.subr.mxu0 0.0
    %722 = vmatpush1.msra.mxu0 0.0
    %723 = vmatprep.subr.mxu0 0.0
    %724 = vmatpush1.msra.mxu0 0.0
    %725 = vmatprep.subr.mxu0 0.0
    %726 = vmatpush1.msra.mxu0 0.0
    %727 = vmatprep.subr.mxu0 0.0
    %728 = vmatpush1.msra.mxu0 0.0
    %729 = vmatprep.subr.mxu0 0.0
    %730 = vmatpush1.msra.mxu0 0.0
    %731 = vmatprep.subr.mxu0 0.0
    %732 = vmatpush1.msra.mxu0 0.0
    %733 = vmatprep.mubr.f32.mxu0 0.0
    %734 = vmatmul.mubr.f32.gmra.mrb[0].mxu0 %v654
    %v735 = vpop.f32.mrb[0].mxu0
    %v736 = vadd.f32 %v379, %v735
    %v737 = vpop.f32.mrb[0].mxu0
    %738 = vmatprep.mubr.f32.mxu0 0.0
    %739 = vmatmul.mubr.f32.gmra.mrb[0].mxu0 %v656
    %v740 = vpop.f32.mrb[0].mxu0
    %v741 = vadd.f32 %v384, %v740
    %v742 = vpop.f32.mrb[0].mxu0
    %743 = vmatprep.mubr.f32.mxu0 0.0
    %744 = vmatmul.mubr.f32.gmra.mrb[0].mxu0 %v658
    %v745 = vpop.f32.mrb[0].mxu0
    %v746 = vadd.f32 %v389, %v745
    %v747 = vpop.f32.mrb[0].mxu0
    %748 = vmatprep.mubr.f32.mxu0 0.0
    %749 = vmatmul.mubr.f32.gmra.mrb[0].mxu0 %v660
    %v750 = vpop.f32.mrb[0].mxu0
    %v751 = vadd.f32 %v394, %v750
    %v752 = vpop.f32.mrb[0].mxu0
    %753 = vmatprep.mubr.f32.mxu0 0.0
    %754 = vmatmul.mubr.f32.gmra.mrb[0].mxu0 %v662
    %v755 = vpop.f32.mrb[0].mxu0
    %v756 = vadd.f32 %v399, %v755
    %v757 = vpop.f32.mrb[0].mxu0
    %758 = vmatprep.mubr.f32.mxu0 0.0
    %759 = vmatmul.mubr.f32.gmra.mrb[0].mxu0 %v664
    %v760 = vpop.f32.mrb[0].mxu0
    %v761 = vadd.f32 %v404, %v760
    %v762 = vpop.f32.mrb[0].mxu0
    %763 = vdwg.mxu0
    %vm764 = vcmask 1045504
    %v765 = vrot.slane %v149, 2
    %v766 = vrot.slane %v154, 2
    %v767 = vsel %vm764, %v765, %v766
    %v768 = vrot.slane %v159, 2
    %v769 = vsel %vm764, %v766, %v768
    %v770 = vrot.slane %v242, 2
    %v771 = vsel %vm764, %v768, %v770
    %v772 = vrot.slane %v247, 2
    %v773 = vsel %vm764, %v770, %v772
    %v774 = vrot.slane %v252, 2
    %v775 = vsel %vm764, %v772, %v774
    %v776 = vrot.slane 0.0, 2
    %v777 = vsel %vm764, %v774, %v776
    %v778 = vsel %vm295, %v767, 0
    %v780 = vsel %vm295, %v769, 0
    %v782 = vsel %vm295, %v771, 0
    %v784 = vsel %vm295, %v773, 0
    %v786 = vsel %vm295, %v775, 0
    %v788 = vsel %vm295, %v777, 0
    %v791 = vsel %vm308, %v263, 0
    %793 = vmatprep.subr.mxu0 0.0
    %794 = vmatpush1.msra.mxu0 %v261
    %795 = vmatprep.subr.mxu0 0.0
    %796 = vmatpush1.msra.mxu0 %v262
    %797 = vmatprep.subr.mxu0 0.0
    %798 = vmatpush1.msra.mxu0 %v791
    %799 = vmatprep.subr.mxu0 0.0
    %800 = vmatpush1.msra.mxu0 0.0
    %801 = vmatprep.subr.mxu0 0.0
    %802 = vmatpush1.msra.mxu0 0.0
    %803 = vmatprep.subr.mxu0 0.0
    %804 = vmatpush1.msra.mxu0 0.0
    %805 = vmatprep.subr.mxu0 0.0
    %806 = vmatpush1.msra.mxu0 0.0
    %807 = vmatprep.subr.mxu0 0.0
    %808 = vmatpush1.msra.mxu0 0.0
    %809 = vmatprep.subr.mxu0 0.0
    %810 = vmatpush1.msra.mxu0 0.0
    %811 = vmatprep.subr.mxu0 0.0
    %812 = vmatpush1.msra.mxu0 0.0
    %813 = vmatprep.subr.mxu0 0.0
    %814 = vmatpush1.msra.mxu0 0.0
    %815 = vmatprep.subr.mxu0 0.0
    %816 = vmatpush1.msra.mxu0 0.0
    %817 = vmatprep.subr.mxu0 0.0
    %818 = vmatpush1.msra.mxu0 0.0
    %819 = vmatprep.subr.mxu0 0.0
    %820 = vmatpush1.msra.mxu0 0.0
    %821 = vmatprep.subr.mxu0 0.0
    %822 = vmatpush1.msra.mxu0 0.0
    %823 = vmatprep.subr.mxu0 0.0
    %824 = vmatpush1.msra.mxu0 0.0
    %825 = vmatprep.subr.mxu0 0.0
    %826 = vmatpush1.msra.mxu0 0.0
    %827 = vmatprep.subr.mxu0 0.0
    %828 = vmatpush1.msra.mxu0 0.0
    %829 = vmatprep.subr.mxu0 0.0
    %830 = vmatpush1.msra.mxu0 0.0
    %831 = vmatprep.subr.mxu0 0.0
    %832 = vmatpush1.msra.mxu0 0.0
    %833 = vmatprep.subr.mxu0 0.0
    %834 = vmatpush1.msra.mxu0 0.0
    %835 = vmatprep.subr.mxu0 0.0
    %836 = vmatpush1.msra.mxu0 0.0
    %837 = vmatprep.subr.mxu0 0.0
    %838 = vmatpush1.msra.mxu0 0.0
    %839 = vmatprep.subr.mxu0 0.0
    %840 = vmatpush1.msra.mxu0 0.0
    %841 = vmatprep.subr.mxu0 0.0
    %842 = vmatpush1.msra.mxu0 0.0
    %843 = vmatprep.subr.mxu0 0.0
    %844 = vmatpush1.msra.mxu0 0.0
    %845 = vmatprep.subr.mxu0 0.0
    %846 = vmatpush1.msra.mxu0 0.0
    %847 = vmatprep.subr.mxu0 0.0
    %848 = vmatpush1.msra.mxu0 0.0
    %849 = vmatprep.subr.mxu0 0.0
    %850 = vmatpush1.msra.mxu0 0.0
    %851 = vmatprep.subr.mxu0 0.0
    %852 = vmatpush1.msra.mxu0 0.0
    %853 = vmatprep.subr.mxu0 0.0
    %854 = vmatpush1.msra.mxu0 0.0
    %855 = vmatprep.subr.mxu0 0.0
    %856 = vmatpush1.msra.mxu0 0.0
    %857 = vmatprep.mubr.f32.mxu0 0.0
    %858 = vmatmul.mubr.f32.gmra.mrb[0].mxu0 %v778
    %v859 = vpop.f32.mrb[0].mxu0
    %v860 = vadd.f32 %v502, %v859
    %v861 = vpop.f32.mrb[0].mxu0
    %862 = vmatprep.mubr.f32.mxu0 0.0
    %863 = vmatmul.mubr.f32.gmra.mrb[0].mxu0 %v780
    %v864 = vpop.f32.mrb[0].mxu0
    %v865 = vadd.f32 %v507, %v864
    %v866 = vpop.f32.mrb[0].mxu0
    %867 = vmatprep.mubr.f32.mxu0 0.0
    %868 = vmatmul.mubr.f32.gmra.mrb[0].mxu0 %v782
    %v869 = vpop.f32.mrb[0].mxu0
    %v870 = vadd.f32 %v512, %v869
    %v871 = vpop.f32.mrb[0].mxu0
    %872 = vmatprep.mubr.f32.mxu0 0.0
    %873 = vmatmul.mubr.f32.gmra.mrb[0].mxu0 %v784
    %v874 = vpop.f32.mrb[0].mxu0
    %v875 = vadd.f32 %v517, %v874
    %v876 = vpop.f32.mrb[0].mxu0
    %877 = vmatprep.mubr.f32.mxu0 0.0
    %878 = vmatmul.mubr.f32.gmra.mrb[0].mxu0 %v786
    %v879 = vpop.f32.mrb[0].mxu0
    %v880 = vadd.f32 %v522, %v879
    %v881 = vpop.f32.mrb[0].mxu0
    %882 = vmatprep.mubr.f32.mxu0 0.0
    %883 = vmatmul.mubr.f32.gmra.mrb[0].mxu0 %v788
    %v884 = vpop.f32.mrb[0].mxu0
    %v885 = vadd.f32 %v527, %v884
    %v886 = vpop.f32.mrb[0].mxu0
    %887 = vdwg.mxu0
    %vm888 = vcmask 1043456
    %v889 = vrot.slane %v149, 4
    %v890 = vrot.slane %v154, 4
    %v891 = vsel %vm888, %v889, %v890
    %v892 = vrot.slane %v159, 4
    %v893 = vsel %vm888, %v890, %v892
    %v894 = vrot.slane %v242, 4
    %v895 = vsel %vm888, %v892, %v894
    %v896 = vrot.slane %v247, 4
    %v897 = vsel %vm888, %v894, %v896
    %v898 = vrot.slane %v252, 4
    %v899 = vsel %vm888, %v896, %v898
    %v900 = vrot.slane 0.0, 4
    %v901 = vsel %vm888, %v898, %v900
    %v902 = vsel %vm295, %v891, 0
    %v904 = vsel %vm295, %v893, 0
    %v906 = vsel %vm295, %v895, 0
    %v908 = vsel %vm295, %v897, 0
    %v910 = vsel %vm295, %v899, 0
    %v912 = vsel %vm295, %v901, 0
    %v915 = vsel %vm308, %v269, 0
    %917 = vmatprep.subr.mxu0 0.0
    %918 = vmatpush1.msra.mxu0 %v267
    %919 = vmatprep.subr.mxu0 0.0
    %920 = vmatpush1.msra.mxu0 %v268
    %921 = vmatprep.subr.mxu0 0.0
    %922 = vmatpush1.msra.mxu0 %v915
    %923 = vmatprep.subr.mxu0 0.0
    %924 = vmatpush1.msra.mxu0 0.0
    %925 = vmatprep.subr.mxu0 0.0
    %926 = vmatpush1.msra.mxu0 0.0
    %927 = vmatprep.subr.mxu0 0.0
    %928 = vmatpush1.msra.mxu0 0.0
    %929 = vmatprep.subr.mxu0 0.0
    %930 = vmatpush1.msra.mxu0 0.0
    %931 = vmatprep.subr.mxu0 0.0
    %932 = vmatpush1.msra.mxu0 0.0
    %933 = vmatprep.subr.mxu0 0.0
    %934 = vmatpush1.msra.mxu0 0.0
    %935 = vmatprep.subr.mxu0 0.0
    %936 = vmatpush1.msra.mxu0 0.0
    %937 = vmatprep.subr.mxu0 0.0
    %938 = vmatpush1.msra.mxu0 0.0
    %939 = vmatprep.subr.mxu0 0.0
    %940 = vmatpush1.msra.mxu0 0.0
    %941 = vmatprep.subr.mxu0 0.0
    %942 = vmatpush1.msra.mxu0 0.0
    %943 = vmatprep.subr.mxu0 0.0
    %944 = vmatpush1.msra.mxu0 0.0
    %945 = vmatprep.subr.mxu0 0.0
    %946 = vmatpush1.msra.mxu0 0.0
    %947 = vmatprep.subr.mxu0 0.0
    %948 = vmatpush1.msra.mxu0 0.0
    %949 = vmatprep.subr.mxu0 0.0
    %950 = vmatpush1.msra.mxu0 0.0
    %951 = vmatprep.subr.mxu0 0.0
    %952 = vmatpush1.msra.mxu0 0.0
    %953 = vmatprep.subr.mxu0 0.0
    %954 = vmatpush1.msra.mxu0 0.0
    %955 = vmatprep.subr.mxu0 0.0
    %956 = vmatpush1.msra.mxu0 0.0
    %957 = vmatprep.subr.mxu0 0.0
    %958 = vmatpush1.msra.mxu0 0.0
    %959 = vmatprep.subr.mxu0 0.0
    %960 = vmatpush1.msra.mxu0 0.0
    %961 = vmatprep.subr.mxu0 0.0
    %962 = vmatpush1.msra.mxu0 0.0
    %963 = vmatprep.subr.mxu0 0.0
    %964 = vmatpush1.msra.mxu0 0.0
    %965 = vmatprep.subr.mxu0 0.0
    %966 = vmatpush1.msra.mxu0 0.0
    %967 = vmatprep.subr.mxu0 0.0
    %968 = vmatpush1.msra.mxu0 0.0
    %969 = vmatprep.subr.mxu0 0.0
    %970 = vmatpush1.msra.mxu0 0.0
    %971 = vmatprep.subr.mxu0 0.0
    %972 = vmatpush1.msra.mxu0 0.0
    %973 = vmatprep.subr.mxu0 0.0
    %974 = vmatpush1.msra.mxu0 0.0
    %975 = vmatprep.subr.mxu0 0.0
    %976 = vmatpush1.msra.mxu0 0.0
    %977 = vmatprep.subr.mxu0 0.0
    %978 = vmatpush1.msra.mxu0 0.0
    %979 = vmatprep.subr.mxu0 0.0
    %980 = vmatpush1.msra.mxu0 0.0
    %981 = vmatprep.mubr.f32.mxu0 0.0
    %982 = vmatmul.mubr.f32.gmra.mrb[0].mxu0 %v902
    %v983 = vpop.f32.mrb[0].mxu0
    %v984 = vadd.f32 %v626, %v983
    %v985 = vpop.f32.mrb[0].mxu0
    %986 = vmatprep.mubr.f32.mxu0 0.0
    %987 = vmatmul.mubr.f32.gmra.mrb[0].mxu0 %v904
    %v988 = vpop.f32.mrb[0].mxu0
    %v989 = vadd.f32 %v631, %v988
    %v990 = vpop.f32.mrb[0].mxu0
    %991 = vmatprep.mubr.f32.mxu0 0.0
    %992 = vmatmul.mubr.f32.gmra.mrb[0].mxu0 %v906
    %v993 = vpop.f32.mrb[0].mxu0
    %v994 = vadd.f32 %v636, %v993
    %v995 = vpop.f32.mrb[0].mxu0
    %996 = vmatprep.mubr.f32.mxu0 0.0
    %997 = vmatmul.mubr.f32.gmra.mrb[0].mxu0 %v908
    %v998 = vpop.f32.mrb[0].mxu0
    %v999 = vadd.f32 %v641, %v998
    %v1000 = vpop.f32.mrb[0].mxu0
    %1001 = vmatprep.mubr.f32.mxu0 0.0
    %1002 = vmatmul.mubr.f32.gmra.mrb[0].mxu0 %v910
    %v1003 = vpop.f32.mrb[0].mxu0
    %v1004 = vadd.f32 %v646, %v1003
    %v1005 = vpop.f32.mrb[0].mxu0
    %1006 = vmatprep.mubr.f32.mxu0 0.0
    %1007 = vmatmul.mubr.f32.gmra.mrb[0].mxu0 %v912
    %v1008 = vpop.f32.mrb[0].mxu0
    %v1009 = vadd.f32 %v651, %v1008
    %v1010 = vpop.f32.mrb[0].mxu0
    %1011 = vdwg.mxu0
    %v1012 = vadd.f32 %v736, %v860
    %v1013 = vadd.f32 %v741, %v865
    %v1014 = vadd.f32 %v746, %v870
    %v1015 = vadd.f32 %v751, %v875
    %v1016 = vadd.f32 %v756, %v880
    %v1017 = vadd.f32 %v761, %v885
    %v1018 = vadd.f32 %v1012, %v984
    %v1019 = vadd.f32 %v1013, %v989
    %v1020 = vadd.f32 %v1014, %v994
    %v1021 = vadd.f32 %v1015, %v999
    %v1022 = vadd.f32 %v1016, %v1004
    %v1023 = vadd.f32 %v1017, %v1009
    %vm1024 = vcmp.lt.s32.totalorder %v46, 14
    %vm1025 = vcmp.lt.s32.totalorder %v47, 14
    %vm1026 = vcmp.lt.s32.totalorder %v48, 14
    %v1027 = vsel %vm1024, 1, 0
    %v1028 = vsel %vm1025, 1, 0
    %v1029 = vsel %vm1026, 1, 0
    %v1030 = vcvt.s32.f32 %v1027
    %v1031 = vcvt.s32.f32 %v1028
    %v1032 = vcvt.s32.f32 %v1029
    %1034 = vset.pattern.permute.xlu0 0
    %1035 = vperm.xlu0 %1034, %v1030
    %v1036 = vpop.permute.xlu0 %1035
    %1039 = vset.pattern.permute.xlu0 0
    %1040 = vperm.xlu0 %1039, %v1031
    %v1041 = vpop.permute.xlu0 %1040
    %1044 = vset.pattern.permute.xlu0 0
    %1045 = vperm.xlu0 %1044, %v1032
    %v1046 = vpop.permute.xlu0 %1045
    %v1048 = vmul.f32 %v1018, %v1036
    %v1049 = vmul.f32 %v1019, %v1041
    %v1050 = vmul.f32 %v1020, %v1046
    %v1051 = vmul.f32 %v1021, %v1036
    %v1052 = vmul.f32 %v1022, %v1041
    %v1053 = vmul.f32 %v1023, %v1046
    %vm1054 = vcmask 130048
    %v1055 = vsel %vm1054, %v1048, 0.0
    %v1056 = vsel %vm1054, %v1049, 0.0
    %v1057 = vadd.f32 %v1055, %v1056
    %v1058 = vsel %vm1054, %v1050, 0.0
    %v1059 = vadd.f32 %v1057, %v1058
    %v1060 = vsel %vm1054, %v1051, 0.0
    %v1061 = vadd.f32 %v1059, %v1060
    %v1062 = vsel %vm1054, %v1052, 0.0
    %v1063 = vadd.f32 %v1061, %v1062
    %v1064 = vsel %vm1054, %v1053, 0.0
    %v1065 = vadd.f32 %v1063, %v1064
    %v1066 = vrot.slane %v1065, 4
    %v1067 = vadd.f32 %v1065, %v1066
    %v1068 = vrot.slane %v1067, 2
    %v1069 = vadd.f32 %v1067, %v1068
    %v1070 = vrot.slane %v1069, 1
    %v1071 = vadd.f32 %v1069, %v1070
    %v1072 = vmul.f32 %v1048, %v1018
    %v1073 = vmul.f32 %v1049, %v1019
    %v1074 = vmul.f32 %v1050, %v1020
    %v1075 = vmul.f32 %v1051, %v1021
    %v1076 = vmul.f32 %v1052, %v1022
    %v1077 = vmul.f32 %v1053, %v1023
    %v1078 = vsel %vm1054, %v1072, 0.0
    %v1079 = vsel %vm1054, %v1073, 0.0
    %v1080 = vadd.f32 %v1078, %v1079
    %v1081 = vsel %vm1054, %v1074, 0.0
    %v1082 = vadd.f32 %v1080, %v1081
    %v1083 = vsel %vm1054, %v1075, 0.0
    %v1084 = vadd.f32 %v1082, %v1083
    %v1085 = vsel %vm1054, %v1076, 0.0
    %v1086 = vadd.f32 %v1084, %v1085
    %v1087 = vsel %vm1054, %v1077, 0.0
    %v1088 = vadd.f32 %v1086, %v1087
    %v1089 = vrot.slane %v1088, 4
    %v1090 = vadd.f32 %v1088, %v1089
    %v1091 = vrot.slane %v1090, 2
    %v1092 = vadd.f32 %v1090, %v1091
    %v1093 = vrot.slane %v1092, 1
    %v1094 = vadd.f32 %v1092, %v1093
    %v1095 = vmul.f32 %v1071, 0.035714287
    %v1096 = vmul.f32 %v1094, 0.035714287
    %v1097 = vmul.f32 %v1095, %v1095
    %v1098 = vsub.f32 %v1096, %v1097
    %v1099 = vmax.f32 %v1098, 0.0
    %v1100 = vadd.f32 %v1099, 1e-05
    %v1101 = vrsqrt.pop %v1100
    %v1102 = vmul.f32 %v273, %v1101
    %v1103 = vmul.f32 %v1095, %v1102
    %v1105 = vrot.slane %v1103, 7
    %v1107 = vsub.f32 %v273, %v1105
    %v1108 = vlaneseq
    %v1109 = vshrl.u32 %v1108, 7
    %v1110 = vsub.s32 0, %v1109
    %v1111 = vrot.slane %v1102, %v1110
    %v1112 = vmul.f32 %v1018, %v1111
    %v1113 = vmul.f32 %v1019, %v1111
    %v1114 = vmul.f32 %v1020, %v1111
    %v1115 = vmul.f32 %v1021, %v1111
    %v1116 = vmul.f32 %v1022, %v1111
    %v1117 = vmul.f32 %v1023, %v1111
    %v1118 = vlaneseq
    %v1119 = vshrl.u32 %v1118, 7
    %v1120 = vsub.s32 1, %v1119
    %v1121 = vrot.slane %v1107, %v1120
    %v1122 = vadd.f32 %v1112, %v1121
    %v1123 = vadd.f32 %v1113, %v1121
    %v1124 = vadd.f32 %v1114, %v1121
    %v1125 = vadd.f32 %v1115, %v1121
    %v1126 = vadd.f32 %v1116, %v1121
    %v1127 = vadd.f32 %v1117, %v1121
    %v1128 = vmax.f32 %v1122, 0.0
    %v1129 = vmax.f32 %v1123, 0.0
    %v1130 = vmax.f32 %v1124, 0.0
    %v1131 = vmax.f32 %v1125, 0.0
    %v1132 = vmax.f32 %v1126, 0.0
    %v1133 = vmax.f32 %v1127, 0.0
    %v1134 = vld [vmem:[%s4] sm:$0xff]
    %v1135 = vld [vmem:[%s4 + $0x8] sm:$0xff]
    %v1136 = vld [vmem:[%s4 + $0x10] sm:$0xff]
    %v1137 = vld [vmem:[%s4 + $0x18] sm:$0xff]
    %v1138 = vld [vmem:[%s4 + $0x20] sm:$0xff]
    %v1139 = vld [vmem:[%s4 + $0x28] sm:$0xff]
    %v1140 = vld [vmem:[%s4 + $0x30] sm:$0xff]
    %v1141 = vld [vmem:[%s4 + $0x38] sm:$0xff]
    %v1142 = vld [vmem:[%s4 + $0x40] sm:$0xff]
    %v1143 = vld [vmem:[%s4 + $0x48] sm:$0xff]
    %v1144 = vld [vmem:[%s4 + $0x50] sm:$0xff]
    %v1145 = vld [vmem:[%s4 + $0x58] sm:$0xff]
    %v1146 = vld [vmem:[%s5] sm:$0x3]
    %v1153 = vrot.slane %v1128, 1
    %v1154 = vrot.slane %v1129, 1
    %v1155 = vsel %vm281, %v1153, %v1154
    %v1156 = vrot.slane %v1130, 1
    %v1157 = vsel %vm281, %v1154, %v1156
    %v1158 = vrot.slane %v1131, 1
    %v1159 = vsel %vm281, %v1156, %v1158
    %v1160 = vrot.slane %v1132, 1
    %v1161 = vsel %vm281, %v1158, %v1160
    %v1162 = vrot.slane %v1133, 1
    %v1163 = vsel %vm281, %v1160, %v1162
    %v1164 = vsel %vm281, %v1162, %v293
    %v1165 = vsel %vm1054, %v1155, 0
    %v1167 = vsel %vm1054, %v1157, 0
    %v1169 = vsel %vm1054, %v1159, 0
    %v1171 = vsel %vm1054, %v1161, 0
    %v1173 = vsel %vm1054, %v1163, 0
    %v1175 = vsel %vm1054, %v1164, 0
    %1177 = vmatprep.subr.mxu0 0.0
    %1178 = vmatpush1.msra.mxu0 %v1136
    %1179 = vmatprep.subr.mxu0 0.0
    %1180 = vmatpush1.msra.mxu0 %v1137
    %1181 = vmatprep.subr.mxu0 0.0
    %1182 = vmatpush1.msra.mxu0 0.0
    %1183 = vmatprep.subr.mxu0 0.0
    %1184 = vmatpush1.msra.mxu0 0.0
    %1185 = vmatprep.subr.mxu0 0.0
    %1186 = vmatpush1.msra.mxu0 0.0
    %1187 = vmatprep.subr.mxu0 0.0
    %1188 = vmatpush1.msra.mxu0 0.0
    %1189 = vmatprep.subr.mxu0 0.0
    %1190 = vmatpush1.msra.mxu0 0.0
    %1191 = vmatprep.subr.mxu0 0.0
    %1192 = vmatpush1.msra.mxu0 0.0
    %1193 = vmatprep.subr.mxu0 0.0
    %1194 = vmatpush1.msra.mxu0 0.0
    %1195 = vmatprep.subr.mxu0 0.0
    %1196 = vmatpush1.msra.mxu0 0.0
    %1197 = vmatprep.subr.mxu0 0.0
    %1198 = vmatpush1.msra.mxu0 0.0
    %1199 = vmatprep.subr.mxu0 0.0
    %1200 = vmatpush1.msra.mxu0 0.0
    %1201 = vmatprep.subr.mxu0 0.0
    %1202 = vmatpush1.msra.mxu0 0.0
    %1203 = vmatprep.subr.mxu0 0.0
    %1204 = vmatpush1.msra.mxu0 0.0
    %1205 = vmatprep.subr.mxu0 0.0
    %1206 = vmatpush1.msra.mxu0 0.0
    %1207 = vmatprep.subr.mxu0 0.0
    %1208 = vmatpush1.msra.mxu0 0.0
    %1209 = vmatprep.subr.mxu0 0.0
    %1210 = vmatpush1.msra.mxu0 0.0
    %1211 = vmatprep.subr.mxu0 0.0
    %1212 = vmatpush1.msra.mxu0 0.0
    %1213 = vmatprep.subr.mxu0 0.0
    %1214 = vmatpush1.msra.mxu0 0.0
    %1215 = vmatprep.subr.mxu0 0.0
    %1216 = vmatpush1.msra.mxu0 0.0
    %1217 = vmatprep.subr.mxu0 0.0
    %1218 = vmatpush1.msra.mxu0 0.0
    %1219 = vmatprep.subr.mxu0 0.0
    %1220 = vmatpush1.msra.mxu0 0.0
    %1221 = vmatprep.subr.mxu0 0.0
    %1222 = vmatpush1.msra.mxu0 0.0
    %1223 = vmatprep.subr.mxu0 0.0
    %1224 = vmatpush1.msra.mxu0 0.0
    %1225 = vmatprep.subr.mxu0 0.0
    %1226 = vmatpush1.msra.mxu0 0.0
    %1227 = vmatprep.subr.mxu0 0.0
    %1228 = vmatpush1.msra.mxu0 0.0
    %1229 = vmatprep.subr.mxu0 0.0
    %1230 = vmatpush1.msra.mxu0 0.0
    %1231 = vmatprep.subr.mxu0 0.0
    %1232 = vmatpush1.msra.mxu0 0.0
    %1233 = vmatprep.subr.mxu0 0.0
    %1234 = vmatpush1.msra.mxu0 0.0
    %1235 = vmatprep.subr.mxu0 0.0
    %1236 = vmatpush1.msra.mxu0 0.0
    %1237 = vmatprep.subr.mxu0 0.0
    %1238 = vmatpush1.msra.mxu0 0.0
    %1239 = vmatprep.subr.mxu0 0.0
    %1240 = vmatpush1.msra.mxu0 0.0
    %1241 = vmatprep.mubr.f32.mxu0 0.0
    %1242 = vmatmul.mubr.f32.gmra.mrb[0].mxu0 %v1165
    %v1243 = vpop.f32.mrb[0].mxu0
    %v1244 = vadd.f32 0.0, %v1243
    %v1245 = vpop.f32.mrb[0].mxu0
    %1246 = vmatprep.mubr.f32.mxu0 0.0
    %1247 = vmatmul.mubr.f32.gmra.mrb[0].mxu0 %v1167
    %v1248 = vpop.f32.mrb[0].mxu0
    %v1249 = vadd.f32 0.0, %v1248
    %v1250 = vpop.f32.mrb[0].mxu0
    %1251 = vmatprep.mubr.f32.mxu0 0.0
    %1252 = vmatmul.mubr.f32.gmra.mrb[0].mxu0 %v1169
    %v1253 = vpop.f32.mrb[0].mxu0
    %v1254 = vadd.f32 0.0, %v1253
    %v1255 = vpop.f32.mrb[0].mxu0
    %1256 = vmatprep.mubr.f32.mxu0 0.0
    %1257 = vmatmul.mubr.f32.gmra.mrb[0].mxu0 %v1171
    %v1258 = vpop.f32.mrb[0].mxu0
    %v1259 = vadd.f32 0.0, %v1258
    %v1260 = vpop.f32.mrb[0].mxu0
    %1261 = vmatprep.mubr.f32.mxu0 0.0
    %1262 = vmatmul.mubr.f32.gmra.mrb[0].mxu0 %v1173
    %v1263 = vpop.f32.mrb[0].mxu0
    %v1264 = vadd.f32 0.0, %v1263
    %v1265 = vpop.f32.mrb[0].mxu0
    %1266 = vmatprep.mubr.f32.mxu0 0.0
    %1267 = vmatmul.mubr.f32.gmra.mrb[0].mxu0 %v1175
    %v1268 = vpop.f32.mrb[0].mxu0
    %v1269 = vadd.f32 0.0, %v1268
    %v1270 = vpop.f32.mrb[0].mxu0
    %1271 = vdwg.mxu0
    %v1272 = vrot.slane %v1128, 3
    %v1273 = vrot.slane %v1129, 3
    %v1274 = vsel %vm308, %v1272, %v1273
    %v1275 = vrot.slane %v1130, 3
    %v1276 = vsel %vm308, %v1273, %v1275
    %v1277 = vrot.slane %v1131, 3
    %v1278 = vsel %vm308, %v1275, %v1277
    %v1279 = vrot.slane %v1132, 3
    %v1280 = vsel %vm308, %v1277, %v1279
    %v1281 = vrot.slane %v1133, 3
    %v1282 = vsel %vm308, %v1279, %v1281
    %v1283 = vsel %vm308, %v1281, %v418
    %v1284 = vsel %vm1054, %v1274, 0
    %v1286 = vsel %vm1054, %v1276, 0
    %v1288 = vsel %vm1054, %v1278, 0
    %v1290 = vsel %vm1054, %v1280, 0
    %v1292 = vsel %vm1054, %v1282, 0
    %v1294 = vsel %vm1054, %v1283, 0
    %1296 = vmatprep.subr.mxu0 0.0
    %1297 = vmatpush1.msra.mxu0 %v1140
    %1298 = vmatprep.subr.mxu0 0.0
    %1299 = vmatpush1.msra.mxu0 %v1141
    %1300 = vmatprep.subr.mxu0 0.0
    %1301 = vmatpush1.msra.mxu0 0.0
    %1302 = vmatprep.subr.mxu0 0.0
    %1303 = vmatpush1.msra.mxu0 0.0
    %1304 = vmatprep.subr.mxu0 0.0
    %1305 = vmatpush1.msra.mxu0 0.0
    %1306 = vmatprep.subr.mxu0 0.0
    %1307 = vmatpush1.msra.mxu0 0.0
    %1308 = vmatprep.subr.mxu0 0.0
    %1309 = vmatpush1.msra.mxu0 0.0
    %1310 = vmatprep.subr.mxu0 0.0
    %1311 = vmatpush1.msra.mxu0 0.0
    %1312 = vmatprep.subr.mxu0 0.0
    %1313 = vmatpush1.msra.mxu0 0.0
    %1314 = vmatprep.subr.mxu0 0.0
    %1315 = vmatpush1.msra.mxu0 0.0
    %1316 = vmatprep.subr.mxu0 0.0
    %1317 = vmatpush1.msra.mxu0 0.0
    %1318 = vmatprep.subr.mxu0 0.0
    %1319 = vmatpush1.msra.mxu0 0.0
    %1320 = vmatprep.subr.mxu0 0.0
    %1321 = vmatpush1.msra.mxu0 0.0
    %1322 = vmatprep.subr.mxu0 0.0
    %1323 = vmatpush1.msra.mxu0 0.0
    %1324 = vmatprep.subr.mxu0 0.0
    %1325 = vmatpush1.msra.mxu0 0.0
    %1326 = vmatprep.subr.mxu0 0.0
    %1327 = vmatpush1.msra.mxu0 0.0
    %1328 = vmatprep.subr.mxu0 0.0
    %1329 = vmatpush1.msra.mxu0 0.0
    %1330 = vmatprep.subr.mxu0 0.0
    %1331 = vmatpush1.msra.mxu0 0.0
    %1332 = vmatprep.subr.mxu0 0.0
    %1333 = vmatpush1.msra.mxu0 0.0
    %1334 = vmatprep.subr.mxu0 0.0
    %1335 = vmatpush1.msra.mxu0 0.0
    %1336 = vmatprep.subr.mxu0 0.0
    %1337 = vmatpush1.msra.mxu0 0.0
    %1338 = vmatprep.subr.mxu0 0.0
    %1339 = vmatpush1.msra.mxu0 0.0
    %1340 = vmatprep.subr.mxu0 0.0
    %1341 = vmatpush1.msra.mxu0 0.0
    %1342 = vmatprep.subr.mxu0 0.0
    %1343 = vmatpush1.msra.mxu0 0.0
    %1344 = vmatprep.subr.mxu0 0.0
    %1345 = vmatpush1.msra.mxu0 0.0
    %1346 = vmatprep.subr.mxu0 0.0
    %1347 = vmatpush1.msra.mxu0 0.0
    %1348 = vmatprep.subr.mxu0 0.0
    %1349 = vmatpush1.msra.mxu0 0.0
    %1350 = vmatprep.subr.mxu0 0.0
    %1351 = vmatpush1.msra.mxu0 0.0
    %1352 = vmatprep.subr.mxu0 0.0
    %1353 = vmatpush1.msra.mxu0 0.0
    %1354 = vmatprep.subr.mxu0 0.0
    %1355 = vmatpush1.msra.mxu0 0.0
    %1356 = vmatprep.subr.mxu0 0.0
    %1357 = vmatpush1.msra.mxu0 0.0
    %1358 = vmatprep.subr.mxu0 0.0
    %1359 = vmatpush1.msra.mxu0 0.0
    %1360 = vmatprep.mubr.f32.mxu0 0.0
    %1361 = vmatmul.mubr.f32.gmra.mrb[0].mxu0 %v1284
    %v1362 = vpop.f32.mrb[0].mxu0
    %v1363 = vadd.f32 0.0, %v1362
    %v1364 = vpop.f32.mrb[0].mxu0
    %1365 = vmatprep.mubr.f32.mxu0 0.0
    %1366 = vmatmul.mubr.f32.gmra.mrb[0].mxu0 %v1286
    %v1367 = vpop.f32.mrb[0].mxu0
    %v1368 = vadd.f32 0.0, %v1367
    %v1369 = vpop.f32.mrb[0].mxu0
    %1370 = vmatprep.mubr.f32.mxu0 0.0
    %1371 = vmatmul.mubr.f32.gmra.mrb[0].mxu0 %v1288
    %v1372 = vpop.f32.mrb[0].mxu0
    %v1373 = vadd.f32 0.0, %v1372
    %v1374 = vpop.f32.mrb[0].mxu0
    %1375 = vmatprep.mubr.f32.mxu0 0.0
    %1376 = vmatmul.mubr.f32.gmra.mrb[0].mxu0 %v1290
    %v1377 = vpop.f32.mrb[0].mxu0
    %v1378 = vadd.f32 0.0, %v1377
    %v1379 = vpop.f32.mrb[0].mxu0
    %1380 = vmatprep.mubr.f32.mxu0 0.0
    %1381 = vmatmul.mubr.f32.gmra.mrb[0].mxu0 %v1292
    %v1382 = vpop.f32.mrb[0].mxu0
    %v1383 = vadd.f32 0.0, %v1382
    %v1384 = vpop.f32.mrb[0].mxu0
    %1385 = vmatprep.mubr.f32.mxu0 0.0
    %1386 = vmatmul.mubr.f32.gmra.mrb[0].mxu0 %v1294
    %v1387 = vpop.f32.mrb[0].mxu0
    %v1388 = vadd.f32 0.0, %v1387
    %v1389 = vpop.f32.mrb[0].mxu0
    %1390 = vdwg.mxu0
    %v1391 = vrot.slane %v1128, 5
    %v1392 = vrot.slane %v1129, 5
    %v1393 = vsel %vm530, %v1391, %v1392
    %v1394 = vrot.slane %v1130, 5
    %v1395 = vsel %vm530, %v1392, %v1394
    %v1396 = vrot.slane %v1131, 5
    %v1397 = vsel %vm530, %v1394, %v1396
    %v1398 = vrot.slane %v1132, 5
    %v1399 = vsel %vm530, %v1396, %v1398
    %v1400 = vrot.slane %v1133, 5
    %v1401 = vsel %vm530, %v1398, %v1400
    %v1402 = vsel %vm530, %v1400, %v542
    %v1403 = vsel %vm1054, %v1393, 0
    %v1405 = vsel %vm1054, %v1395, 0
    %v1407 = vsel %vm1054, %v1397, 0
    %v1409 = vsel %vm1054, %v1399, 0
    %v1411 = vsel %vm1054, %v1401, 0
    %v1413 = vsel %vm1054, %v1402, 0
    %1415 = vmatprep.subr.mxu0 0.0
    %1416 = vmatpush1.msra.mxu0 %v1144
    %1417 = vmatprep.subr.mxu0 0.0
    %1418 = vmatpush1.msra.mxu0 %v1145
    %1419 = vmatprep.subr.mxu0 0.0
    %1420 = vmatpush1.msra.mxu0 0.0
    %1421 = vmatprep.subr.mxu0 0.0
    %1422 = vmatpush1.msra.mxu0 0.0
    %1423 = vmatprep.subr.mxu0 0.0
    %1424 = vmatpush1.msra.mxu0 0.0
    %1425 = vmatprep.subr.mxu0 0.0
    %1426 = vmatpush1.msra.mxu0 0.0
    %1427 = vmatprep.subr.mxu0 0.0
    %1428 = vmatpush1.msra.mxu0 0.0
    %1429 = vmatprep.subr.mxu0 0.0
    %1430 = vmatpush1.msra.mxu0 0.0
    %1431 = vmatprep.subr.mxu0 0.0
    %1432 = vmatpush1.msra.mxu0 0.0
    %1433 = vmatprep.subr.mxu0 0.0
    %1434 = vmatpush1.msra.mxu0 0.0
    %1435 = vmatprep.subr.mxu0 0.0
    %1436 = vmatpush1.msra.mxu0 0.0
    %1437 = vmatprep.subr.mxu0 0.0
    %1438 = vmatpush1.msra.mxu0 0.0
    %1439 = vmatprep.subr.mxu0 0.0
    %1440 = vmatpush1.msra.mxu0 0.0
    %1441 = vmatprep.subr.mxu0 0.0
    %1442 = vmatpush1.msra.mxu0 0.0
    %1443 = vmatprep.subr.mxu0 0.0
    %1444 = vmatpush1.msra.mxu0 0.0
    %1445 = vmatprep.subr.mxu0 0.0
    %1446 = vmatpush1.msra.mxu0 0.0
    %1447 = vmatprep.subr.mxu0 0.0
    %1448 = vmatpush1.msra.mxu0 0.0
    %1449 = vmatprep.subr.mxu0 0.0
    %1450 = vmatpush1.msra.mxu0 0.0
    %1451 = vmatprep.subr.mxu0 0.0
    %1452 = vmatpush1.msra.mxu0 0.0
    %1453 = vmatprep.subr.mxu0 0.0
    %1454 = vmatpush1.msra.mxu0 0.0
    %1455 = vmatprep.subr.mxu0 0.0
    %1456 = vmatpush1.msra.mxu0 0.0
    %1457 = vmatprep.subr.mxu0 0.0
    %1458 = vmatpush1.msra.mxu0 0.0
    %1459 = vmatprep.subr.mxu0 0.0
    %1460 = vmatpush1.msra.mxu0 0.0
    %1461 = vmatprep.subr.mxu0 0.0
    %1462 = vmatpush1.msra.mxu0 0.0
    %1463 = vmatprep.subr.mxu0 0.0
    %1464 = vmatpush1.msra.mxu0 0.0
    %1465 = vmatprep.subr.mxu0 0.0
    %1466 = vmatpush1.msra.mxu0 0.0
    %1467 = vmatprep.subr.mxu0 0.0
    %1468 = vmatpush1.msra.mxu0 0.0
    %1469 = vmatprep.subr.mxu0 0.0
    %1470 = vmatpush1.msra.mxu0 0.0
    %1471 = vmatprep.subr.mxu0 0.0
    %1472 = vmatpush1.msra.mxu0 0.0
    %1473 = vmatprep.subr.mxu0 0.0
    %1474 = vmatpush1.msra.mxu0 0.0
    %1475 = vmatprep.subr.mxu0 0.0
    %1476 = vmatpush1.msra.mxu0 0.0
    %1477 = vmatprep.subr.mxu0 0.0
    %1478 = vmatpush1.msra.mxu0 0.0
    %1479 = vmatprep.mubr.f32.mxu0 0.0
    %1480 = vmatmul.mubr.f32.gmra.mrb[0].mxu0 %v1403
    %v1481 = vpop.f32.mrb[0].mxu0
    %v1482 = vadd.f32 0.0, %v1481
    %v1483 = vpop.f32.mrb[0].mxu0
    %1484 = vmatprep.mubr.f32.mxu0 0.0
    %1485 = vmatmul.mubr.f32.gmra.mrb[0].mxu0 %v1405
    %v1486 = vpop.f32.mrb[0].mxu0
    %v1487 = vadd.f32 0.0, %v1486
    %v1488 = vpop.f32.mrb[0].mxu0
    %1489 = vmatprep.mubr.f32.mxu0 0.0
    %1490 = vmatmul.mubr.f32.gmra.mrb[0].mxu0 %v1407
    %v1491 = vpop.f32.mrb[0].mxu0
    %v1492 = vadd.f32 0.0, %v1491
    %v1493 = vpop.f32.mrb[0].mxu0
    %1494 = vmatprep.mubr.f32.mxu0 0.0
    %1495 = vmatmul.mubr.f32.gmra.mrb[0].mxu0 %v1409
    %v1496 = vpop.f32.mrb[0].mxu0
    %v1497 = vadd.f32 0.0, %v1496
    %v1498 = vpop.f32.mrb[0].mxu0
    %1499 = vmatprep.mubr.f32.mxu0 0.0
    %1500 = vmatmul.mubr.f32.gmra.mrb[0].mxu0 %v1411
    %v1501 = vpop.f32.mrb[0].mxu0
    %v1502 = vadd.f32 0.0, %v1501
    %v1503 = vpop.f32.mrb[0].mxu0
    %1504 = vmatprep.mubr.f32.mxu0 0.0
    %1505 = vmatmul.mubr.f32.gmra.mrb[0].mxu0 %v1413
    %v1506 = vpop.f32.mrb[0].mxu0
    %v1507 = vadd.f32 0.0, %v1506
    %v1508 = vpop.f32.mrb[0].mxu0
    %1509 = vdwg.mxu0
    %v1510 = vsel %vm1054, %v1128, 0
    %v1512 = vsel %vm1054, %v1129, 0
    %v1514 = vsel %vm1054, %v1130, 0
    %v1516 = vsel %vm1054, %v1131, 0
    %v1518 = vsel %vm1054, %v1132, 0
    %v1520 = vsel %vm1054, %v1133, 0
    %1522 = vmatprep.subr.mxu0 0.0
    %1523 = vmatpush1.msra.mxu0 %v1134
    %1524 = vmatprep.subr.mxu0 0.0
    %1525 = vmatpush1.msra.mxu0 %v1135
    %1526 = vmatprep.subr.mxu0 0.0
    %1527 = vmatpush1.msra.mxu0 0.0
    %1528 = vmatprep.subr.mxu0 0.0
    %1529 = vmatpush1.msra.mxu0 0.0
    %1530 = vmatprep.subr.mxu0 0.0
    %1531 = vmatpush1.msra.mxu0 0.0
    %1532 = vmatprep.subr.mxu0 0.0
    %1533 = vmatpush1.msra.mxu0 0.0
    %1534 = vmatprep.subr.mxu0 0.0
    %1535 = vmatpush1.msra.mxu0 0.0
    %1536 = vmatprep.subr.mxu0 0.0
    %1537 = vmatpush1.msra.mxu0 0.0
    %1538 = vmatprep.subr.mxu0 0.0
    %1539 = vmatpush1.msra.mxu0 0.0
    %1540 = vmatprep.subr.mxu0 0.0
    %1541 = vmatpush1.msra.mxu0 0.0
    %1542 = vmatprep.subr.mxu0 0.0
    %1543 = vmatpush1.msra.mxu0 0.0
    %1544 = vmatprep.subr.mxu0 0.0
    %1545 = vmatpush1.msra.mxu0 0.0
    %1546 = vmatprep.subr.mxu0 0.0
    %1547 = vmatpush1.msra.mxu0 0.0
    %1548 = vmatprep.subr.mxu0 0.0
    %1549 = vmatpush1.msra.mxu0 0.0
    %1550 = vmatprep.subr.mxu0 0.0
    %1551 = vmatpush1.msra.mxu0 0.0
    %1552 = vmatprep.subr.mxu0 0.0
    %1553 = vmatpush1.msra.mxu0 0.0
    %1554 = vmatprep.subr.mxu0 0.0
    %1555 = vmatpush1.msra.mxu0 0.0
    %1556 = vmatprep.subr.mxu0 0.0
    %1557 = vmatpush1.msra.mxu0 0.0
    %1558 = vmatprep.subr.mxu0 0.0
    %1559 = vmatpush1.msra.mxu0 0.0
    %1560 = vmatprep.subr.mxu0 0.0
    %1561 = vmatpush1.msra.mxu0 0.0
    %1562 = vmatprep.subr.mxu0 0.0
    %1563 = vmatpush1.msra.mxu0 0.0
    %1564 = vmatprep.subr.mxu0 0.0
    %1565 = vmatpush1.msra.mxu0 0.0
    %1566 = vmatprep.subr.mxu0 0.0
    %1567 = vmatpush1.msra.mxu0 0.0
    %1568 = vmatprep.subr.mxu0 0.0
    %1569 = vmatpush1.msra.mxu0 0.0
    %1570 = vmatprep.subr.mxu0 0.0
    %1571 = vmatpush1.msra.mxu0 0.0
    %1572 = vmatprep.subr.mxu0 0.0
    %1573 = vmatpush1.msra.mxu0 0.0
    %1574 = vmatprep.subr.mxu0 0.0
    %1575 = vmatpush1.msra.mxu0 0.0
    %1576 = vmatprep.subr.mxu0 0.0
    %1577 = vmatpush1.msra.mxu0 0.0
    %1578 = vmatprep.subr.mxu0 0.0
    %1579 = vmatpush1.msra.mxu0 0.0
    %1580 = vmatprep.subr.mxu0 0.0
    %1581 = vmatpush1.msra.mxu0 0.0
    %1582 = vmatprep.subr.mxu0 0.0
    %1583 = vmatpush1.msra.mxu0 0.0
    %1584 = vmatprep.subr.mxu0 0.0
    %1585 = vmatpush1.msra.mxu0 0.0
    %1586 = vmatprep.mubr.f32.mxu0 0.0
    %1587 = vmatmul.mubr.f32.gmra.mrb[0].mxu0 %v1510
    %v1588 = vpop.f32.mrb[0].mxu0
    %v1589 = vadd.f32 %v1244, %v1588
    %v1590 = vpop.f32.mrb[0].mxu0
    %1591 = vmatprep.mubr.f32.mxu0 0.0
    %1592 = vmatmul.mubr.f32.gmra.mrb[0].mxu0 %v1512
    %v1593 = vpop.f32.mrb[0].mxu0
    %v1594 = vadd.f32 %v1249, %v1593
    %v1595 = vpop.f32.mrb[0].mxu0
    %1596 = vmatprep.mubr.f32.mxu0 0.0
    %1597 = vmatmul.mubr.f32.gmra.mrb[0].mxu0 %v1514
    %v1598 = vpop.f32.mrb[0].mxu0
    %v1599 = vadd.f32 %v1254, %v1598
    %v1600 = vpop.f32.mrb[0].mxu0
    %1601 = vmatprep.mubr.f32.mxu0 0.0
    %1602 = vmatmul.mubr.f32.gmra.mrb[0].mxu0 %v1516
    %v1603 = vpop.f32.mrb[0].mxu0
    %v1604 = vadd.f32 %v1259, %v1603
    %v1605 = vpop.f32.mrb[0].mxu0
    %1606 = vmatprep.mubr.f32.mxu0 0.0
    %1607 = vmatmul.mubr.f32.gmra.mrb[0].mxu0 %v1518
    %v1608 = vpop.f32.mrb[0].mxu0
    %v1609 = vadd.f32 %v1264, %v1608
    %v1610 = vpop.f32.mrb[0].mxu0
    %1611 = vmatprep.mubr.f32.mxu0 0.0
    %1612 = vmatmul.mubr.f32.gmra.mrb[0].mxu0 %v1520
    %v1613 = vpop.f32.mrb[0].mxu0
    %v1614 = vadd.f32 %v1269, %v1613
    %v1615 = vpop.f32.mrb[0].mxu0
    %1616 = vdwg.mxu0
    %v1617 = vrot.slane %v1128, 2
    %v1618 = vrot.slane %v1129, 2
    %v1619 = vsel %vm764, %v1617, %v1618
    %v1620 = vrot.slane %v1130, 2
    %v1621 = vsel %vm764, %v1618, %v1620
    %v1622 = vrot.slane %v1131, 2
    %v1623 = vsel %vm764, %v1620, %v1622
    %v1624 = vrot.slane %v1132, 2
    %v1625 = vsel %vm764, %v1622, %v1624
    %v1626 = vrot.slane %v1133, 2
    %v1627 = vsel %vm764, %v1624, %v1626
    %v1628 = vsel %vm764, %v1626, %v776
    %v1629 = vsel %vm1054, %v1619, 0
    %v1631 = vsel %vm1054, %v1621, 0
    %v1633 = vsel %vm1054, %v1623, 0
    %v1635 = vsel %vm1054, %v1625, 0
    %v1637 = vsel %vm1054, %v1627, 0
    %v1639 = vsel %vm1054, %v1628, 0
    %1641 = vmatprep.subr.mxu0 0.0
    %1642 = vmatpush1.msra.mxu0 %v1138
    %1643 = vmatprep.subr.mxu0 0.0
    %1644 = vmatpush1.msra.mxu0 %v1139
    %1645 = vmatprep.subr.mxu0 0.0
    %1646 = vmatpush1.msra.mxu0 0.0
    %1647 = vmatprep.subr.mxu0 0.0
    %1648 = vmatpush1.msra.mxu0 0.0
    %1649 = vmatprep.subr.mxu0 0.0
    %1650 = vmatpush1.msra.mxu0 0.0
    %1651 = vmatprep.subr.mxu0 0.0
    %1652 = vmatpush1.msra.mxu0 0.0
    %1653 = vmatprep.subr.mxu0 0.0
    %1654 = vmatpush1.msra.mxu0 0.0
    %1655 = vmatprep.subr.mxu0 0.0
    %1656 = vmatpush1.msra.mxu0 0.0
    %1657 = vmatprep.subr.mxu0 0.0
    %1658 = vmatpush1.msra.mxu0 0.0
    %1659 = vmatprep.subr.mxu0 0.0
    %1660 = vmatpush1.msra.mxu0 0.0
    %1661 = vmatprep.subr.mxu0 0.0
    %1662 = vmatpush1.msra.mxu0 0.0
    %1663 = vmatprep.subr.mxu0 0.0
    %1664 = vmatpush1.msra.mxu0 0.0
    %1665 = vmatprep.subr.mxu0 0.0
    %1666 = vmatpush1.msra.mxu0 0.0
    %1667 = vmatprep.subr.mxu0 0.0
    %1668 = vmatpush1.msra.mxu0 0.0
    %1669 = vmatprep.subr.mxu0 0.0
    %1670 = vmatpush1.msra.mxu0 0.0
    %1671 = vmatprep.subr.mxu0 0.0
    %1672 = vmatpush1.msra.mxu0 0.0
    %1673 = vmatprep.subr.mxu0 0.0
    %1674 = vmatpush1.msra.mxu0 0.0
    %1675 = vmatprep.subr.mxu0 0.0
    %1676 = vmatpush1.msra.mxu0 0.0
    %1677 = vmatprep.subr.mxu0 0.0
    %1678 = vmatpush1.msra.mxu0 0.0
    %1679 = vmatprep.subr.mxu0 0.0
    %1680 = vmatpush1.msra.mxu0 0.0
    %1681 = vmatprep.subr.mxu0 0.0
    %1682 = vmatpush1.msra.mxu0 0.0
    %1683 = vmatprep.subr.mxu0 0.0
    %1684 = vmatpush1.msra.mxu0 0.0
    %1685 = vmatprep.subr.mxu0 0.0
    %1686 = vmatpush1.msra.mxu0 0.0
    %1687 = vmatprep.subr.mxu0 0.0
    %1688 = vmatpush1.msra.mxu0 0.0
    %1689 = vmatprep.subr.mxu0 0.0
    %1690 = vmatpush1.msra.mxu0 0.0
    %1691 = vmatprep.subr.mxu0 0.0
    %1692 = vmatpush1.msra.mxu0 0.0
    %1693 = vmatprep.subr.mxu0 0.0
    %1694 = vmatpush1.msra.mxu0 0.0
    %1695 = vmatprep.subr.mxu0 0.0
    %1696 = vmatpush1.msra.mxu0 0.0
    %1697 = vmatprep.subr.mxu0 0.0
    %1698 = vmatpush1.msra.mxu0 0.0
    %1699 = vmatprep.subr.mxu0 0.0
    %1700 = vmatpush1.msra.mxu0 0.0
    %1701 = vmatprep.subr.mxu0 0.0
    %1702 = vmatpush1.msra.mxu0 0.0
    %1703 = vmatprep.subr.mxu0 0.0
    %1704 = vmatpush1.msra.mxu0 0.0
    %1705 = vmatprep.mubr.f32.mxu0 0.0
    %1706 = vmatmul.mubr.f32.gmra.mrb[0].mxu0 %v1629
    %v1707 = vpop.f32.mrb[0].mxu0
    %v1708 = vadd.f32 %v1363, %v1707
    %v1709 = vpop.f32.mrb[0].mxu0
    %1710 = vmatprep.mubr.f32.mxu0 0.0
    %1711 = vmatmul.mubr.f32.gmra.mrb[0].mxu0 %v1631
    %v1712 = vpop.f32.mrb[0].mxu0
    %v1713 = vadd.f32 %v1368, %v1712
    %v1714 = vpop.f32.mrb[0].mxu0
    %1715 = vmatprep.mubr.f32.mxu0 0.0
    %1716 = vmatmul.mubr.f32.gmra.mrb[0].mxu0 %v1633
    %v1717 = vpop.f32.mrb[0].mxu0
    %v1718 = vadd.f32 %v1373, %v1717
    %v1719 = vpop.f32.mrb[0].mxu0
    %1720 = vmatprep.mubr.f32.mxu0 0.0
    %1721 = vmatmul.mubr.f32.gmra.mrb[0].mxu0 %v1635
    %v1722 = vpop.f32.mrb[0].mxu0
    %v1723 = vadd.f32 %v1378, %v1722
    %v1724 = vpop.f32.mrb[0].mxu0
    %1725 = vmatprep.mubr.f32.mxu0 0.0
    %1726 = vmatmul.mubr.f32.gmra.mrb[0].mxu0 %v1637
    %v1727 = vpop.f32.mrb[0].mxu0
    %v1728 = vadd.f32 %v1383, %v1727
    %v1729 = vpop.f32.mrb[0].mxu0
    %1730 = vmatprep.mubr.f32.mxu0 0.0
    %1731 = vmatmul.mubr.f32.gmra.mrb[0].mxu0 %v1639
    %v1732 = vpop.f32.mrb[0].mxu0
    %v1733 = vadd.f32 %v1388, %v1732
    %v1734 = vpop.f32.mrb[0].mxu0
    %1735 = vdwg.mxu0
    %v1736 = vrot.slane %v1128, 4
    %v1737 = vrot.slane %v1129, 4
    %v1738 = vsel %vm888, %v1736, %v1737
    %v1739 = vrot.slane %v1130, 4
    %v1740 = vsel %vm888, %v1737, %v1739
    %v1741 = vrot.slane %v1131, 4
    %v1742 = vsel %vm888, %v1739, %v1741
    %v1743 = vrot.slane %v1132, 4
    %v1744 = vsel %vm888, %v1741, %v1743
    %v1745 = vrot.slane %v1133, 4
    %v1746 = vsel %vm888, %v1743, %v1745
    %v1747 = vsel %vm888, %v1745, %v900
    %v1748 = vsel %vm1054, %v1738, 0
    %v1750 = vsel %vm1054, %v1740, 0
    %v1752 = vsel %vm1054, %v1742, 0
    %v1754 = vsel %vm1054, %v1744, 0
    %v1756 = vsel %vm1054, %v1746, 0
    %v1758 = vsel %vm1054, %v1747, 0
    %1760 = vmatprep.subr.mxu0 0.0
    %1761 = vmatpush1.msra.mxu0 %v1142
    %1762 = vmatprep.subr.mxu0 0.0
    %1763 = vmatpush1.msra.mxu0 %v1143
    %1764 = vmatprep.subr.mxu0 0.0
    %1765 = vmatpush1.msra.mxu0 0.0
    %1766 = vmatprep.subr.mxu0 0.0
    %1767 = vmatpush1.msra.mxu0 0.0
    %1768 = vmatprep.subr.mxu0 0.0
    %1769 = vmatpush1.msra.mxu0 0.0
    %1770 = vmatprep.subr.mxu0 0.0
    %1771 = vmatpush1.msra.mxu0 0.0
    %1772 = vmatprep.subr.mxu0 0.0
    %1773 = vmatpush1.msra.mxu0 0.0
    %1774 = vmatprep.subr.mxu0 0.0
    %1775 = vmatpush1.msra.mxu0 0.0
    %1776 = vmatprep.subr.mxu0 0.0
    %1777 = vmatpush1.msra.mxu0 0.0
    %1778 = vmatprep.subr.mxu0 0.0
    %1779 = vmatpush1.msra.mxu0 0.0
    %1780 = vmatprep.subr.mxu0 0.0
    %1781 = vmatpush1.msra.mxu0 0.0
    %1782 = vmatprep.subr.mxu0 0.0
    %1783 = vmatpush1.msra.mxu0 0.0
    %1784 = vmatprep.subr.mxu0 0.0
    %1785 = vmatpush1.msra.mxu0 0.0
    %1786 = vmatprep.subr.mxu0 0.0
    %1787 = vmatpush1.msra.mxu0 0.0
    %1788 = vmatprep.subr.mxu0 0.0
    %1789 = vmatpush1.msra.mxu0 0.0
    %1790 = vmatprep.subr.mxu0 0.0
    %1791 = vmatpush1.msra.mxu0 0.0
    %1792 = vmatprep.subr.mxu0 0.0
    %1793 = vmatpush1.msra.mxu0 0.0
    %1794 = vmatprep.subr.mxu0 0.0
    %1795 = vmatpush1.msra.mxu0 0.0
    %1796 = vmatprep.subr.mxu0 0.0
    %1797 = vmatpush1.msra.mxu0 0.0
    %1798 = vmatprep.subr.mxu0 0.0
    %1799 = vmatpush1.msra.mxu0 0.0
    %1800 = vmatprep.subr.mxu0 0.0
    %1801 = vmatpush1.msra.mxu0 0.0
    %1802 = vmatprep.subr.mxu0 0.0
    %1803 = vmatpush1.msra.mxu0 0.0
    %1804 = vmatprep.subr.mxu0 0.0
    %1805 = vmatpush1.msra.mxu0 0.0
    %1806 = vmatprep.subr.mxu0 0.0
    %1807 = vmatpush1.msra.mxu0 0.0
    %1808 = vmatprep.subr.mxu0 0.0
    %1809 = vmatpush1.msra.mxu0 0.0
    %1810 = vmatprep.subr.mxu0 0.0
    %1811 = vmatpush1.msra.mxu0 0.0
    %1812 = vmatprep.subr.mxu0 0.0
    %1813 = vmatpush1.msra.mxu0 0.0
    %1814 = vmatprep.subr.mxu0 0.0
    %1815 = vmatpush1.msra.mxu0 0.0
    %1816 = vmatprep.subr.mxu0 0.0
    %1817 = vmatpush1.msra.mxu0 0.0
    %1818 = vmatprep.subr.mxu0 0.0
    %1819 = vmatpush1.msra.mxu0 0.0
    %1820 = vmatprep.subr.mxu0 0.0
    %1821 = vmatpush1.msra.mxu0 0.0
    %1822 = vmatprep.subr.mxu0 0.0
    %1823 = vmatpush1.msra.mxu0 0.0
    %1824 = vmatprep.mubr.f32.mxu0 0.0
    %1825 = vmatmul.mubr.f32.gmra.mrb[0].mxu0 %v1748
    %v1826 = vpop.f32.mrb[0].mxu0
    %v1827 = vadd.f32 %v1482, %v1826
    %v1828 = vpop.f32.mrb[0].mxu0
    %1829 = vmatprep.mubr.f32.mxu0 0.0
    %1830 = vmatmul.mubr.f32.gmra.mrb[0].mxu0 %v1750
    %v1831 = vpop.f32.mrb[0].mxu0
    %v1832 = vadd.f32 %v1487, %v1831
    %v1833 = vpop.f32.mrb[0].mxu0
    %1834 = vmatprep.mubr.f32.mxu0 0.0
    %1835 = vmatmul.mubr.f32.gmra.mrb[0].mxu0 %v1752
    %v1836 = vpop.f32.mrb[0].mxu0
    %v1837 = vadd.f32 %v1492, %v1836
    %v1838 = vpop.f32.mrb[0].mxu0
    %1839 = vmatprep.mubr.f32.mxu0 0.0
    %1840 = vmatmul.mubr.f32.gmra.mrb[0].mxu0 %v1754
    %v1841 = vpop.f32.mrb[0].mxu0
    %v1842 = vadd.f32 %v1497, %v1841
    %v1843 = vpop.f32.mrb[0].mxu0
    %1844 = vmatprep.mubr.f32.mxu0 0.0
    %1845 = vmatmul.mubr.f32.gmra.mrb[0].mxu0 %v1756
    %v1846 = vpop.f32.mrb[0].mxu0
    %v1847 = vadd.f32 %v1502, %v1846
    %v1848 = vpop.f32.mrb[0].mxu0
    %1849 = vmatprep.mubr.f32.mxu0 0.0
    %1850 = vmatmul.mubr.f32.gmra.mrb[0].mxu0 %v1758
    %v1851 = vpop.f32.mrb[0].mxu0
    %v1852 = vadd.f32 %v1507, %v1851
    %v1853 = vpop.f32.mrb[0].mxu0
    %1854 = vdwg.mxu0
    %v1855 = vadd.f32 %v1589, %v1708
    %v1856 = vadd.f32 %v1594, %v1713
    %v1857 = vadd.f32 %v1599, %v1718
    %v1858 = vadd.f32 %v1604, %v1723
    %v1859 = vadd.f32 %v1609, %v1728
    %v1860 = vadd.f32 %v1614, %v1733
    %v1861 = vadd.f32 %v1855, %v1827
    %v1862 = vadd.f32 %v1856, %v1832
    %v1863 = vadd.f32 %v1857, %v1837
    %v1864 = vadd.f32 %v1858, %v1842
    %v1865 = vadd.f32 %v1859, %v1847
    %v1866 = vadd.f32 %v1860, %v1852
    %vm1867 = vcmp.lt.s32.totalorder %v46, 9
    %vm1868 = vcmp.lt.s32.totalorder %v47, 9
    %vm1869 = vcmp.lt.s32.totalorder %v48, 9
    %v1870 = vsel %vm1867, 1, 0
    %v1871 = vsel %vm1868, 1, 0
    %v1872 = vsel %vm1869, 1, 0
    %v1873 = vcvt.s32.f32 %v1870
    %v1874 = vcvt.s32.f32 %v1871
    %v1875 = vcvt.s32.f32 %v1872
    %1877 = vset.pattern.permute.xlu0 0
    %1878 = vperm.xlu0 %1877, %v1873
    %v1879 = vpop.permute.xlu0 %1878
    %1882 = vset.pattern.permute.xlu0 0
    %1883 = vperm.xlu0 %1882, %v1874
    %v1884 = vpop.permute.xlu0 %1883
    %1887 = vset.pattern.permute.xlu0 0
    %1888 = vperm.xlu0 %1887, %v1875
    %v1889 = vpop.permute.xlu0 %1888
    %v1891 = vmul.f32 %v1861, %v1879
    %v1892 = vmul.f32 %v1862, %v1884
    %v1893 = vmul.f32 %v1863, %v1889
    %v1894 = vmul.f32 %v1864, %v1879
    %v1895 = vmul.f32 %v1865, %v1884
    %v1896 = vmul.f32 %v1866, %v1889
    %vm1897 = vcmask 64512
    %v1898 = vsel %vm1897, %v1891, 0.0
    %v1899 = vsel %vm1897, %v1892, 0.0
    %v1900 = vadd.f32 %v1898, %v1899
    %v1901 = vsel %vm1897, %v1893, 0.0
    %v1902 = vadd.f32 %v1900, %v1901
    %v1903 = vsel %vm1897, %v1894, 0.0
    %v1904 = vadd.f32 %v1902, %v1903
    %v1905 = vsel %vm1897, %v1895, 0.0
    %v1906 = vadd.f32 %v1904, %v1905
    %v1907 = vsel %vm1897, %v1896, 0.0
    %v1908 = vadd.f32 %v1906, %v1907
    %v1909 = vrot.slane %v1908, 4
    %v1910 = vadd.f32 %v1908, %v1909
    %v1911 = vrot.slane %v1910, 2
    %v1912 = vadd.f32 %v1910, %v1911
    %v1913 = vrot.slane %v1912, 1
    %v1914 = vadd.f32 %v1912, %v1913
    %v1915 = vmul.f32 %v1891, %v1861
    %v1916 = vmul.f32 %v1892, %v1862
    %v1917 = vmul.f32 %v1893, %v1863
    %v1918 = vmul.f32 %v1894, %v1864
    %v1919 = vmul.f32 %v1895, %v1865
    %v1920 = vmul.f32 %v1896, %v1866
    %v1921 = vsel %vm1897, %v1915, 0.0
    %v1922 = vsel %vm1897, %v1916, 0.0
    %v1923 = vadd.f32 %v1921, %v1922
    %v1924 = vsel %vm1897, %v1917, 0.0
    %v1925 = vadd.f32 %v1923, %v1924
    %v1926 = vsel %vm1897, %v1918, 0.0
    %v1927 = vadd.f32 %v1925, %v1926
    %v1928 = vsel %vm1897, %v1919, 0.0
    %v1929 = vadd.f32 %v1927, %v1928
    %v1930 = vsel %vm1897, %v1920, 0.0
    %v1931 = vadd.f32 %v1929, %v1930
    %v1932 = vrot.slane %v1931, 4
    %v1933 = vadd.f32 %v1931, %v1932
    %v1934 = vrot.slane %v1933, 2
    %v1935 = vadd.f32 %v1933, %v1934
    %v1936 = vrot.slane %v1935, 1
    %v1937 = vadd.f32 %v1935, %v1936
    %v1938 = vmul.f32 %v1914, 0.055555556
    %v1939 = vmul.f32 %v1937, 0.055555556
    %v1940 = vmul.f32 %v1938, %v1938
    %v1941 = vsub.f32 %v1939, %v1940
    %v1942 = vmax.f32 %v1941, 0.0
    %v1943 = vadd.f32 %v1942, 1e-05
    %v1944 = vrsqrt.pop %v1943
    %v1945 = vmul.f32 %v1146, %v1944
    %v1946 = vmul.f32 %v1938, %v1945
    %v1948 = vrot.slane %v1946, 7
    %v1950 = vsub.f32 %v1146, %v1948
    %v1951 = vlaneseq
    %v1952 = vshrl.u32 %v1951, 7
    %v1953 = vsub.s32 0, %v1952
    %v1954 = vrot.slane %v1945, %v1953
    %v1955 = vmul.f32 %v1861, %v1954
    %v1956 = vmul.f32 %v1862, %v1954
    %v1957 = vmul.f32 %v1863, %v1954
    %v1958 = vmul.f32 %v1864, %v1954
    %v1959 = vmul.f32 %v1865, %v1954
    %v1960 = vmul.f32 %v1866, %v1954
    %v1961 = vlaneseq
    %v1962 = vshrl.u32 %v1961, 7
    %v1963 = vsub.s32 1, %v1962
    %v1964 = vrot.slane %v1950, %v1963
    %v1965 = vadd.f32 %v1955, %v1964
    %v1966 = vadd.f32 %v1956, %v1964
    %v1967 = vadd.f32 %v1957, %v1964
    %v1968 = vadd.f32 %v1958, %v1964
    %v1969 = vadd.f32 %v1959, %v1964
    %v1970 = vadd.f32 %v1960, %v1964
    %v1971 = vmax.f32 %v1965, 0.0
    %v1972 = vmax.f32 %v1966, 0.0
    %v1973 = vmax.f32 %v1967, 0.0
    %v1974 = vmax.f32 %v1968, 0.0
    %v1975 = vmax.f32 %v1969, 0.0
    %v1976 = vmax.f32 %v1970, 0.0
    %v1977 = vld [vmem:[%s1] sm:$0xff]
    %v1978 = vld [vmem:[%s1 + $0x8] sm:$0xff]
    %v1979 = vld [vmem:[%s1 + $0x10] sm:$0x1f]
    %vm1980 = vcmask 162816
    %v1981 = vsel %vm1980, %v57, 0
    %v1983 = vsel %vm1980, %v58, 0
    %v1985 = vsel %vm1980, %v59, 0
    %v1988 = vsel %vm1980, %v1977, 0
    %v1991 = vsel %vm1980, %v1978, 0
    %v1994 = vsel %vm1980, %v1979, 0
    %1996 = vmatprep.subr.mxu0 0.0
    %1997 = vmatpush1.xpose.msra.mxu0 %v1988
    %1998 = vmatprep.subr.mxu0 0.0
    %1999 = vmatpush1.xpose.msra.mxu0 %v1991
    %2000 = vmatprep.subr.mxu0 0.0
    %2001 = vmatpush1.xpose.msra.mxu0 %v1994
    %2002 = vmatprep.subr.mxu0 0.0
    %2003 = vmatpush1.xpose.msra.mxu0 0.0
    %2004 = vmatprep.subr.mxu0 0.0
    %2005 = vmatpush1.xpose.msra.mxu0 0.0
    %2006 = vmatprep.subr.mxu0 0.0
    %2007 = vmatpush1.xpose.msra.mxu0 0.0
    %2008 = vmatprep.subr.mxu0 0.0
    %2009 = vmatpush1.xpose.msra.mxu0 0.0
    %2010 = vmatprep.subr.mxu0 0.0
    %2011 = vmatpush1.xpose.msra.mxu0 0.0
    %2012 = vmatprep.subr.mxu0 0.0
    %2013 = vmatpush1.xpose.msra.mxu0 0.0
    %2014 = vmatprep.subr.mxu0 0.0
    %2015 = vmatpush1.xpose.msra.mxu0 0.0
    %2016 = vmatprep.subr.mxu0 0.0
    %2017 = vmatpush1.xpose.msra.mxu0 0.0
    %2018 = vmatprep.subr.mxu0 0.0
    %2019 = vmatpush1.xpose.msra.mxu0 0.0
    %2020 = vmatprep.subr.mxu0 0.0
    %2021 = vmatpush1.xpose.msra.mxu0 0.0
    %2022 = vmatprep.subr.mxu0 0.0
    %2023 = vmatpush1.xpose.msra.mxu0 0.0
    %2024 = vmatprep.subr.mxu0 0.0
    %2025 = vmatpush1.xpose.msra.mxu0 0.0
    %2026 = vmatprep.subr.mxu0 0.0
    %2027 = vmatpush1.xpose.msra.mxu0 0.0
    %2028 = vmatprep.subr.mxu0 0.0
    %2029 = vmatpush1.xpose.msra.mxu0 0.0
    %2030 = vmatprep.subr.mxu0 0.0
    %2031 = vmatpush1.xpose.msra.mxu0 0.0
    %2032 = vmatprep.subr.mxu0 0.0
    %2033 = vmatpush1.xpose.msra.mxu0 0.0
    %2034 = vmatprep.subr.mxu0 0.0
    %2035 = vmatpush1.xpose.msra.mxu0 0.0
    %2036 = vmatprep.subr.mxu0 0.0
    %2037 = vmatpush1.xpose.msra.mxu0 0.0
    %2038 = vmatprep.subr.mxu0 0.0
    %2039 = vmatpush1.xpose.msra.mxu0 0.0
    %2040 = vmatprep.subr.mxu0 0.0
    %2041 = vmatpush1.xpose.msra.mxu0 0.0
    %2042 = vmatprep.subr.mxu0 0.0
    %2043 = vmatpush1.xpose.msra.mxu0 0.0
    %2044 = vmatprep.subr.mxu0 0.0
    %2045 = vmatpush1.xpose.msra.mxu0 0.0
    %2046 = vmatprep.subr.mxu0 0.0
    %2047 = vmatpush1.xpose.msra.mxu0 0.0
    %2048 = vmatprep.subr.mxu0 0.0
    %2049 = vmatpush1.xpose.msra.mxu0 0.0
    %2050 = vmatprep.subr.mxu0 0.0
    %2051 = vmatpush1.xpose.msra.mxu0 0.0
    %2052 = vmatprep.subr.mxu0 0.0
    %2053 = vmatpush1.xpose.msra.mxu0 0.0
    %2054 = vmatprep.subr.mxu0 0.0
    %2055 = vmatpush1.xpose.msra.mxu0 0.0
    %2056 = vmatprep.subr.mxu0 0.0
    %2057 = vmatpush1.xpose.msra.mxu0 0.0
    %2058 = vmatprep.subr.mxu0 0.0
    %2059 = vmatpush1.xpose.msra.mxu0 0.0
    %2060 = vmatprep.mubr.f32.mxu0 0.0
    %2061 = vmatmul.mubr.f32.gmra.mrb[0].mxu0 %v1981
    %v2062 = vpop.f32.mrb[0].mxu0
    %v2063 = vadd.f32 0.0, %v2062
    %v2064 = vpop.f32.mrb[0].mxu0
    %2065 = vmatprep.mubr.f32.mxu0 0.0
    %2066 = vmatmul.mubr.f32.gmra.mrb[0].mxu0 %v1983
    %v2067 = vpop.f32.mrb[0].mxu0
    %v2068 = vadd.f32 0.0, %v2067
    %v2069 = vpop.f32.mrb[0].mxu0
    %2070 = vmatprep.mubr.f32.mxu0 0.0
    %2071 = vmatmul.mubr.f32.gmra.mrb[0].mxu0 %v1985
    %v2072 = vpop.f32.mrb[0].mxu0
    %v2073 = vadd.f32 0.0, %v2072
    %v2074 = vpop.f32.mrb[0].mxu0
    %2075 = vdwg.mxu0
    %s2076 = scalar_lea.vmem %s1, 24
    %v2077 = vld [vmem:[%s2076] sm:$0xff]
    %v2078 = vld [vmem:[%s2076 + $0x8] sm:$0xff]
    %v2079 = vld [vmem:[%s2076 + $0x10] sm:$0x1f]
    %v2081 = vsel %vm1980, %v2077, 0
    %v2084 = vsel %vm1980, %v2078, 0
    %v2087 = vsel %vm1980, %v2079, 0
    %2089 = vmatprep.subr.mxu0 0.0
    %2090 = vmatpush1.xpose.msra.mxu0 %v2081
    %2091 = vmatprep.subr.mxu0 0.0
    %2092 = vmatpush1.xpose.msra.mxu0 %v2084
    %2093 = vmatprep.subr.mxu0 0.0
    %2094 = vmatpush1.xpose.msra.mxu0 %v2087
    %2095 = vmatprep.subr.mxu0 0.0
    %2096 = vmatpush1.xpose.msra.mxu0 0.0
    %2097 = vmatprep.subr.mxu0 0.0
    %2098 = vmatpush1.xpose.msra.mxu0 0.0
    %2099 = vmatprep.subr.mxu0 0.0
    %2100 = vmatpush1.xpose.msra.mxu0 0.0
    %2101 = vmatprep.subr.mxu0 0.0
    %2102 = vmatpush1.xpose.msra.mxu0 0.0
    %2103 = vmatprep.subr.mxu0 0.0
    %2104 = vmatpush1.xpose.msra.mxu0 0.0
    %2105 = vmatprep.subr.mxu0 0.0
    %2106 = vmatpush1.xpose.msra.mxu0 0.0
    %2107 = vmatprep.subr.mxu0 0.0
    %2108 = vmatpush1.xpose.msra.mxu0 0.0
    %2109 = vmatprep.subr.mxu0 0.0
    %2110 = vmatpush1.xpose.msra.mxu0 0.0
    %2111 = vmatprep.subr.mxu0 0.0
    %2112 = vmatpush1.xpose.msra.mxu0 0.0
    %2113 = vmatprep.subr.mxu0 0.0
    %2114 = vmatpush1.xpose.msra.mxu0 0.0
    %2115 = vmatprep.subr.mxu0 0.0
    %2116 = vmatpush1.xpose.msra.mxu0 0.0
    %2117 = vmatprep.subr.mxu0 0.0
    %2118 = vmatpush1.xpose.msra.mxu0 0.0
    %2119 = vmatprep.subr.mxu0 0.0
    %2120 = vmatpush1.xpose.msra.mxu0 0.0
    %2121 = vmatprep.subr.mxu0 0.0
    %2122 = vmatpush1.xpose.msra.mxu0 0.0
    %2123 = vmatprep.subr.mxu0 0.0
    %2124 = vmatpush1.xpose.msra.mxu0 0.0
    %2125 = vmatprep.subr.mxu0 0.0
    %2126 = vmatpush1.xpose.msra.mxu0 0.0
    %2127 = vmatprep.subr.mxu0 0.0
    %2128 = vmatpush1.xpose.msra.mxu0 0.0
    %2129 = vmatprep.subr.mxu0 0.0
    %2130 = vmatpush1.xpose.msra.mxu0 0.0
    %2131 = vmatprep.subr.mxu0 0.0
    %2132 = vmatpush1.xpose.msra.mxu0 0.0
    %2133 = vmatprep.subr.mxu0 0.0
    %2134 = vmatpush1.xpose.msra.mxu0 0.0
    %2135 = vmatprep.subr.mxu0 0.0
    %2136 = vmatpush1.xpose.msra.mxu0 0.0
    %2137 = vmatprep.subr.mxu0 0.0
    %2138 = vmatpush1.xpose.msra.mxu0 0.0
    %2139 = vmatprep.subr.mxu0 0.0
    %2140 = vmatpush1.xpose.msra.mxu0 0.0
    %2141 = vmatprep.subr.mxu0 0.0
    %2142 = vmatpush1.xpose.msra.mxu0 0.0
    %2143 = vmatprep.subr.mxu0 0.0
    %2144 = vmatpush1.xpose.msra.mxu0 0.0
    %2145 = vmatprep.subr.mxu0 0.0
    %2146 = vmatpush1.xpose.msra.mxu0 0.0
    %2147 = vmatprep.subr.mxu0 0.0
    %2148 = vmatpush1.xpose.msra.mxu0 0.0
    %2149 = vmatprep.subr.mxu0 0.0
    %2150 = vmatpush1.xpose.msra.mxu0 0.0
    %2151 = vmatprep.subr.mxu0 0.0
    %2152 = vmatpush1.xpose.msra.mxu0 0.0
    %2153 = vmatprep.mubr.f32.mxu0 0.0
    %2154 = vmatmul.mubr.f32.gmra.mrb[0].mxu0 %v1981
    %v2155 = vpop.f32.mrb[0].mxu0
    %v2156 = vadd.f32 0.0, %v2155
    %v2157 = vpop.f32.mrb[0].mxu0
    %2158 = vmatprep.mubr.f32.mxu0 0.0
    %2159 = vmatmul.mubr.f32.gmra.mrb[0].mxu0 %v1983
    %v2160 = vpop.f32.mrb[0].mxu0
    %v2161 = vadd.f32 0.0, %v2160
    %v2162 = vpop.f32.mrb[0].mxu0
    %2163 = vmatprep.mubr.f32.mxu0 0.0
    %2164 = vmatmul.mubr.f32.gmra.mrb[0].mxu0 %v1985
    %v2165 = vpop.f32.mrb[0].mxu0
    %v2166 = vadd.f32 0.0, %v2165
    %v2167 = vpop.f32.mrb[0].mxu0
    %2168 = vdwg.mxu0
    %v2169 = vld [vmem:[%s6] sm:$0xff]
    %v2170 = vld [vmem:[%s6 + $0x8] sm:$0xff]
    %v2171 = vld [vmem:[%s6 + $0x10] sm:$0x1f]
    %v2172 = vld [vmem:[%s6 + $0x18] sm:$0xff]
    %v2173 = vld [vmem:[%s6 + $0x20] sm:$0xff]
    %v2174 = vld [vmem:[%s6 + $0x28] sm:$0x1f]
    %v2175 = vld [vmem:[%s6 + $0x30] sm:$0xff]
    %v2176 = vld [vmem:[%s6 + $0x38] sm:$0xff]
    %v2177 = vld [vmem:[%s6 + $0x40] sm:$0x1f]
    %v2178 = vld [vmem:[%s6 + $0x48] sm:$0xff]
    %v2179 = vld [vmem:[%s6 + $0x50] sm:$0xff]
    %v2180 = vld [vmem:[%s6 + $0x58] sm:$0x1f]
    %v2181 = vld [vmem:[%s6 + $0x60] sm:$0xff]
    %v2182 = vld [vmem:[%s6 + $0x68] sm:$0xff]
    %v2183 = vld [vmem:[%s6 + $0x70] sm:$0x1f]
    %v2184 = vld [vmem:[%s6 + $0x78] sm:$0xff]
    %v2185 = vld [vmem:[%s6 + $0x80] sm:$0xff]
    %v2186 = vld [vmem:[%s6 + $0x88] sm:$0x1f]
    %v2187 = vld [vmem:[%s7] sm:$0x3]
    %v2194 = vrot.slane %v2063, 1
    %v2195 = vrot.slane %v2068, 1
    %v2196 = vsel %vm281, %v2194, %v2195
    %v2197 = vrot.slane %v2073, 1
    %v2198 = vsel %vm281, %v2195, %v2197
    %v2199 = vrot.slane %v2156, 1
    %v2200 = vsel %vm281, %v2197, %v2199
    %v2201 = vrot.slane %v2161, 1
    %v2202 = vsel %vm281, %v2199, %v2201
    %v2203 = vrot.slane %v2166, 1
    %v2204 = vsel %vm281, %v2201, %v2203
    %v2205 = vsel %vm281, %v2203, %v293
    %v2206 = vsel %vm295, %v2196, 0
    %v2208 = vsel %vm295, %v2198, 0
    %v2210 = vsel %vm295, %v2200, 0
    %v2212 = vsel %vm295, %v2202, 0
    %v2214 = vsel %vm295, %v2204, 0
    %v2216 = vsel %vm295, %v2205, 0
    %v2219 = vsel %vm308, %v2174, 0
    %2221 = vmatprep.subr.mxu0 0.0
    %2222 = vmatpush1.msra.mxu0 %v2172
    %2223 = vmatprep.subr.mxu0 0.0
    %2224 = vmatpush1.msra.mxu0 %v2173
    %2225 = vmatprep.subr.mxu0 0.0
    %2226 = vmatpush1.msra.mxu0 %v2219
    %2227 = vmatprep.subr.mxu0 0.0
    %2228 = vmatpush1.msra.mxu0 0.0
    %2229 = vmatprep.subr.mxu0 0.0
    %2230 = vmatpush1.msra.mxu0 0.0
    %2231 = vmatprep.subr.mxu0 0.0
    %2232 = vmatpush1.msra.mxu0 0.0
    %2233 = vmatprep.subr.mxu0 0.0
    %2234 = vmatpush1.msra.mxu0 0.0
    %2235 = vmatprep.subr.mxu0 0.0
    %2236 = vmatpush1.msra.mxu0 0.0
    %2237 = vmatprep.subr.mxu0 0.0
    %2238 = vmatpush1.msra.mxu0 0.0
    %2239 = vmatprep.subr.mxu0 0.0
    %2240 = vmatpush1.msra.mxu0 0.0
    %2241 = vmatprep.subr.mxu0 0.0
    %2242 = vmatpush1.msra.mxu0 0.0
    %2243 = vmatprep.subr.mxu0 0.0
    %2244 = vmatpush1.msra.mxu0 0.0
    %2245 = vmatprep.subr.mxu0 0.0
    %2246 = vmatpush1.msra.mxu0 0.0
    %2247 = vmatprep.subr.mxu0 0.0
    %2248 = vmatpush1.msra.mxu0 0.0
    %2249 = vmatprep.subr.mxu0 0.0
    %2250 = vmatpush1.msra.mxu0 0.0
    %2251 = vmatprep.subr.mxu0 0.0
    %2252 = vmatpush1.msra.mxu0 0.0
    %2253 = vmatprep.subr.mxu0 0.0
    %2254 = vmatpush1.msra.mxu0 0.0
    %2255 = vmatprep.subr.mxu0 0.0
    %2256 = vmatpush1.msra.mxu0 0.0
    %2257 = vmatprep.subr.mxu0 0.0
    %2258 = vmatpush1.msra.mxu0 0.0
    %2259 = vmatprep.subr.mxu0 0.0
    %2260 = vmatpush1.msra.mxu0 0.0
    %2261 = vmatprep.subr.mxu0 0.0
    %2262 = vmatpush1.msra.mxu0 0.0
    %2263 = vmatprep.subr.mxu0 0.0
    %2264 = vmatpush1.msra.mxu0 0.0
    %2265 = vmatprep.subr.mxu0 0.0
    %2266 = vmatpush1.msra.mxu0 0.0
    %2267 = vmatprep.subr.mxu0 0.0
    %2268 = vmatpush1.msra.mxu0 0.0
    %2269 = vmatprep.subr.mxu0 0.0
    %2270 = vmatpush1.msra.mxu0 0.0
    %2271 = vmatprep.subr.mxu0 0.0
    %2272 = vmatpush1.msra.mxu0 0.0
    %2273 = vmatprep.subr.mxu0 0.0
    %2274 = vmatpush1.msra.mxu0 0.0
    %2275 = vmatprep.subr.mxu0 0.0
    %2276 = vmatpush1.msra.mxu0 0.0
    %2277 = vmatprep.subr.mxu0 0.0
    %2278 = vmatpush1.msra.mxu0 0.0
    %2279 = vmatprep.subr.mxu0 0.0
    %2280 = vmatpush1.msra.mxu0 0.0
    %2281 = vmatprep.subr.mxu0 0.0
    %2282 = vmatpush1.msra.mxu0 0.0
    %2283 = vmatprep.subr.mxu0 0.0
    %2284 = vmatpush1.msra.mxu0 0.0
    %2285 = vmatprep.mubr.f32.mxu0 0.0
    %2286 = vmatmul.mubr.f32.gmra.mrb[0].mxu0 %v2206
    %v2287 = vpop.f32.mrb[0].mxu0
    %v2288 = vadd.f32 0.0, %v2287
    %v2289 = vpop.f32.mrb[0].mxu0
    %2290 = vmatprep.mubr.f32.mxu0 0.0
    %2291 = vmatmul.mubr.f32.gmra.mrb[0].mxu0 %v2208
    %v2292 = vpop.f32.mrb[0].mxu0
    %v2293 = vadd.f32 0.0, %v2292
    %v2294 = vpop.f32.mrb[0].mxu0
    %2295 = vmatprep.mubr.f32.mxu0 0.0
    %2296 = vmatmul.mubr.f32.gmra.mrb[0].mxu0 %v2210
    %v2297 = vpop.f32.mrb[0].mxu0
    %v2298 = vadd.f32 0.0, %v2297
    %v2299 = vpop.f32.mrb[0].mxu0
    %2300 = vmatprep.mubr.f32.mxu0 0.0
    %2301 = vmatmul.mubr.f32.gmra.mrb[0].mxu0 %v2212
    %v2302 = vpop.f32.mrb[0].mxu0
    %v2303 = vadd.f32 0.0, %v2302
    %v2304 = vpop.f32.mrb[0].mxu0
    %2305 = vmatprep.mubr.f32.mxu0 0.0
    %2306 = vmatmul.mubr.f32.gmra.mrb[0].mxu0 %v2214
    %v2307 = vpop.f32.mrb[0].mxu0
    %v2308 = vadd.f32 0.0, %v2307
    %v2309 = vpop.f32.mrb[0].mxu0
    %2310 = vmatprep.mubr.f32.mxu0 0.0
    %2311 = vmatmul.mubr.f32.gmra.mrb[0].mxu0 %v2216
    %v2312 = vpop.f32.mrb[0].mxu0
    %v2313 = vadd.f32 0.0, %v2312
    %v2314 = vpop.f32.mrb[0].mxu0
    %2315 = vdwg.mxu0
    %v2316 = vrot.slane %v2063, 3
    %v2317 = vrot.slane %v2068, 3
    %v2318 = vsel %vm308, %v2316, %v2317
    %v2319 = vrot.slane %v2073, 3
    %v2320 = vsel %vm308, %v2317, %v2319
    %v2321 = vrot.slane %v2156, 3
    %v2322 = vsel %vm308, %v2319, %v2321
    %v2323 = vrot.slane %v2161, 3
    %v2324 = vsel %vm308, %v2321, %v2323
    %v2325 = vrot.slane %v2166, 3
    %v2326 = vsel %vm308, %v2323, %v2325
    %v2327 = vsel %vm308, %v2325, %v418
    %v2328 = vsel %vm295, %v2318, 0
    %v2330 = vsel %vm295, %v2320, 0
    %v2332 = vsel %vm295, %v2322, 0
    %v2334 = vsel %vm295, %v2324, 0
    %v2336 = vsel %vm295, %v2326, 0
    %v2338 = vsel %vm295, %v2327, 0
    %v2341 = vsel %vm308, %v2180, 0
    %2343 = vmatprep.subr.mxu0 0.0
    %2344 = vmatpush1.msra.mxu0 %v2178
    %2345 = vmatprep.subr.mxu0 0.0
    %2346 = vmatpush1.msra.mxu0 %v2179
    %2347 = vmatprep.subr.mxu0 0.0
    %2348 = vmatpush1.msra.mxu0 %v2341
    %2349 = vmatprep.subr.mxu0 0.0
    %2350 = vmatpush1.msra.mxu0 0.0
    %2351 = vmatprep.subr.mxu0 0.0
    %2352 = vmatpush1.msra.mxu0 0.0
    %2353 = vmatprep.subr.mxu0 0.0
    %2354 = vmatpush1.msra.mxu0 0.0
    %2355 = vmatprep.subr.mxu0 0.0
    %2356 = vmatpush1.msra.mxu0 0.0
    %2357 = vmatprep.subr.mxu0 0.0
    %2358 = vmatpush1.msra.mxu0 0.0
    %2359 = vmatprep.subr.mxu0 0.0
    %2360 = vmatpush1.msra.mxu0 0.0
    %2361 = vmatprep.subr.mxu0 0.0
    %2362 = vmatpush1.msra.mxu0 0.0
    %2363 = vmatprep.subr.mxu0 0.0
    %2364 = vmatpush1.msra.mxu0 0.0
    %2365 = vmatprep.subr.mxu0 0.0
    %2366 = vmatpush1.msra.mxu0 0.0
    %2367 = vmatprep.subr.mxu0 0.0
    %2368 = vmatpush1.msra.mxu0 0.0
    %2369 = vmatprep.subr.mxu0 0.0
    %2370 = vmatpush1.msra.mxu0 0.0
    %2371 = vmatprep.subr.mxu0 0.0
    %2372 = vmatpush1.msra.mxu0 0.0
    %2373 = vmatprep.subr.mxu0 0.0
    %2374 = vmatpush1.msra.mxu0 0.0
    %2375 = vmatprep.subr.mxu0 0.0
    %2376 = vmatpush1.msra.mxu0 0.0
    %2377 = vmatprep.subr.mxu0 0.0
    %2378 = vmatpush1.msra.mxu0 0.0
    %2379 = vmatprep.subr.mxu0 0.0
    %2380 = vmatpush1.msra.mxu0 0.0
    %2381 = vmatprep.subr.mxu0 0.0
    %2382 = vmatpush1.msra.mxu0 0.0
    %2383 = vmatprep.subr.mxu0 0.0
    %2384 = vmatpush1.msra.mxu0 0.0
    %2385 = vmatprep.subr.mxu0 0.0
    %2386 = vmatpush1.msra.mxu0 0.0
    %2387 = vmatprep.subr.mxu0 0.0
    %2388 = vmatpush1.msra.mxu0 0.0
    %2389 = vmatprep.subr.mxu0 0.0
    %2390 = vmatpush1.msra.mxu0 0.0
    %2391 = vmatprep.subr.mxu0 0.0
    %2392 = vmatpush1.msra.mxu0 0.0
    %2393 = vmatprep.subr.mxu0 0.0
    %2394 = vmatpush1.msra.mxu0 0.0
    %2395 = vmatprep.subr.mxu0 0.0
    %2396 = vmatpush1.msra.mxu0 0.0
    %2397 = vmatprep.subr.mxu0 0.0
    %2398 = vmatpush1.msra.mxu0 0.0
    %2399 = vmatprep.subr.mxu0 0.0
    %2400 = vmatpush1.msra.mxu0 0.0
    %2401 = vmatprep.subr.mxu0 0.0
    %2402 = vmatpush1.msra.mxu0 0.0
    %2403 = vmatprep.subr.mxu0 0.0
    %2404 = vmatpush1.msra.mxu0 0.0
    %2405 = vmatprep.subr.mxu0 0.0
    %2406 = vmatpush1.msra.mxu0 0.0
    %2407 = vmatprep.mubr.f32.mxu0 0.0
    %2408 = vmatmul.mubr.f32.gmra.mrb[0].mxu0 %v2328
    %v2409 = vpop.f32.mrb[0].mxu0
    %v2410 = vadd.f32 0.0, %v2409
    %v2411 = vpop.f32.mrb[0].mxu0
    %2412 = vmatprep.mubr.f32.mxu0 0.0
    %2413 = vmatmul.mubr.f32.gmra.mrb[0].mxu0 %v2330
    %v2414 = vpop.f32.mrb[0].mxu0
    %v2415 = vadd.f32 0.0, %v2414
    %v2416 = vpop.f32.mrb[0].mxu0
    %2417 = vmatprep.mubr.f32.mxu0 0.0
    %2418 = vmatmul.mubr.f32.gmra.mrb[0].mxu0 %v2332
    %v2419 = vpop.f32.mrb[0].mxu0
    %v2420 = vadd.f32 0.0, %v2419
    %v2421 = vpop.f32.mrb[0].mxu0
    %2422 = vmatprep.mubr.f32.mxu0 0.0
    %2423 = vmatmul.mubr.f32.gmra.mrb[0].mxu0 %v2334
    %v2424 = vpop.f32.mrb[0].mxu0
    %v2425 = vadd.f32 0.0, %v2424
    %v2426 = vpop.f32.mrb[0].mxu0
    %2427 = vmatprep.mubr.f32.mxu0 0.0
    %2428 = vmatmul.mubr.f32.gmra.mrb[0].mxu0 %v2336
    %v2429 = vpop.f32.mrb[0].mxu0
    %v2430 = vadd.f32 0.0, %v2429
    %v2431 = vpop.f32.mrb[0].mxu0
    %2432 = vmatprep.mubr.f32.mxu0 0.0
    %2433 = vmatmul.mubr.f32.gmra.mrb[0].mxu0 %v2338
    %v2434 = vpop.f32.mrb[0].mxu0
    %v2435 = vadd.f32 0.0, %v2434
    %v2436 = vpop.f32.mrb[0].mxu0
    %2437 = vdwg.mxu0
    %v2438 = vrot.slane %v2063, 5
    %v2439 = vrot.slane %v2068, 5
    %v2440 = vsel %vm530, %v2438, %v2439
    %v2441 = vrot.slane %v2073, 5
    %v2442 = vsel %vm530, %v2439, %v2441
    %v2443 = vrot.slane %v2156, 5
    %v2444 = vsel %vm530, %v2441, %v2443
    %v2445 = vrot.slane %v2161, 5
    %v2446 = vsel %vm530, %v2443, %v2445
    %v2447 = vrot.slane %v2166, 5
    %v2448 = vsel %vm530, %v2445, %v2447
    %v2449 = vsel %vm530, %v2447, %v542
    %v2450 = vsel %vm295, %v2440, 0
    %v2452 = vsel %vm295, %v2442, 0
    %v2454 = vsel %vm295, %v2444, 0
    %v2456 = vsel %vm295, %v2446, 0
    %v2458 = vsel %vm295, %v2448, 0
    %v2460 = vsel %vm295, %v2449, 0
    %v2463 = vsel %vm308, %v2186, 0
    %2465 = vmatprep.subr.mxu0 0.0
    %2466 = vmatpush1.msra.mxu0 %v2184
    %2467 = vmatprep.subr.mxu0 0.0
    %2468 = vmatpush1.msra.mxu0 %v2185
    %2469 = vmatprep.subr.mxu0 0.0
    %2470 = vmatpush1.msra.mxu0 %v2463
    %2471 = vmatprep.subr.mxu0 0.0
    %2472 = vmatpush1.msra.mxu0 0.0
    %2473 = vmatprep.subr.mxu0 0.0
    %2474 = vmatpush1.msra.mxu0 0.0
    %2475 = vmatprep.subr.mxu0 0.0
    %2476 = vmatpush1.msra.mxu0 0.0
    %2477 = vmatprep.subr.mxu0 0.0
    %2478 = vmatpush1.msra.mxu0 0.0
    %2479 = vmatprep.subr.mxu0 0.0
    %2480 = vmatpush1.msra.mxu0 0.0
    %2481 = vmatprep.subr.mxu0 0.0
    %2482 = vmatpush1.msra.mxu0 0.0
    %2483 = vmatprep.subr.mxu0 0.0
    %2484 = vmatpush1.msra.mxu0 0.0
    %2485 = vmatprep.subr.mxu0 0.0
    %2486 = vmatpush1.msra.mxu0 0.0
    %2487 = vmatprep.subr.mxu0 0.0
    %2488 = vmatpush1.msra.mxu0 0.0
    %2489 = vmatprep.subr.mxu0 0.0
    %2490 = vmatpush1.msra.mxu0 0.0
    %2491 = vmatprep.subr.mxu0 0.0
    %2492 = vmatpush1.msra.mxu0 0.0
    %2493 = vmatprep.subr.mxu0 0.0
    %2494 = vmatpush1.msra.mxu0 0.0
    %2495 = vmatprep.subr.mxu0 0.0
    %2496 = vmatpush1.msra.mxu0 0.0
    %2497 = vmatprep.subr.mxu0 0.0
    %2498 = vmatpush1.msra.mxu0 0.0
    %2499 = vmatprep.subr.mxu0 0.0
    %2500 = vmatpush1.msra.mxu0 0.0
    %2501 = vmatprep.subr.mxu0 0.0
    %2502 = vmatpush1.msra.mxu0 0.0
    %2503 = vmatprep.subr.mxu0 0.0
    %2504 = vmatpush1.msra.mxu0 0.0
    %2505 = vmatprep.subr.mxu0 0.0
    %2506 = vmatpush1.msra.mxu0 0.0
    %2507 = vmatprep.subr.mxu0 0.0
    %2508 = vmatpush1.msra.mxu0 0.0
    %2509 = vmatprep.subr.mxu0 0.0
    %2510 = vmatpush1.msra.mxu0 0.0
    %2511 = vmatprep.subr.mxu0 0.0
    %2512 = vmatpush1.msra.mxu0 0.0
    %2513 = vmatprep.subr.mxu0 0.0
    %2514 = vmatpush1.msra.mxu0 0.0
    %2515 = vmatprep.subr.mxu0 0.0
    %2516 = vmatpush1.msra.mxu0 0.0
    %2517 = vmatprep.subr.mxu0 0.0
    %2518 = vmatpush1.msra.mxu0 0.0
    %2519 = vmatprep.subr.mxu0 0.0
    %2520 = vmatpush1.msra.mxu0 0.0
    %2521 = vmatprep.subr.mxu0 0.0
    %2522 = vmatpush1.msra.mxu0 0.0
    %2523 = vmatprep.subr.mxu0 0.0
    %2524 = vmatpush1.msra.mxu0 0.0
    %2525 = vmatprep.subr.mxu0 0.0
    %2526 = vmatpush1.msra.mxu0 0.0
    %2527 = vmatprep.subr.mxu0 0.0
    %2528 = vmatpush1.msra.mxu0 0.0
    %2529 = vmatprep.mubr.f32.mxu0 0.0
    %2530 = vmatmul.mubr.f32.gmra.mrb[0].mxu0 %v2450
    %v2531 = vpop.f32.mrb[0].mxu0
    %v2532 = vadd.f32 0.0, %v2531
    %v2533 = vpop.f32.mrb[0].mxu0
    %2534 = vmatprep.mubr.f32.mxu0 0.0
    %2535 = vmatmul.mubr.f32.gmra.mrb[0].mxu0 %v2452
    %v2536 = vpop.f32.mrb[0].mxu0
    %v2537 = vadd.f32 0.0, %v2536
    %v2538 = vpop.f32.mrb[0].mxu0
    %2539 = vmatprep.mubr.f32.mxu0 0.0
    %2540 = vmatmul.mubr.f32.gmra.mrb[0].mxu0 %v2454
    %v2541 = vpop.f32.mrb[0].mxu0
    %v2542 = vadd.f32 0.0, %v2541
    %v2543 = vpop.f32.mrb[0].mxu0
    %2544 = vmatprep.mubr.f32.mxu0 0.0
    %2545 = vmatmul.mubr.f32.gmra.mrb[0].mxu0 %v2456
    %v2546 = vpop.f32.mrb[0].mxu0
    %v2547 = vadd.f32 0.0, %v2546
    %v2548 = vpop.f32.mrb[0].mxu0
    %2549 = vmatprep.mubr.f32.mxu0 0.0
    %2550 = vmatmul.mubr.f32.gmra.mrb[0].mxu0 %v2458
    %v2551 = vpop.f32.mrb[0].mxu0
    %v2552 = vadd.f32 0.0, %v2551
    %v2553 = vpop.f32.mrb[0].mxu0
    %2554 = vmatprep.mubr.f32.mxu0 0.0
    %2555 = vmatmul.mubr.f32.gmra.mrb[0].mxu0 %v2460
    %v2556 = vpop.f32.mrb[0].mxu0
    %v2557 = vadd.f32 0.0, %v2556
    %v2558 = vpop.f32.mrb[0].mxu0
    %2559 = vdwg.mxu0
    %v2560 = vsel %vm295, %v2063, 0
    %v2562 = vsel %vm295, %v2068, 0
    %v2564 = vsel %vm295, %v2073, 0
    %v2566 = vsel %vm295, %v2156, 0
    %v2568 = vsel %vm295, %v2161, 0
    %v2570 = vsel %vm295, %v2166, 0
    %v2573 = vsel %vm308, %v2171, 0
    %2575 = vmatprep.subr.mxu0 0.0
    %2576 = vmatpush1.msra.mxu0 %v2169
    %2577 = vmatprep.subr.mxu0 0.0
    %2578 = vmatpush1.msra.mxu0 %v2170
    %2579 = vmatprep.subr.mxu0 0.0
    %2580 = vmatpush1.msra.mxu0 %v2573
    %2581 = vmatprep.subr.mxu0 0.0
    %2582 = vmatpush1.msra.mxu0 0.0
    %2583 = vmatprep.subr.mxu0 0.0
    %2584 = vmatpush1.msra.mxu0 0.0
    %2585 = vmatprep.subr.mxu0 0.0
    %2586 = vmatpush1.msra.mxu0 0.0
    %2587 = vmatprep.subr.mxu0 0.0
    %2588 = vmatpush1.msra.mxu0 0.0
    %2589 = vmatprep.subr.mxu0 0.0
    %2590 = vmatpush1.msra.mxu0 0.0
    %2591 = vmatprep.subr.mxu0 0.0
    %2592 = vmatpush1.msra.mxu0 0.0
    %2593 = vmatprep.subr.mxu0 0.0
    %2594 = vmatpush1.msra.mxu0 0.0
    %2595 = vmatprep.subr.mxu0 0.0
    %2596 = vmatpush1.msra.mxu0 0.0
    %2597 = vmatprep.subr.mxu0 0.0
    %2598 = vmatpush1.msra.mxu0 0.0
    %2599 = vmatprep.subr.mxu0 0.0
    %2600 = vmatpush1.msra.mxu0 0.0
    %2601 = vmatprep.subr.mxu0 0.0
    %2602 = vmatpush1.msra.mxu0 0.0
    %2603 = vmatprep.subr.mxu0 0.0
    %2604 = vmatpush1.msra.mxu0 0.0
    %2605 = vmatprep.subr.mxu0 0.0
    %2606 = vmatpush1.msra.mxu0 0.0
    %2607 = vmatprep.subr.mxu0 0.0
    %2608 = vmatpush1.msra.mxu0 0.0
    %2609 = vmatprep.subr.mxu0 0.0
    %2610 = vmatpush1.msra.mxu0 0.0
    %2611 = vmatprep.subr.mxu0 0.0
    %2612 = vmatpush1.msra.mxu0 0.0
    %2613 = vmatprep.subr.mxu0 0.0
    %2614 = vmatpush1.msra.mxu0 0.0
    %2615 = vmatprep.subr.mxu0 0.0
    %2616 = vmatpush1.msra.mxu0 0.0
    %2617 = vmatprep.subr.mxu0 0.0
    %2618 = vmatpush1.msra.mxu0 0.0
    %2619 = vmatprep.subr.mxu0 0.0
    %2620 = vmatpush1.msra.mxu0 0.0
    %2621 = vmatprep.subr.mxu0 0.0
    %2622 = vmatpush1.msra.mxu0 0.0
    %2623 = vmatprep.subr.mxu0 0.0
    %2624 = vmatpush1.msra.mxu0 0.0
    %2625 = vmatprep.subr.mxu0 0.0
    %2626 = vmatpush1.msra.mxu0 0.0
    %2627 = vmatprep.subr.mxu0 0.0
    %2628 = vmatpush1.msra.mxu0 0.0
    %2629 = vmatprep.subr.mxu0 0.0
    %2630 = vmatpush1.msra.mxu0 0.0
    %2631 = vmatprep.subr.mxu0 0.0
    %2632 = vmatpush1.msra.mxu0 0.0
    %2633 = vmatprep.subr.mxu0 0.0
    %2634 = vmatpush1.msra.mxu0 0.0
    %2635 = vmatprep.subr.mxu0 0.0
    %2636 = vmatpush1.msra.mxu0 0.0
    %2637 = vmatprep.subr.mxu0 0.0
    %2638 = vmatpush1.msra.mxu0 0.0
    %2639 = vmatprep.mubr.f32.mxu0 0.0
    %2640 = vmatmul.mubr.f32.gmra.mrb[0].mxu0 %v2560
    %v2641 = vpop.f32.mrb[0].mxu0
    %v2642 = vadd.f32 %v2288, %v2641
    %v2643 = vpop.f32.mrb[0].mxu0
    %2644 = vmatprep.mubr.f32.mxu0 0.0
    %2645 = vmatmul.mubr.f32.gmra.mrb[0].mxu0 %v2562
    %v2646 = vpop.f32.mrb[0].mxu0
    %v2647 = vadd.f32 %v2293, %v2646
    %v2648 = vpop.f32.mrb[0].mxu0
    %2649 = vmatprep.mubr.f32.mxu0 0.0
    %2650 = vmatmul.mubr.f32.gmra.mrb[0].mxu0 %v2564
    %v2651 = vpop.f32.mrb[0].mxu0
    %v2652 = vadd.f32 %v2298, %v2651
    %v2653 = vpop.f32.mrb[0].mxu0
    %2654 = vmatprep.mubr.f32.mxu0 0.0
    %2655 = vmatmul.mubr.f32.gmra.mrb[0].mxu0 %v2566
    %v2656 = vpop.f32.mrb[0].mxu0
    %v2657 = vadd.f32 %v2303, %v2656
    %v2658 = vpop.f32.mrb[0].mxu0
    %2659 = vmatprep.mubr.f32.mxu0 0.0
    %2660 = vmatmul.mubr.f32.gmra.mrb[0].mxu0 %v2568
    %v2661 = vpop.f32.mrb[0].mxu0
    %v2662 = vadd.f32 %v2308, %v2661
    %v2663 = vpop.f32.mrb[0].mxu0
    %2664 = vmatprep.mubr.f32.mxu0 0.0
    %2665 = vmatmul.mubr.f32.gmra.mrb[0].mxu0 %v2570
    %v2666 = vpop.f32.mrb[0].mxu0
    %v2667 = vadd.f32 %v2313, %v2666
    %v2668 = vpop.f32.mrb[0].mxu0
    %2669 = vdwg.mxu0
    %v2670 = vrot.slane %v2063, 2
    %v2671 = vrot.slane %v2068, 2
    %v2672 = vsel %vm764, %v2670, %v2671
    %v2673 = vrot.slane %v2073, 2
    %v2674 = vsel %vm764, %v2671, %v2673
    %v2675 = vrot.slane %v2156, 2
    %v2676 = vsel %vm764, %v2673, %v2675
    %v2677 = vrot.slane %v2161, 2
    %v2678 = vsel %vm764, %v2675, %v2677
    %v2679 = vrot.slane %v2166, 2
    %v2680 = vsel %vm764, %v2677, %v2679
    %v2681 = vsel %vm764, %v2679, %v776
    %v2682 = vsel %vm295, %v2672, 0
    %v2684 = vsel %vm295, %v2674, 0
    %v2686 = vsel %vm295, %v2676, 0
    %v2688 = vsel %vm295, %v2678, 0
    %v2690 = vsel %vm295, %v2680, 0
    %v2692 = vsel %vm295, %v2681, 0
    %v2695 = vsel %vm308, %v2177, 0
    %2697 = vmatprep.subr.mxu0 0.0
    %2698 = vmatpush1.msra.mxu0 %v2175
    %2699 = vmatprep.subr.mxu0 0.0
    %2700 = vmatpush1.msra.mxu0 %v2176
    %2701 = vmatprep.subr.mxu0 0.0
    %2702 = vmatpush1.msra.mxu0 %v2695
    %2703 = vmatprep.subr.mxu0 0.0
    %2704 = vmatpush1.msra.mxu0 0.0
    %2705 = vmatprep.subr.mxu0 0.0
    %2706 = vmatpush1.msra.mxu0 0.0
    %2707 = vmatprep.subr.mxu0 0.0
    %2708 = vmatpush1.msra.mxu0 0.0
    %2709 = vmatprep.subr.mxu0 0.0
    %2710 = vmatpush1.msra.mxu0 0.0
    %2711 = vmatprep.subr.mxu0 0.0
    %2712 = vmatpush1.msra.mxu0 0.0
    %2713 = vmatprep.subr.mxu0 0.0
    %2714 = vmatpush1.msra.mxu0 0.0
    %2715 = vmatprep.subr.mxu0 0.0
    %2716 = vmatpush1.msra.mxu0 0.0
    %2717 = vmatprep.subr.mxu0 0.0
    %2718 = vmatpush1.msra.mxu0 0.0
    %2719 = vmatprep.subr.mxu0 0.0
    %2720 = vmatpush1.msra.mxu0 0.0
    %2721 = vmatprep.subr.mxu0 0.0
    %2722 = vmatpush1.msra.mxu0 0.0
    %2723 = vmatprep.subr.mxu0 0.0
    %2724 = vmatpush1.msra.mxu0 0.0
    %2725 = vmatprep.subr.mxu0 0.0
    %2726 = vmatpush1.msra.mxu0 0.0
    %2727 = vmatprep.subr.mxu0 0.0
    %2728 = vmatpush1.msra.mxu0 0.0
    %2729 = vmatprep.subr.mxu0 0.0
    %2730 = vmatpush1.msra.mxu0 0.0
    %2731 = vmatprep.subr.mxu0 0.0
    %2732 = vmatpush1.msra.mxu0 0.0
    %2733 = vmatprep.subr.mxu0 0.0
    %2734 = vmatpush1.msra.mxu0 0.0
    %2735 = vmatprep.subr.mxu0 0.0
    %2736 = vmatpush1.msra.mxu0 0.0
    %2737 = vmatprep.subr.mxu0 0.0
    %2738 = vmatpush1.msra.mxu0 0.0
    %2739 = vmatprep.subr.mxu0 0.0
    %2740 = vmatpush1.msra.mxu0 0.0
    %2741 = vmatprep.subr.mxu0 0.0
    %2742 = vmatpush1.msra.mxu0 0.0
    %2743 = vmatprep.subr.mxu0 0.0
    %2744 = vmatpush1.msra.mxu0 0.0
    %2745 = vmatprep.subr.mxu0 0.0
    %2746 = vmatpush1.msra.mxu0 0.0
    %2747 = vmatprep.subr.mxu0 0.0
    %2748 = vmatpush1.msra.mxu0 0.0
    %2749 = vmatprep.subr.mxu0 0.0
    %2750 = vmatpush1.msra.mxu0 0.0
    %2751 = vmatprep.subr.mxu0 0.0
    %2752 = vmatpush1.msra.mxu0 0.0
    %2753 = vmatprep.subr.mxu0 0.0
    %2754 = vmatpush1.msra.mxu0 0.0
    %2755 = vmatprep.subr.mxu0 0.0
    %2756 = vmatpush1.msra.mxu0 0.0
    %2757 = vmatprep.subr.mxu0 0.0
    %2758 = vmatpush1.msra.mxu0 0.0
    %2759 = vmatprep.subr.mxu0 0.0
    %2760 = vmatpush1.msra.mxu0 0.0
    %2761 = vmatprep.mubr.f32.mxu0 0.0
    %2762 = vmatmul.mubr.f32.gmra.mrb[0].mxu0 %v2682
    %v2763 = vpop.f32.mrb[0].mxu0
    %v2764 = vadd.f32 %v2410, %v2763
    %v2765 = vpop.f32.mrb[0].mxu0
    %2766 = vmatprep.mubr.f32.mxu0 0.0
    %2767 = vmatmul.mubr.f32.gmra.mrb[0].mxu0 %v2684
    %v2768 = vpop.f32.mrb[0].mxu0
    %v2769 = vadd.f32 %v2415, %v2768
    %v2770 = vpop.f32.mrb[0].mxu0
    %2771 = vmatprep.mubr.f32.mxu0 0.0
    %2772 = vmatmul.mubr.f32.gmra.mrb[0].mxu0 %v2686
    %v2773 = vpop.f32.mrb[0].mxu0
    %v2774 = vadd.f32 %v2420, %v2773
    %v2775 = vpop.f32.mrb[0].mxu0
    %2776 = vmatprep.mubr.f32.mxu0 0.0
    %2777 = vmatmul.mubr.f32.gmra.mrb[0].mxu0 %v2688
    %v2778 = vpop.f32.mrb[0].mxu0
    %v2779 = vadd.f32 %v2425, %v2778
    %v2780 = vpop.f32.mrb[0].mxu0
    %2781 = vmatprep.mubr.f32.mxu0 0.0
    %2782 = vmatmul.mubr.f32.gmra.mrb[0].mxu0 %v2690
    %v2783 = vpop.f32.mrb[0].mxu0
    %v2784 = vadd.f32 %v2430, %v2783
    %v2785 = vpop.f32.mrb[0].mxu0
    %2786 = vmatprep.mubr.f32.mxu0 0.0
    %2787 = vmatmul.mubr.f32.gmra.mrb[0].mxu0 %v2692
    %v2788 = vpop.f32.mrb[0].mxu0
    %v2789 = vadd.f32 %v2435, %v2788
    %v2790 = vpop.f32.mrb[0].mxu0
    %2791 = vdwg.mxu0
    %v2792 = vrot.slane %v2063, 4
    %v2793 = vrot.slane %v2068, 4
    %v2794 = vsel %vm888, %v2792, %v2793
    %v2795 = vrot.slane %v2073, 4
    %v2796 = vsel %vm888, %v2793, %v2795
    %v2797 = vrot.slane %v2156, 4
    %v2798 = vsel %vm888, %v2795, %v2797
    %v2799 = vrot.slane %v2161, 4
    %v2800 = vsel %vm888, %v2797, %v2799
    %v2801 = vrot.slane %v2166, 4
    %v2802 = vsel %vm888, %v2799, %v2801
    %v2803 = vsel %vm888, %v2801, %v900
    %v2804 = vsel %vm295, %v2794, 0
    %v2806 = vsel %vm295, %v2796, 0
    %v2808 = vsel %vm295, %v2798, 0
    %v2810 = vsel %vm295, %v2800, 0
    %v2812 = vsel %vm295, %v2802, 0
    %v2814 = vsel %vm295, %v2803, 0
    %v2817 = vsel %vm308, %v2183, 0
    %2819 = vmatprep.subr.mxu0 0.0
    %2820 = vmatpush1.msra.mxu0 %v2181
    %2821 = vmatprep.subr.mxu0 0.0
    %2822 = vmatpush1.msra.mxu0 %v2182
    %2823 = vmatprep.subr.mxu0 0.0
    %2824 = vmatpush1.msra.mxu0 %v2817
    %2825 = vmatprep.subr.mxu0 0.0
    %2826 = vmatpush1.msra.mxu0 0.0
    %2827 = vmatprep.subr.mxu0 0.0
    %2828 = vmatpush1.msra.mxu0 0.0
    %2829 = vmatprep.subr.mxu0 0.0
    %2830 = vmatpush1.msra.mxu0 0.0
    %2831 = vmatprep.subr.mxu0 0.0
    %2832 = vmatpush1.msra.mxu0 0.0
    %2833 = vmatprep.subr.mxu0 0.0
    %2834 = vmatpush1.msra.mxu0 0.0
    %2835 = vmatprep.subr.mxu0 0.0
    %2836 = vmatpush1.msra.mxu0 0.0
    %2837 = vmatprep.subr.mxu0 0.0
    %2838 = vmatpush1.msra.mxu0 0.0
    %2839 = vmatprep.subr.mxu0 0.0
    %2840 = vmatpush1.msra.mxu0 0.0
    %2841 = vmatprep.subr.mxu0 0.0
    %2842 = vmatpush1.msra.mxu0 0.0
    %2843 = vmatprep.subr.mxu0 0.0
    %2844 = vmatpush1.msra.mxu0 0.0
    %2845 = vmatprep.subr.mxu0 0.0
    %2846 = vmatpush1.msra.mxu0 0.0
    %2847 = vmatprep.subr.mxu0 0.0
    %2848 = vmatpush1.msra.mxu0 0.0
    %2849 = vmatprep.subr.mxu0 0.0
    %2850 = vmatpush1.msra.mxu0 0.0
    %2851 = vmatprep.subr.mxu0 0.0
    %2852 = vmatpush1.msra.mxu0 0.0
    %2853 = vmatprep.subr.mxu0 0.0
    %2854 = vmatpush1.msra.mxu0 0.0
    %2855 = vmatprep.subr.mxu0 0.0
    %2856 = vmatpush1.msra.mxu0 0.0
    %2857 = vmatprep.subr.mxu0 0.0
    %2858 = vmatpush1.msra.mxu0 0.0
    %2859 = vmatprep.subr.mxu0 0.0
    %2860 = vmatpush1.msra.mxu0 0.0
    %2861 = vmatprep.subr.mxu0 0.0
    %2862 = vmatpush1.msra.mxu0 0.0
    %2863 = vmatprep.subr.mxu0 0.0
    %2864 = vmatpush1.msra.mxu0 0.0
    %2865 = vmatprep.subr.mxu0 0.0
    %2866 = vmatpush1.msra.mxu0 0.0
    %2867 = vmatprep.subr.mxu0 0.0
    %2868 = vmatpush1.msra.mxu0 0.0
    %2869 = vmatprep.subr.mxu0 0.0
    %2870 = vmatpush1.msra.mxu0 0.0
    %2871 = vmatprep.subr.mxu0 0.0
    %2872 = vmatpush1.msra.mxu0 0.0
    %2873 = vmatprep.subr.mxu0 0.0
    %2874 = vmatpush1.msra.mxu0 0.0
    %2875 = vmatprep.subr.mxu0 0.0
    %2876 = vmatpush1.msra.mxu0 0.0
    %2877 = vmatprep.subr.mxu0 0.0
    %2878 = vmatpush1.msra.mxu0 0.0
    %2879 = vmatprep.subr.mxu0 0.0
    %2880 = vmatpush1.msra.mxu0 0.0
    %2881 = vmatprep.subr.mxu0 0.0
    %2882 = vmatpush1.msra.mxu0 0.0
    %2883 = vmatprep.mubr.f32.mxu0 0.0
    %2884 = vmatmul.mubr.f32.gmra.mrb[0].mxu0 %v2804
    %v2885 = vpop.f32.mrb[0].mxu0
    %v2886 = vadd.f32 %v2532, %v2885
    %v2887 = vpop.f32.mrb[0].mxu0
    %2888 = vmatprep.mubr.f32.mxu0 0.0
    %2889 = vmatmul.mubr.f32.gmra.mrb[0].mxu0 %v2806
    %v2890 = vpop.f32.mrb[0].mxu0
    %v2891 = vadd.f32 %v2537, %v2890
    %v2892 = vpop.f32.mrb[0].mxu0
    %2893 = vmatprep.mubr.f32.mxu0 0.0
    %2894 = vmatmul.mubr.f32.gmra.mrb[0].mxu0 %v2808
    %v2895 = vpop.f32.mrb[0].mxu0
    %v2896 = vadd.f32 %v2542, %v2895
    %v2897 = vpop.f32.mrb[0].mxu0
    %2898 = vmatprep.mubr.f32.mxu0 0.0
    %2899 = vmatmul.mubr.f32.gmra.mrb[0].mxu0 %v2810
    %v2900 = vpop.f32.mrb[0].mxu0
    %v2901 = vadd.f32 %v2547, %v2900
    %v2902 = vpop.f32.mrb[0].mxu0
    %2903 = vmatprep.mubr.f32.mxu0 0.0
    %2904 = vmatmul.mubr.f32.gmra.mrb[0].mxu0 %v2812
    %v2905 = vpop.f32.mrb[0].mxu0
    %v2906 = vadd.f32 %v2552, %v2905
    %v2907 = vpop.f32.mrb[0].mxu0
    %2908 = vmatprep.mubr.f32.mxu0 0.0
    %2909 = vmatmul.mubr.f32.gmra.mrb[0].mxu0 %v2814
    %v2910 = vpop.f32.mrb[0].mxu0
    %v2911 = vadd.f32 %v2557, %v2910
    %v2912 = vpop.f32.mrb[0].mxu0
    %2913 = vdwg.mxu0
    %v2914 = vadd.f32 %v2642, %v2764
    %v2915 = vadd.f32 %v2647, %v2769
    %v2916 = vadd.f32 %v2652, %v2774
    %v2917 = vadd.f32 %v2657, %v2779
    %v2918 = vadd.f32 %v2662, %v2784
    %v2919 = vadd.f32 %v2667, %v2789
    %v2920 = vadd.f32 %v2914, %v2886
    %v2921 = vadd.f32 %v2915, %v2891
    %v2922 = vadd.f32 %v2916, %v2896
    %v2923 = vadd.f32 %v2917, %v2901
    %v2924 = vadd.f32 %v2918, %v2906
    %v2925 = vadd.f32 %v2919, %v2911
    %vm2926 = vcmp.lt.s32.totalorder %v46, 15
    %vm2927 = vcmp.lt.s32.totalorder %v47, 15
    %vm2928 = vcmp.lt.s32.totalorder %v48, 15
    %v2929 = vsel %vm2926, 1, 0
    %v2930 = vsel %vm2927, 1, 0
    %v2931 = vsel %vm2928, 1, 0
    %v2932 = vcvt.s32.f32 %v2929
    %v2933 = vcvt.s32.f32 %v2930
    %v2934 = vcvt.s32.f32 %v2931
    %2936 = vset.pattern.permute.xlu0 0
    %2937 = vperm.xlu0 %2936, %v2932
    %v2938 = vpop.permute.xlu0 %2937
    %2941 = vset.pattern.permute.xlu0 0
    %2942 = vperm.xlu0 %2941, %v2933
    %v2943 = vpop.permute.xlu0 %2942
    %2946 = vset.pattern.permute.xlu0 0
    %2947 = vperm.xlu0 %2946, %v2934
    %v2948 = vpop.permute.xlu0 %2947
    %v2950 = vmul.f32 %v2920, %v2938
    %v2951 = vmul.f32 %v2921, %v2943
    %v2952 = vmul.f32 %v2922, %v2948
    %v2953 = vmul.f32 %v2923, %v2938
    %v2954 = vmul.f32 %v2924, %v2943
    %v2955 = vmul.f32 %v2925, %v2948
    %v2956 = vsel %vm1054, %v2950, 0.0
    %v2957 = vsel %vm1054, %v2951, 0.0
    %v2958 = vadd.f32 %v2956, %v2957
    %v2959 = vsel %vm1054, %v2952, 0.0
    %v2960 = vadd.f32 %v2958, %v2959
    %v2961 = vsel %vm1054, %v2953, 0.0
    %v2962 = vadd.f32 %v2960, %v2961
    %v2963 = vsel %vm1054, %v2954, 0.0
    %v2964 = vadd.f32 %v2962, %v2963
    %v2965 = vsel %vm1054, %v2955, 0.0
    %v2966 = vadd.f32 %v2964, %v2965
    %v2967 = vrot.slane %v2966, 4
    %v2968 = vadd.f32 %v2966, %v2967
    %v2969 = vrot.slane %v2968, 2
    %v2970 = vadd.f32 %v2968, %v2969
    %v2971 = vrot.slane %v2970, 1
    %v2972 = vadd.f32 %v2970, %v2971
    %v2973 = vmul.f32 %v2950, %v2920
    %v2974 = vmul.f32 %v2951, %v2921
    %v2975 = vmul.f32 %v2952, %v2922
    %v2976 = vmul.f32 %v2953, %v2923
    %v2977 = vmul.f32 %v2954, %v2924
    %v2978 = vmul.f32 %v2955, %v2925
    %v2979 = vsel %vm1054, %v2973, 0.0
    %v2980 = vsel %vm1054, %v2974, 0.0
    %v2981 = vadd.f32 %v2979, %v2980
    %v2982 = vsel %vm1054, %v2975, 0.0
    %v2983 = vadd.f32 %v2981, %v2982
    %v2984 = vsel %vm1054, %v2976, 0.0
    %v2985 = vadd.f32 %v2983, %v2984
    %v2986 = vsel %vm1054, %v2977, 0.0
    %v2987 = vadd.f32 %v2985, %v2986
    %v2988 = vsel %vm1054, %v2978, 0.0
    %v2989 = vadd.f32 %v2987, %v2988
    %v2990 = vrot.slane %v2989, 4
    %v2991 = vadd.f32 %v2989, %v2990
    %v2992 = vrot.slane %v2991, 2
    %v2993 = vadd.f32 %v2991, %v2992
    %v2994 = vrot.slane %v2993, 1
    %v2995 = vadd.f32 %v2993, %v2994
    %v2996 = vmul.f32 %v2972, 0.033333335
    %v2997 = vmul.f32 %v2995, 0.033333335
    %v2998 = vmul.f32 %v2996, %v2996
    %v2999 = vsub.f32 %v2997, %v2998
    %v3000 = vmax.f32 %v2999, 0.0
    %v3001 = vadd.f32 %v3000, 1e-05
    %v3002 = vrsqrt.pop %v3001
    %v3003 = vmul.f32 %v2187, %v3002
    %v3004 = vmul.f32 %v2996, %v3003
    %v3006 = vrot.slane %v3004, 7
    %v3008 = vsub.f32 %v2187, %v3006
    %v3009 = vlaneseq
    %v3010 = vshrl.u32 %v3009, 7
    %v3011 = vsub.s32 0, %v3010
    %v3012 = vrot.slane %v3003, %v3011
    %v3013 = vmul.f32 %v2920, %v3012
    %v3014 = vmul.f32 %v2921, %v3012
    %v3015 = vmul.f32 %v2922, %v3012
    %v3016 = vmul.f32 %v2923, %v3012
    %v3017 = vmul.f32 %v2924, %v3012
    %v3018 = vmul.f32 %v2925, %v3012
    %v3019 = vlaneseq
    %v3020 = vshrl.u32 %v3019, 7
    %v3021 = vsub.s32 1, %v3020
    %v3022 = vrot.slane %v3008, %v3021
    %v3023 = vadd.f32 %v3013, %v3022
    %v3024 = vadd.f32 %v3014, %v3022
    %v3025 = vadd.f32 %v3015, %v3022
    %v3026 = vadd.f32 %v3016, %v3022
    %v3027 = vadd.f32 %v3017, %v3022
    %v3028 = vadd.f32 %v3018, %v3022
    %v3029 = vmax.f32 %v3023, 0.0
    %v3030 = vmax.f32 %v3024, 0.0
    %v3031 = vmax.f32 %v3025, 0.0
    %v3032 = vmax.f32 %v3026, 0.0
    %v3033 = vmax.f32 %v3027, 0.0
    %v3034 = vmax.f32 %v3028, 0.0
    %v3035 = vld [vmem:[%s8] sm:$0xff]
    %v3036 = vld [vmem:[%s8 + $0x8] sm:$0xff]
    %v3037 = vld [vmem:[%s8 + $0x10] sm:$0xff]
    %v3038 = vld [vmem:[%s8 + $0x18] sm:$0xff]
    %v3039 = vld [vmem:[%s8 + $0x20] sm:$0xff]
    %v3040 = vld [vmem:[%s8 + $0x28] sm:$0xff]
    %v3041 = vld [vmem:[%s8 + $0x30] sm:$0xff]
    %v3042 = vld [vmem:[%s8 + $0x38] sm:$0xff]
    %v3043 = vld [vmem:[%s8 + $0x40] sm:$0xff]
    %v3044 = vld [vmem:[%s8 + $0x48] sm:$0xff]
    %v3045 = vld [vmem:[%s8 + $0x50] sm:$0xff]
    %v3046 = vld [vmem:[%s8 + $0x58] sm:$0xff]
    %v3047 = vld [vmem:[%s9] sm:$0x3]
    %v3054 = vrot.slane %v3029, 1
    %v3055 = vrot.slane %v3030, 1
    %v3056 = vsel %vm281, %v3054, %v3055
    %v3057 = vrot.slane %v3031, 1
    %v3058 = vsel %vm281, %v3055, %v3057
    %v3059 = vrot.slane %v3032, 1
    %v3060 = vsel %vm281, %v3057, %v3059
    %v3061 = vrot.slane %v3033, 1
    %v3062 = vsel %vm281, %v3059, %v3061
    %v3063 = vrot.slane %v3034, 1
    %v3064 = vsel %vm281, %v3061, %v3063
    %v3065 = vsel %vm281, %v3063, %v293
    %v3066 = vsel %vm1054, %v3056, 0
    %v3068 = vsel %vm1054, %v3058, 0
    %v3070 = vsel %vm1054, %v3060, 0
    %v3072 = vsel %vm1054, %v3062, 0
    %v3074 = vsel %vm1054, %v3064, 0
    %v3076 = vsel %vm1054, %v3065, 0
    %3078 = vmatprep.subr.mxu0 0.0
    %3079 = vmatpush1.msra.mxu0 %v3037
    %3080 = vmatprep.subr.mxu0 0.0
    %3081 = vmatpush1.msra.mxu0 %v3038
    %3082 = vmatprep.subr.mxu0 0.0
    %3083 = vmatpush1.msra.mxu0 0.0
    %3084 = vmatprep.subr.mxu0 0.0
    %3085 = vmatpush1.msra.mxu0 0.0
    %3086 = vmatprep.subr.mxu0 0.0
    %3087 = vmatpush1.msra.mxu0 0.0
    %3088 = vmatprep.subr.mxu0 0.0
    %3089 = vmatpush1.msra.mxu0 0.0
    %3090 = vmatprep.subr.mxu0 0.0
    %3091 = vmatpush1.msra.mxu0 0.0
    %3092 = vmatprep.subr.mxu0 0.0
    %3093 = vmatpush1.msra.mxu0 0.0
    %3094 = vmatprep.subr.mxu0 0.0
    %3095 = vmatpush1.msra.mxu0 0.0
    %3096 = vmatprep.subr.mxu0 0.0
    %3097 = vmatpush1.msra.mxu0 0.0
    %3098 = vmatprep.subr.mxu0 0.0
    %3099 = vmatpush1.msra.mxu0 0.0
    %3100 = vmatprep.subr.mxu0 0.0
    %3101 = vmatpush1.msra.mxu0 0.0
    %3102 = vmatprep.subr.mxu0 0.0
    %3103 = vmatpush1.msra.mxu0 0.0
    %3104 = vmatprep.subr.mxu0 0.0
    %3105 = vmatpush1.msra.mxu0 0.0
    %3106 = vmatprep.subr.mxu0 0.0
    %3107 = vmatpush1.msra.mxu0 0.0
    %3108 = vmatprep.subr.mxu0 0.0
    %3109 = vmatpush1.msra.mxu0 0.0
    %3110 = vmatprep.subr.mxu0 0.0
    %3111 = vmatpush1.msra.mxu0 0.0
    %3112 = vmatprep.subr.mxu0 0.0
    %3113 = vmatpush1.msra.mxu0 0.0
    %3114 = vmatprep.subr.mxu0 0.0
    %3115 = vmatpush1.msra.mxu0 0.0
    %3116 = vmatprep.subr.mxu0 0.0
    %3117 = vmatpush1.msra.mxu0 0.0
    %3118 = vmatprep.subr.mxu0 0.0
    %3119 = vmatpush1.msra.mxu0 0.0
    %3120 = vmatprep.subr.mxu0 0.0
    %3121 = vmatpush1.msra.mxu0 0.0
    %3122 = vmatprep.subr.mxu0 0.0
    %3123 = vmatpush1.msra.mxu0 0.0
    %3124 = vmatprep.subr.mxu0 0.0
    %3125 = vmatpush1.msra.mxu0 0.0
    %3126 = vmatprep.subr.mxu0 0.0
    %3127 = vmatpush1.msra.mxu0 0.0
    %3128 = vmatprep.subr.mxu0 0.0
    %3129 = vmatpush1.msra.mxu0 0.0
    %3130 = vmatprep.subr.mxu0 0.0
    %3131 = vmatpush1.msra.mxu0 0.0
    %3132 = vmatprep.subr.mxu0 0.0
    %3133 = vmatpush1.msra.mxu0 0.0
    %3134 = vmatprep.subr.mxu0 0.0
    %3135 = vmatpush1.msra.mxu0 0.0
    %3136 = vmatprep.subr.mxu0 0.0
    %3137 = vmatpush1.msra.mxu0 0.0
    %3138 = vmatprep.subr.mxu0 0.0
    %3139 = vmatpush1.msra.mxu0 0.0
    %3140 = vmatprep.subr.mxu0 0.0
    %3141 = vmatpush1.msra.mxu0 0.0
    %3142 = vmatprep.mubr.f32.mxu0 0.0
    %3143 = vmatmul.mubr.f32.gmra.mrb[0].mxu0 %v3066
    %v3144 = vpop.f32.mrb[0].mxu0
    %v3145 = vadd.f32 0.0, %v3144
    %v3146 = vpop.f32.mrb[0].mxu0
    %3147 = vmatprep.mubr.f32.mxu0 0.0
    %3148 = vmatmul.mubr.f32.gmra.mrb[0].mxu0 %v3068
    %v3149 = vpop.f32.mrb[0].mxu0
    %v3150 = vadd.f32 0.0, %v3149
    %v3151 = vpop.f32.mrb[0].mxu0
    %3152 = vmatprep.mubr.f32.mxu0 0.0
    %3153 = vmatmul.mubr.f32.gmra.mrb[0].mxu0 %v3070
    %v3154 = vpop.f32.mrb[0].mxu0
    %v3155 = vadd.f32 0.0, %v3154
    %v3156 = vpop.f32.mrb[0].mxu0
    %3157 = vmatprep.mubr.f32.mxu0 0.0
    %3158 = vmatmul.mubr.f32.gmra.mrb[0].mxu0 %v3072
    %v3159 = vpop.f32.mrb[0].mxu0
    %v3160 = vadd.f32 0.0, %v3159
    %v3161 = vpop.f32.mrb[0].mxu0
    %3162 = vmatprep.mubr.f32.mxu0 0.0
    %3163 = vmatmul.mubr.f32.gmra.mrb[0].mxu0 %v3074
    %v3164 = vpop.f32.mrb[0].mxu0
    %v3165 = vadd.f32 0.0, %v3164
    %v3166 = vpop.f32.mrb[0].mxu0
    %3167 = vmatprep.mubr.f32.mxu0 0.0
    %3168 = vmatmul.mubr.f32.gmra.mrb[0].mxu0 %v3076
    %v3169 = vpop.f32.mrb[0].mxu0
    %v3170 = vadd.f32 0.0, %v3169
    %v3171 = vpop.f32.mrb[0].mxu0
    %3172 = vdwg.mxu0
    %v3173 = vrot.slane %v3029, 3
    %v3174 = vrot.slane %v3030, 3
    %v3175 = vsel %vm308, %v3173, %v3174
    %v3176 = vrot.slane %v3031, 3
    %v3177 = vsel %vm308, %v3174, %v3176
    %v3178 = vrot.slane %v3032, 3
    %v3179 = vsel %vm308, %v3176, %v3178
    %v3180 = vrot.slane %v3033, 3
    %v3181 = vsel %vm308, %v3178, %v3180
    %v3182 = vrot.slane %v3034, 3
    %v3183 = vsel %vm308, %v3180, %v3182
    %v3184 = vsel %vm308, %v3182, %v418
    %v3185 = vsel %vm1054, %v3175, 0
    %v3187 = vsel %vm1054, %v3177, 0
    %v3189 = vsel %vm1054, %v3179, 0
    %v3191 = vsel %vm1054, %v3181, 0
    %v3193 = vsel %vm1054, %v3183, 0
    %v3195 = vsel %vm1054, %v3184, 0
    %3197 = vmatprep.subr.mxu0 0.0
    %3198 = vmatpush1.msra.mxu0 %v3041
    %3199 = vmatprep.subr.mxu0 0.0
    %3200 = vmatpush1.msra.mxu0 %v3042
    %3201 = vmatprep.subr.mxu0 0.0
    %3202 = vmatpush1.msra.mxu0 0.0
    %3203 = vmatprep.subr.mxu0 0.0
    %3204 = vmatpush1.msra.mxu0 0.0
    %3205 = vmatprep.subr.mxu0 0.0
    %3206 = vmatpush1.msra.mxu0 0.0
    %3207 = vmatprep.subr.mxu0 0.0
    %3208 = vmatpush1.msra.mxu0 0.0
    %3209 = vmatprep.subr.mxu0 0.0
    %3210 = vmatpush1.msra.mxu0 0.0
    %3211 = vmatprep.subr.mxu0 0.0
    %3212 = vmatpush1.msra.mxu0 0.0
    %3213 = vmatprep.subr.mxu0 0.0
    %3214 = vmatpush1.msra.mxu0 0.0
    %3215 = vmatprep.subr.mxu0 0.0
    %3216 = vmatpush1.msra.mxu0 0.0
    %3217 = vmatprep.subr.mxu0 0.0
    %3218 = vmatpush1.msra.mxu0 0.0
    %3219 = vmatprep.subr.mxu0 0.0
    %3220 = vmatpush1.msra.mxu0 0.0
    %3221 = vmatprep.subr.mxu0 0.0
    %3222 = vmatpush1.msra.mxu0 0.0
    %3223 = vmatprep.subr.mxu0 0.0
    %3224 = vmatpush1.msra.mxu0 0.0
    %3225 = vmatprep.subr.mxu0 0.0
    %3226 = vmatpush1.msra.mxu0 0.0
    %3227 = vmatprep.subr.mxu0 0.0
    %3228 = vmatpush1.msra.mxu0 0.0
    %3229 = vmatprep.subr.mxu0 0.0
    %3230 = vmatpush1.msra.mxu0 0.0
    %3231 = vmatprep.subr.mxu0 0.0
    %3232 = vmatpush1.msra.mxu0 0.0
    %3233 = vmatprep.subr.mxu0 0.0
    %3234 = vmatpush1.msra.mxu0 0.0
    %3235 = vmatprep.subr.mxu0 0.0
    %3236 = vmatpush1.msra.mxu0 0.0
    %3237 = vmatprep.subr.mxu0 0.0
    %3238 = vmatpush1.msra.mxu0 0.0
    %3239 = vmatprep.subr.mxu0 0.0
    %3240 = vmatpush1.msra.mxu0 0.0
    %3241 = vmatprep.subr.mxu0 0.0
    %3242 = vmatpush1.msra.mxu0 0.0
    %3243 = vmatprep.subr.mxu0 0.0
    %3244 = vmatpush1.msra.mxu0 0.0
    %3245 = vmatprep.subr.mxu0 0.0
    %3246 = vmatpush1.msra.mxu0 0.0
    %3247 = vmatprep.subr.mxu0 0.0
    %3248 = vmatpush1.msra.mxu0 0.0
    %3249 = vmatprep.subr.mxu0 0.0
    %3250 = vmatpush1.msra.mxu0 0.0
    %3251 = vmatprep.subr.mxu0 0.0
    %3252 = vmatpush1.msra.mxu0 0.0
    %3253 = vmatprep.subr.mxu0 0.0
    %3254 = vmatpush1.msra.mxu0 0.0
    %3255 = vmatprep.subr.mxu0 0.0
    %3256 = vmatpush1.msra.mxu0 0.0
    %3257 = vmatprep.subr.mxu0 0.0
    %3258 = vmatpush1.msra.mxu0 0.0
    %3259 = vmatprep.subr.mxu0 0.0
    %3260 = vmatpush1.msra.mxu0 0.0
    %3261 = vmatprep.mubr.f32.mxu0 0.0
    %3262 = vmatmul.mubr.f32.gmra.mrb[0].mxu0 %v3185
    %v3263 = vpop.f32.mrb[0].mxu0
    %v3264 = vadd.f32 0.0, %v3263
    %v3265 = vpop.f32.mrb[0].mxu0
    %3266 = vmatprep.mubr.f32.mxu0 0.0
    %3267 = vmatmul.mubr.f32.gmra.mrb[0].mxu0 %v3187
    %v3268 = vpop.f32.mrb[0].mxu0
    %v3269 = vadd.f32 0.0, %v3268
    %v3270 = vpop.f32.mrb[0].mxu0
    %3271 = vmatprep.mubr.f32.mxu0 0.0
    %3272 = vmatmul.mubr.f32.gmra.mrb[0].mxu0 %v3189
    %v3273 = vpop.f32.mrb[0].mxu0
    %v3274 = vadd.f32 0.0, %v3273
    %v3275 = vpop.f32.mrb[0].mxu0
    %3276 = vmatprep.mubr.f32.mxu0 0.0
    %3277 = vmatmul.mubr.f32.gmra.mrb[0].mxu0 %v3191
    %v3278 = vpop.f32.mrb[0].mxu0
    %v3279 = vadd.f32 0.0, %v3278
    %v3280 = vpop.f32.mrb[0].mxu0
    %3281 = vmatprep.mubr.f32.mxu0 0.0
    %3282 = vmatmul.mubr.f32.gmra.mrb[0].mxu0 %v3193
    %v3283 = vpop.f32.mrb[0].mxu0
    %v3284 = vadd.f32 0.0, %v3283
    %v3285 = vpop.f32.mrb[0].mxu0
    %3286 = vmatprep.mubr.f32.mxu0 0.0
    %3287 = vmatmul.mubr.f32.gmra.mrb[0].mxu0 %v3195
    %v3288 = vpop.f32.mrb[0].mxu0
    %v3289 = vadd.f32 0.0, %v3288
    %v3290 = vpop.f32.mrb[0].mxu0
    %3291 = vdwg.mxu0
    %v3292 = vrot.slane %v3029, 5
    %v3293 = vrot.slane %v3030, 5
    %v3294 = vsel %vm530, %v3292, %v3293
    %v3295 = vrot.slane %v3031, 5
    %v3296 = vsel %vm530, %v3293, %v3295
    %v3297 = vrot.slane %v3032, 5
    %v3298 = vsel %vm530, %v3295, %v3297
    %v3299 = vrot.slane %v3033, 5
    %v3300 = vsel %vm530, %v3297, %v3299
    %v3301 = vrot.slane %v3034, 5
    %v3302 = vsel %vm530, %v3299, %v3301
    %v3303 = vsel %vm530, %v3301, %v542
    %v3304 = vsel %vm1054, %v3294, 0
    %v3306 = vsel %vm1054, %v3296, 0
    %v3308 = vsel %vm1054, %v3298, 0
    %v3310 = vsel %vm1054, %v3300, 0
    %v3312 = vsel %vm1054, %v3302, 0
    %v3314 = vsel %vm1054, %v3303, 0
    %3316 = vmatprep.subr.mxu0 0.0
    %3317 = vmatpush1.msra.mxu0 %v3045
    %3318 = vmatprep.subr.mxu0 0.0
    %3319 = vmatpush1.msra.mxu0 %v3046
    %3320 = vmatprep.subr.mxu0 0.0
    %3321 = vmatpush1.msra.mxu0 0.0
    %3322 = vmatprep.subr.mxu0 0.0
    %3323 = vmatpush1.msra.mxu0 0.0
    %3324 = vmatprep.subr.mxu0 0.0
    %3325 = vmatpush1.msra.mxu0 0.0
    %3326 = vmatprep.subr.mxu0 0.0
    %3327 = vmatpush1.msra.mxu0 0.0
    %3328 = vmatprep.subr.mxu0 0.0
    %3329 = vmatpush1.msra.mxu0 0.0
    %3330 = vmatprep.subr.mxu0 0.0
    %3331 = vmatpush1.msra.mxu0 0.0
    %3332 = vmatprep.subr.mxu0 0.0
    %3333 = vmatpush1.msra.mxu0 0.0
    %3334 = vmatprep.subr.mxu0 0.0
    %3335 = vmatpush1.msra.mxu0 0.0
    %3336 = vmatprep.subr.mxu0 0.0
    %3337 = vmatpush1.msra.mxu0 0.0
    %3338 = vmatprep.subr.mxu0 0.0
    %3339 = vmatpush1.msra.mxu0 0.0
    %3340 = vmatprep.subr.mxu0 0.0
    %3341 = vmatpush1.msra.mxu0 0.0
    %3342 = vmatprep.subr.mxu0 0.0
    %3343 = vmatpush1.msra.mxu0 0.0
    %3344 = vmatprep.subr.mxu0 0.0
    %3345 = vmatpush1.msra.mxu0 0.0
    %3346 = vmatprep.subr.mxu0 0.0
    %3347 = vmatpush1.msra.mxu0 0.0
    %3348 = vmatprep.subr.mxu0 0.0
    %3349 = vmatpush1.msra.mxu0 0.0
    %3350 = vmatprep.subr.mxu0 0.0
    %3351 = vmatpush1.msra.mxu0 0.0
    %3352 = vmatprep.subr.mxu0 0.0
    %3353 = vmatpush1.msra.mxu0 0.0
    %3354 = vmatprep.subr.mxu0 0.0
    %3355 = vmatpush1.msra.mxu0 0.0
    %3356 = vmatprep.subr.mxu0 0.0
    %3357 = vmatpush1.msra.mxu0 0.0
    %3358 = vmatprep.subr.mxu0 0.0
    %3359 = vmatpush1.msra.mxu0 0.0
    %3360 = vmatprep.subr.mxu0 0.0
    %3361 = vmatpush1.msra.mxu0 0.0
    %3362 = vmatprep.subr.mxu0 0.0
    %3363 = vmatpush1.msra.mxu0 0.0
    %3364 = vmatprep.subr.mxu0 0.0
    %3365 = vmatpush1.msra.mxu0 0.0
    %3366 = vmatprep.subr.mxu0 0.0
    %3367 = vmatpush1.msra.mxu0 0.0
    %3368 = vmatprep.subr.mxu0 0.0
    %3369 = vmatpush1.msra.mxu0 0.0
    %3370 = vmatprep.subr.mxu0 0.0
    %3371 = vmatpush1.msra.mxu0 0.0
    %3372 = vmatprep.subr.mxu0 0.0
    %3373 = vmatpush1.msra.mxu0 0.0
    %3374 = vmatprep.subr.mxu0 0.0
    %3375 = vmatpush1.msra.mxu0 0.0
    %3376 = vmatprep.subr.mxu0 0.0
    %3377 = vmatpush1.msra.mxu0 0.0
    %3378 = vmatprep.subr.mxu0 0.0
    %3379 = vmatpush1.msra.mxu0 0.0
    %3380 = vmatprep.mubr.f32.mxu0 0.0
    %3381 = vmatmul.mubr.f32.gmra.mrb[0].mxu0 %v3304
    %v3382 = vpop.f32.mrb[0].mxu0
    %v3383 = vadd.f32 0.0, %v3382
    %v3384 = vpop.f32.mrb[0].mxu0
    %3385 = vmatprep.mubr.f32.mxu0 0.0
    %3386 = vmatmul.mubr.f32.gmra.mrb[0].mxu0 %v3306
    %v3387 = vpop.f32.mrb[0].mxu0
    %v3388 = vadd.f32 0.0, %v3387
    %v3389 = vpop.f32.mrb[0].mxu0
    %3390 = vmatprep.mubr.f32.mxu0 0.0
    %3391 = vmatmul.mubr.f32.gmra.mrb[0].mxu0 %v3308
    %v3392 = vpop.f32.mrb[0].mxu0
    %v3393 = vadd.f32 0.0, %v3392
    %v3394 = vpop.f32.mrb[0].mxu0
    %3395 = vmatprep.mubr.f32.mxu0 0.0
    %3396 = vmatmul.mubr.f32.gmra.mrb[0].mxu0 %v3310
    %v3397 = vpop.f32.mrb[0].mxu0
    %v3398 = vadd.f32 0.0, %v3397
    %v3399 = vpop.f32.mrb[0].mxu0
    %3400 = vmatprep.mubr.f32.mxu0 0.0
    %3401 = vmatmul.mubr.f32.gmra.mrb[0].mxu0 %v3312
    %v3402 = vpop.f32.mrb[0].mxu0
    %v3403 = vadd.f32 0.0, %v3402
    %v3404 = vpop.f32.mrb[0].mxu0
    %3405 = vmatprep.mubr.f32.mxu0 0.0
    %3406 = vmatmul.mubr.f32.gmra.mrb[0].mxu0 %v3314
    %v3407 = vpop.f32.mrb[0].mxu0
    %v3408 = vadd.f32 0.0, %v3407
    %v3409 = vpop.f32.mrb[0].mxu0
    %3410 = vdwg.mxu0
    %v3411 = vsel %vm1054, %v3029, 0
    %v3413 = vsel %vm1054, %v3030, 0
    %v3415 = vsel %vm1054, %v3031, 0
    %v3417 = vsel %vm1054, %v3032, 0
    %v3419 = vsel %vm1054, %v3033, 0
    %v3421 = vsel %vm1054, %v3034, 0
    %3423 = vmatprep.subr.mxu0 0.0
    %3424 = vmatpush1.msra.mxu0 %v3035
    %3425 = vmatprep.subr.mxu0 0.0
    %3426 = vmatpush1.msra.mxu0 %v3036
    %3427 = vmatprep.subr.mxu0 0.0
    %3428 = vmatpush1.msra.mxu0 0.0
    %3429 = vmatprep.subr.mxu0 0.0
    %3430 = vmatpush1.msra.mxu0 0.0
    %3431 = vmatprep.subr.mxu0 0.0
    %3432 = vmatpush1.msra.mxu0 0.0
    %3433 = vmatprep.subr.mxu0 0.0
    %3434 = vmatpush1.msra.mxu0 0.0
    %3435 = vmatprep.subr.mxu0 0.0
    %3436 = vmatpush1.msra.mxu0 0.0
    %3437 = vmatprep.subr.mxu0 0.0
    %3438 = vmatpush1.msra.mxu0 0.0
    %3439 = vmatprep.subr.mxu0 0.0
    %3440 = vmatpush1.msra.mxu0 0.0
    %3441 = vmatprep.subr.mxu0 0.0
    %3442 = vmatpush1.msra.mxu0 0.0
    %3443 = vmatprep.subr.mxu0 0.0
    %3444 = vmatpush1.msra.mxu0 0.0
    %3445 = vmatprep.subr.mxu0 0.0
    %3446 = vmatpush1.msra.mxu0 0.0
    %3447 = vmatprep.subr.mxu0 0.0
    %3448 = vmatpush1.msra.mxu0 0.0
    %3449 = vmatprep.subr.mxu0 0.0
    %3450 = vmatpush1.msra.mxu0 0.0
    %3451 = vmatprep.subr.mxu0 0.0
    %3452 = vmatpush1.msra.mxu0 0.0
    %3453 = vmatprep.subr.mxu0 0.0
    %3454 = vmatpush1.msra.mxu0 0.0
    %3455 = vmatprep.subr.mxu0 0.0
    %3456 = vmatpush1.msra.mxu0 0.0
    %3457 = vmatprep.subr.mxu0 0.0
    %3458 = vmatpush1.msra.mxu0 0.0
    %3459 = vmatprep.subr.mxu0 0.0
    %3460 = vmatpush1.msra.mxu0 0.0
    %3461 = vmatprep.subr.mxu0 0.0
    %3462 = vmatpush1.msra.mxu0 0.0
    %3463 = vmatprep.subr.mxu0 0.0
    %3464 = vmatpush1.msra.mxu0 0.0
    %3465 = vmatprep.subr.mxu0 0.0
    %3466 = vmatpush1.msra.mxu0 0.0
    %3467 = vmatprep.subr.mxu0 0.0
    %3468 = vmatpush1.msra.mxu0 0.0
    %3469 = vmatprep.subr.mxu0 0.0
    %3470 = vmatpush1.msra.mxu0 0.0
    %3471 = vmatprep.subr.mxu0 0.0
    %3472 = vmatpush1.msra.mxu0 0.0
    %3473 = vmatprep.subr.mxu0 0.0
    %3474 = vmatpush1.msra.mxu0 0.0
    %3475 = vmatprep.subr.mxu0 0.0
    %3476 = vmatpush1.msra.mxu0 0.0
    %3477 = vmatprep.subr.mxu0 0.0
    %3478 = vmatpush1.msra.mxu0 0.0
    %3479 = vmatprep.subr.mxu0 0.0
    %3480 = vmatpush1.msra.mxu0 0.0
    %3481 = vmatprep.subr.mxu0 0.0
    %3482 = vmatpush1.msra.mxu0 0.0
    %3483 = vmatprep.subr.mxu0 0.0
    %3484 = vmatpush1.msra.mxu0 0.0
    %3485 = vmatprep.subr.mxu0 0.0
    %3486 = vmatpush1.msra.mxu0 0.0
    %3487 = vmatprep.mubr.f32.mxu0 0.0
    %3488 = vmatmul.mubr.f32.gmra.mrb[0].mxu0 %v3411
    %v3489 = vpop.f32.mrb[0].mxu0
    %v3490 = vadd.f32 %v3145, %v3489
    %v3491 = vpop.f32.mrb[0].mxu0
    %3492 = vmatprep.mubr.f32.mxu0 0.0
    %3493 = vmatmul.mubr.f32.gmra.mrb[0].mxu0 %v3413
    %v3494 = vpop.f32.mrb[0].mxu0
    %v3495 = vadd.f32 %v3150, %v3494
    %v3496 = vpop.f32.mrb[0].mxu0
    %3497 = vmatprep.mubr.f32.mxu0 0.0
    %3498 = vmatmul.mubr.f32.gmra.mrb[0].mxu0 %v3415
    %v3499 = vpop.f32.mrb[0].mxu0
    %v3500 = vadd.f32 %v3155, %v3499
    %v3501 = vpop.f32.mrb[0].mxu0
    %3502 = vmatprep.mubr.f32.mxu0 0.0
    %3503 = vmatmul.mubr.f32.gmra.mrb[0].mxu0 %v3417
    %v3504 = vpop.f32.mrb[0].mxu0
    %v3505 = vadd.f32 %v3160, %v3504
    %v3506 = vpop.f32.mrb[0].mxu0
    %3507 = vmatprep.mubr.f32.mxu0 0.0
    %3508 = vmatmul.mubr.f32.gmra.mrb[0].mxu0 %v3419
    %v3509 = vpop.f32.mrb[0].mxu0
    %v3510 = vadd.f32 %v3165, %v3509
    %v3511 = vpop.f32.mrb[0].mxu0
    %3512 = vmatprep.mubr.f32.mxu0 0.0
    %3513 = vmatmul.mubr.f32.gmra.mrb[0].mxu0 %v3421
    %v3514 = vpop.f32.mrb[0].mxu0
    %v3515 = vadd.f32 %v3170, %v3514
    %v3516 = vpop.f32.mrb[0].mxu0
    %3517 = vdwg.mxu0
    %v3518 = vrot.slane %v3029, 2
    %v3519 = vrot.slane %v3030, 2
    %v3520 = vsel %vm764, %v3518, %v3519
    %v3521 = vrot.slane %v3031, 2
    %v3522 = vsel %vm764, %v3519, %v3521
    %v3523 = vrot.slane %v3032, 2
    %v3524 = vsel %vm764, %v3521, %v3523
    %v3525 = vrot.slane %v3033, 2
    %v3526 = vsel %vm764, %v3523, %v3525
    %v3527 = vrot.slane %v3034, 2
    %v3528 = vsel %vm764, %v3525, %v3527
    %v3529 = vsel %vm764, %v3527, %v776
    %v3530 = vsel %vm1054, %v3520, 0
    %v3532 = vsel %vm1054, %v3522, 0
    %v3534 = vsel %vm1054, %v3524, 0
    %v3536 = vsel %vm1054, %v3526, 0
    %v3538 = vsel %vm1054, %v3528, 0
    %v3540 = vsel %vm1054, %v3529, 0
    %3542 = vmatprep.subr.mxu0 0.0
    %3543 = vmatpush1.msra.mxu0 %v3039
    %3544 = vmatprep.subr.mxu0 0.0
    %3545 = vmatpush1.msra.mxu0 %v3040
    %3546 = vmatprep.subr.mxu0 0.0
    %3547 = vmatpush1.msra.mxu0 0.0
    %3548 = vmatprep.subr.mxu0 0.0
    %3549 = vmatpush1.msra.mxu0 0.0
    %3550 = vmatprep.subr.mxu0 0.0
    %3551 = vmatpush1.msra.mxu0 0.0
    %3552 = vmatprep.subr.mxu0 0.0
    %3553 = vmatpush1.msra.mxu0 0.0
    %3554 = vmatprep.subr.mxu0 0.0
    %3555 = vmatpush1.msra.mxu0 0.0
    %3556 = vmatprep.subr.mxu0 0.0
    %3557 = vmatpush1.msra.mxu0 0.0
    %3558 = vmatprep.subr.mxu0 0.0
    %3559 = vmatpush1.msra.mxu0 0.0
    %3560 = vmatprep.subr.mxu0 0.0
    %3561 = vmatpush1.msra.mxu0 0.0
    %3562 = vmatprep.subr.mxu0 0.0
    %3563 = vmatpush1.msra.mxu0 0.0
    %3564 = vmatprep.subr.mxu0 0.0
    %3565 = vmatpush1.msra.mxu0 0.0
    %3566 = vmatprep.subr.mxu0 0.0
    %3567 = vmatpush1.msra.mxu0 0.0
    %3568 = vmatprep.subr.mxu0 0.0
    %3569 = vmatpush1.msra.mxu0 0.0
    %3570 = vmatprep.subr.mxu0 0.0
    %3571 = vmatpush1.msra.mxu0 0.0
    %3572 = vmatprep.subr.mxu0 0.0
    %3573 = vmatpush1.msra.mxu0 0.0
    %3574 = vmatprep.subr.mxu0 0.0
    %3575 = vmatpush1.msra.mxu0 0.0
    %3576 = vmatprep.subr.mxu0 0.0
    %3577 = vmatpush1.msra.mxu0 0.0
    %3578 = vmatprep.subr.mxu0 0.0
    %3579 = vmatpush1.msra.mxu0 0.0
    %3580 = vmatprep.subr.mxu0 0.0
    %3581 = vmatpush1.msra.mxu0 0.0
    %3582 = vmatprep.subr.mxu0 0.0
    %3583 = vmatpush1.msra.mxu0 0.0
    %3584 = vmatprep.subr.mxu0 0.0
    %3585 = vmatpush1.msra.mxu0 0.0
    %3586 = vmatprep.subr.mxu0 0.0
    %3587 = vmatpush1.msra.mxu0 0.0
    %3588 = vmatprep.subr.mxu0 0.0
    %3589 = vmatpush1.msra.mxu0 0.0
    %3590 = vmatprep.subr.mxu0 0.0
    %3591 = vmatpush1.msra.mxu0 0.0
    %3592 = vmatprep.subr.mxu0 0.0
    %3593 = vmatpush1.msra.mxu0 0.0
    %3594 = vmatprep.subr.mxu0 0.0
    %3595 = vmatpush1.msra.mxu0 0.0
    %3596 = vmatprep.subr.mxu0 0.0
    %3597 = vmatpush1.msra.mxu0 0.0
    %3598 = vmatprep.subr.mxu0 0.0
    %3599 = vmatpush1.msra.mxu0 0.0
    %3600 = vmatprep.subr.mxu0 0.0
    %3601 = vmatpush1.msra.mxu0 0.0
    %3602 = vmatprep.subr.mxu0 0.0
    %3603 = vmatpush1.msra.mxu0 0.0
    %3604 = vmatprep.subr.mxu0 0.0
    %3605 = vmatpush1.msra.mxu0 0.0
    %3606 = vmatprep.mubr.f32.mxu0 0.0
    %3607 = vmatmul.mubr.f32.gmra.mrb[0].mxu0 %v3530
    %v3608 = vpop.f32.mrb[0].mxu0
    %v3609 = vadd.f32 %v3264, %v3608
    %v3610 = vpop.f32.mrb[0].mxu0
    %3611 = vmatprep.mubr.f32.mxu0 0.0
    %3612 = vmatmul.mubr.f32.gmra.mrb[0].mxu0 %v3532
    %v3613 = vpop.f32.mrb[0].mxu0
    %v3614 = vadd.f32 %v3269, %v3613
    %v3615 = vpop.f32.mrb[0].mxu0
    %3616 = vmatprep.mubr.f32.mxu0 0.0
    %3617 = vmatmul.mubr.f32.gmra.mrb[0].mxu0 %v3534
    %v3618 = vpop.f32.mrb[0].mxu0
    %v3619 = vadd.f32 %v3274, %v3618
    %v3620 = vpop.f32.mrb[0].mxu0
    %3621 = vmatprep.mubr.f32.mxu0 0.0
    %3622 = vmatmul.mubr.f32.gmra.mrb[0].mxu0 %v3536
    %v3623 = vpop.f32.mrb[0].mxu0
    %v3624 = vadd.f32 %v3279, %v3623
    %v3625 = vpop.f32.mrb[0].mxu0
    %3626 = vmatprep.mubr.f32.mxu0 0.0
    %3627 = vmatmul.mubr.f32.gmra.mrb[0].mxu0 %v3538
    %v3628 = vpop.f32.mrb[0].mxu0
    %v3629 = vadd.f32 %v3284, %v3628
    %v3630 = vpop.f32.mrb[0].mxu0
    %3631 = vmatprep.mubr.f32.mxu0 0.0
    %3632 = vmatmul.mubr.f32.gmra.mrb[0].mxu0 %v3540
    %v3633 = vpop.f32.mrb[0].mxu0
    %v3634 = vadd.f32 %v3289, %v3633
    %v3635 = vpop.f32.mrb[0].mxu0
    %3636 = vdwg.mxu0
    %v3637 = vrot.slane %v3029, 4
    %v3638 = vrot.slane %v3030, 4
    %v3639 = vsel %vm888, %v3637, %v3638
    %v3640 = vrot.slane %v3031, 4
    %v3641 = vsel %vm888, %v3638, %v3640
    %v3642 = vrot.slane %v3032, 4
    %v3643 = vsel %vm888, %v3640, %v3642
    %v3644 = vrot.slane %v3033, 4
    %v3645 = vsel %vm888, %v3642, %v3644
    %v3646 = vrot.slane %v3034, 4
    %v3647 = vsel %vm888, %v3644, %v3646
    %v3648 = vsel %vm888, %v3646, %v900
    %v3649 = vsel %vm1054, %v3639, 0
    %v3651 = vsel %vm1054, %v3641, 0
    %v3653 = vsel %vm1054, %v3643, 0
    %v3655 = vsel %vm1054, %v3645, 0
    %v3657 = vsel %vm1054, %v3647, 0
    %v3659 = vsel %vm1054, %v3648, 0
    %3661 = vmatprep.subr.mxu0 0.0
    %3662 = vmatpush1.msra.mxu0 %v3043
    %3663 = vmatprep.subr.mxu0 0.0
    %3664 = vmatpush1.msra.mxu0 %v3044
    %3665 = vmatprep.subr.mxu0 0.0
    %3666 = vmatpush1.msra.mxu0 0.0
    %3667 = vmatprep.subr.mxu0 0.0
    %3668 = vmatpush1.msra.mxu0 0.0
    %3669 = vmatprep.subr.mxu0 0.0
    %3670 = vmatpush1.msra.mxu0 0.0
    %3671 = vmatprep.subr.mxu0 0.0
    %3672 = vmatpush1.msra.mxu0 0.0
    %3673 = vmatprep.subr.mxu0 0.0
    %3674 = vmatpush1.msra.mxu0 0.0
    %3675 = vmatprep.subr.mxu0 0.0
    %3676 = vmatpush1.msra.mxu0 0.0
    %3677 = vmatprep.subr.mxu0 0.0
    %3678 = vmatpush1.msra.mxu0 0.0
    %3679 = vmatprep.subr.mxu0 0.0
    %3680 = vmatpush1.msra.mxu0 0.0
    %3681 = vmatprep.subr.mxu0 0.0
    %3682 = vmatpush1.msra.mxu0 0.0
    %3683 = vmatprep.subr.mxu0 0.0
    %3684 = vmatpush1.msra.mxu0 0.0
    %3685 = vmatprep.subr.mxu0 0.0
    %3686 = vmatpush1.msra.mxu0 0.0
    %3687 = vmatprep.subr.mxu0 0.0
    %3688 = vmatpush1.msra.mxu0 0.0
    %3689 = vmatprep.subr.mxu0 0.0
    %3690 = vmatpush1.msra.mxu0 0.0
    %3691 = vmatprep.subr.mxu0 0.0
    %3692 = vmatpush1.msra.mxu0 0.0
    %3693 = vmatprep.subr.mxu0 0.0
    %3694 = vmatpush1.msra.mxu0 0.0
    %3695 = vmatprep.subr.mxu0 0.0
    %3696 = vmatpush1.msra.mxu0 0.0
    %3697 = vmatprep.subr.mxu0 0.0
    %3698 = vmatpush1.msra.mxu0 0.0
    %3699 = vmatprep.subr.mxu0 0.0
    %3700 = vmatpush1.msra.mxu0 0.0
    %3701 = vmatprep.subr.mxu0 0.0
    %3702 = vmatpush1.msra.mxu0 0.0
    %3703 = vmatprep.subr.mxu0 0.0
    %3704 = vmatpush1.msra.mxu0 0.0
    %3705 = vmatprep.subr.mxu0 0.0
    %3706 = vmatpush1.msra.mxu0 0.0
    %3707 = vmatprep.subr.mxu0 0.0
    %3708 = vmatpush1.msra.mxu0 0.0
    %3709 = vmatprep.subr.mxu0 0.0
    %3710 = vmatpush1.msra.mxu0 0.0
    %3711 = vmatprep.subr.mxu0 0.0
    %3712 = vmatpush1.msra.mxu0 0.0
    %3713 = vmatprep.subr.mxu0 0.0
    %3714 = vmatpush1.msra.mxu0 0.0
    %3715 = vmatprep.subr.mxu0 0.0
    %3716 = vmatpush1.msra.mxu0 0.0
    %3717 = vmatprep.subr.mxu0 0.0
    %3718 = vmatpush1.msra.mxu0 0.0
    %3719 = vmatprep.subr.mxu0 0.0
    %3720 = vmatpush1.msra.mxu0 0.0
    %3721 = vmatprep.subr.mxu0 0.0
    %3722 = vmatpush1.msra.mxu0 0.0
    %3723 = vmatprep.subr.mxu0 0.0
    %3724 = vmatpush1.msra.mxu0 0.0
    %3725 = vmatprep.mubr.f32.mxu0 0.0
    %3726 = vmatmul.mubr.f32.gmra.mrb[0].mxu0 %v3649
    %v3727 = vpop.f32.mrb[0].mxu0
    %v3728 = vadd.f32 %v3383, %v3727
    %v3729 = vpop.f32.mrb[0].mxu0
    %3730 = vmatprep.mubr.f32.mxu0 0.0
    %3731 = vmatmul.mubr.f32.gmra.mrb[0].mxu0 %v3651
    %v3732 = vpop.f32.mrb[0].mxu0
    %v3733 = vadd.f32 %v3388, %v3732
    %v3734 = vpop.f32.mrb[0].mxu0
    %3735 = vmatprep.mubr.f32.mxu0 0.0
    %3736 = vmatmul.mubr.f32.gmra.mrb[0].mxu0 %v3653
    %v3737 = vpop.f32.mrb[0].mxu0
    %v3738 = vadd.f32 %v3393, %v3737
    %v3739 = vpop.f32.mrb[0].mxu0
    %3740 = vmatprep.mubr.f32.mxu0 0.0
    %3741 = vmatmul.mubr.f32.gmra.mrb[0].mxu0 %v3655
    %v3742 = vpop.f32.mrb[0].mxu0
    %v3743 = vadd.f32 %v3398, %v3742
    %v3744 = vpop.f32.mrb[0].mxu0
    %3745 = vmatprep.mubr.f32.mxu0 0.0
    %3746 = vmatmul.mubr.f32.gmra.mrb[0].mxu0 %v3657
    %v3747 = vpop.f32.mrb[0].mxu0
    %v3748 = vadd.f32 %v3403, %v3747
    %v3749 = vpop.f32.mrb[0].mxu0
    %3750 = vmatprep.mubr.f32.mxu0 0.0
    %3751 = vmatmul.mubr.f32.gmra.mrb[0].mxu0 %v3659
    %v3752 = vpop.f32.mrb[0].mxu0
    %v3753 = vadd.f32 %v3408, %v3752
    %v3754 = vpop.f32.mrb[0].mxu0
    %3755 = vdwg.mxu0
    %v3756 = vadd.f32 %v3490, %v3609
    %v3757 = vadd.f32 %v3495, %v3614
    %v3758 = vadd.f32 %v3500, %v3619
    %v3759 = vadd.f32 %v3505, %v3624
    %v3760 = vadd.f32 %v3510, %v3629
    %v3761 = vadd.f32 %v3515, %v3634
    %v3762 = vadd.f32 %v3756, %v3728
    %v3763 = vadd.f32 %v3757, %v3733
    %v3764 = vadd.f32 %v3758, %v3738
    %v3765 = vadd.f32 %v3759, %v3743
    %v3766 = vadd.f32 %v3760, %v3748
    %v3767 = vadd.f32 %v3761, %v3753
    %vm3768 = vcmp.lt.s32.totalorder %v46, 10
    %vm3769 = vcmp.lt.s32.totalorder %v47, 10
    %vm3770 = vcmp.lt.s32.totalorder %v48, 10
    %v3771 = vsel %vm3768, 1, 0
    %v3772 = vsel %vm3769, 1, 0
    %v3773 = vsel %vm3770, 1, 0
    %v3774 = vcvt.s32.f32 %v3771
    %v3775 = vcvt.s32.f32 %v3772
    %v3776 = vcvt.s32.f32 %v3773
    %3778 = vset.pattern.permute.xlu0 0
    %3779 = vperm.xlu0 %3778, %v3774
    %v3780 = vpop.permute.xlu0 %3779
    %3783 = vset.pattern.permute.xlu0 0
    %3784 = vperm.xlu0 %3783, %v3775
    %v3785 = vpop.permute.xlu0 %3784
    %3788 = vset.pattern.permute.xlu0 0
    %3789 = vperm.xlu0 %3788, %v3776
    %v3790 = vpop.permute.xlu0 %3789
    %v3792 = vmul.f32 %v3762, %v3780
    %v3793 = vmul.f32 %v3763, %v3785
    %v3794 = vmul.f32 %v3764, %v3790
    %v3795 = vmul.f32 %v3765, %v3780
    %v3796 = vmul.f32 %v3766, %v3785
    %v3797 = vmul.f32 %v3767, %v3790
    %v3798 = vsel %vm1897, %v3792, 0.0
    %v3799 = vsel %vm1897, %v3793, 0.0
    %v3800 = vadd.f32 %v3798, %v3799
    %v3801 = vsel %vm1897, %v3794, 0.0
    %v3802 = vadd.f32 %v3800, %v3801
    %v3803 = vsel %vm1897, %v3795, 0.0
    %v3804 = vadd.f32 %v3802, %v3803
    %v3805 = vsel %vm1897, %v3796, 0.0
    %v3806 = vadd.f32 %v3804, %v3805
    %v3807 = vsel %vm1897, %v3797, 0.0
    %v3808 = vadd.f32 %v3806, %v3807
    %v3809 = vrot.slane %v3808, 4
    %v3810 = vadd.f32 %v3808, %v3809
    %v3811 = vrot.slane %v3810, 2
    %v3812 = vadd.f32 %v3810, %v3811
    %v3813 = vrot.slane %v3812, 1
    %v3814 = vadd.f32 %v3812, %v3813
    %v3815 = vmul.f32 %v3792, %v3762
    %v3816 = vmul.f32 %v3793, %v3763
    %v3817 = vmul.f32 %v3794, %v3764
    %v3818 = vmul.f32 %v3795, %v3765
    %v3819 = vmul.f32 %v3796, %v3766
    %v3820 = vmul.f32 %v3797, %v3767
    %v3821 = vsel %vm1897, %v3815, 0.0
    %v3822 = vsel %vm1897, %v3816, 0.0
    %v3823 = vadd.f32 %v3821, %v3822
    %v3824 = vsel %vm1897, %v3817, 0.0
    %v3825 = vadd.f32 %v3823, %v3824
    %v3826 = vsel %vm1897, %v3818, 0.0
    %v3827 = vadd.f32 %v3825, %v3826
    %v3828 = vsel %vm1897, %v3819, 0.0
    %v3829 = vadd.f32 %v3827, %v3828
    %v3830 = vsel %vm1897, %v3820, 0.0
    %v3831 = vadd.f32 %v3829, %v3830
    %v3832 = vrot.slane %v3831, 4
    %v3833 = vadd.f32 %v3831, %v3832
    %v3834 = vrot.slane %v3833, 2
    %v3835 = vadd.f32 %v3833, %v3834
    %v3836 = vrot.slane %v3835, 1
    %v3837 = vadd.f32 %v3835, %v3836
    %v3838 = vmul.f32 %v3814, 0.05
    %v3839 = vmul.f32 %v3837, 0.05
    %v3840 = vmul.f32 %v3838, %v3838
    %v3841 = vsub.f32 %v3839, %v3840
    %v3842 = vmax.f32 %v3841, 0.0
    %v3843 = vadd.f32 %v3842, 1e-05
    %v3844 = vrsqrt.pop %v3843
    %v3845 = vmul.f32 %v3047, %v3844
    %v3846 = vmul.f32 %v3838, %v3845
    %v3848 = vrot.slane %v3846, 7
    %v3850 = vsub.f32 %v3047, %v3848
    %v3851 = vlaneseq
    %v3852 = vshrl.u32 %v3851, 7
    %v3853 = vsub.s32 0, %v3852
    %v3854 = vrot.slane %v3845, %v3853
    %v3855 = vmul.f32 %v3762, %v3854
    %v3856 = vmul.f32 %v3763, %v3854
    %v3857 = vmul.f32 %v3764, %v3854
    %v3858 = vmul.f32 %v3765, %v3854
    %v3859 = vmul.f32 %v3766, %v3854
    %v3860 = vmul.f32 %v3767, %v3854
    %v3861 = vlaneseq
    %v3862 = vshrl.u32 %v3861, 7
    %v3863 = vsub.s32 1, %v3862
    %v3864 = vrot.slane %v3850, %v3863
    %v3865 = vadd.f32 %v3855, %v3864
    %v3866 = vadd.f32 %v3856, %v3864
    %v3867 = vadd.f32 %v3857, %v3864
    %v3868 = vadd.f32 %v3858, %v3864
    %v3869 = vadd.f32 %v3859, %v3864
    %v3870 = vadd.f32 %v3860, %v3864
    %v3871 = vmax.f32 %v3865, 0.0
    %v3872 = vmax.f32 %v3866, 0.0
    %v3873 = vmax.f32 %v3867, 0.0
    %v3874 = vmax.f32 %v3868, 0.0
    %v3875 = vmax.f32 %v3869, 0.0
    %v3876 = vmax.f32 %v3870, 0.0
    %v3877 = vld [vmem:[%s10] sm:$0xff]
    %v3878 = vld [vmem:[%s10 + $0x8] sm:$0xff]
    %v3879 = vld [vmem:[%s10 + $0x10] sm:$0xff]
    %v3880 = vld [vmem:[%s10 + $0x18] sm:$0xff]
    %v3881 = vld [vmem:[%s10 + $0x20] sm:$0xff]
    %v3882 = vld [vmem:[%s10 + $0x28] sm:$0xff]
    %v3883 = vld [vmem:[%s11] sm:$0xff]
    %v3884 = vld [vmem:[%s11 + $0x8] sm:$0xff]
    %v3885 = vld [vmem:[%s11 + $0x10] sm:$0xff]
    %v3886 = vld [vmem:[%s11 + $0x18] sm:$0xff]
    %v3887 = vld [vmem:[%s11 + $0x20] sm:$0xff]
    %v3888 = vld [vmem:[%s11 + $0x28] sm:$0xff]
    %v3889 = vld [vmem:[%s12] sm:$0x1]
    %v3890 = vmul.f32 %v1971, %v3877
    %v3891 = vmul.f32 %v1972, %v3878
    %v3892 = vmul.f32 %v1973, %v3879
    %v3893 = vmul.f32 %v1974, %v3877
    %v3894 = vmul.f32 %v1975, %v3878
    %v3895 = vmul.f32 %v1976, %v3879
    %v3896 = vmul.f32 %v3871, %v3883
    %v3897 = vmul.f32 %v3872, %v3884
    %v3898 = vmul.f32 %v3873, %v3885
    %v3899 = vmul.f32 %v3874, %v3883
    %v3900 = vmul.f32 %v3875, %v3884
    %v3901 = vmul.f32 %v3876, %v3885
    %v3902 = vadd.f32 %v3890, %v3896
    %v3903 = vadd.f32 %v3891, %v3897
    %v3904 = vadd.f32 %v3892, %v3898
    %v3905 = vadd.f32 %v3893, %v3899
    %v3906 = vadd.f32 %v3894, %v3900
    %v3907 = vadd.f32 %v3895, %v3901
    %v3908 = vsel %vm1897, %v3902, 0.0
    %3909 = vadd.xlane.f32.xlu0 %v3908
    %v3910 = vpop.xlane.xlu0 %3909
    %v3911 = vsel %vm1897, %v3903, 0.0
    %3912 = vadd.xlane.f32.xlu0 %v3911
    %v3913 = vpop.xlane.xlu0 %3912
    %v3914 = vsel %vm1897, %v3904, 0.0
    %3915 = vadd.xlane.f32.xlu0 %v3914
    %v3916 = vpop.xlane.xlu0 %3915
    %v3917 = vsel %vm1897, %v3905, 0.0
    %3918 = vadd.xlane.f32.xlu0 %v3917
    %v3919 = vpop.xlane.xlu0 %3918
    %v3920 = vsel %vm1897, %v3906, 0.0
    %3921 = vadd.xlane.f32.xlu0 %v3920
    %v3922 = vpop.xlane.xlu0 %3921
    %v3923 = vsel %vm1897, %v3907, 0.0
    %3924 = vadd.xlane.f32.xlu0 %v3923
    %v3925 = vpop.xlane.xlu0 %3924
    %vm3926 = vcmp.eq.s32.totalorder %v50, 0
    %v3927 = vsel %vm3926, 1, 0
    %v3928 = vcvt.s32.f32 %v3927
    %v3929 = vmul.f32 %v3910, %v3928
    %v3930 = vmul.f32 %v3913, %v3928
    %v3931 = vmul.f32 %v3916, %v3928
    %v3932 = vmul.f32 %v3919, %v3928
    %v3933 = vmul.f32 %v3922, %v3928
    %v3934 = vmul.f32 %v3925, %v3928
    %v3935 = vmul.f32 %v1971, %v3880
    %v3936 = vmul.f32 %v1972, %v3881
    %v3937 = vmul.f32 %v1973, %v3882
    %v3938 = vmul.f32 %v1974, %v3880
    %v3939 = vmul.f32 %v1975, %v3881
    %v3940 = vmul.f32 %v1976, %v3882
    %v3941 = vmul.f32 %v3871, %v3886
    %v3942 = vmul.f32 %v3872, %v3887
    %v3943 = vmul.f32 %v3873, %v3888
    %v3944 = vmul.f32 %v3874, %v3886
    %v3945 = vmul.f32 %v3875, %v3887
    %v3946 = vmul.f32 %v3876, %v3888
    %v3947 = vadd.f32 %v3935, %v3941
    %v3948 = vadd.f32 %v3936, %v3942
    %v3949 = vadd.f32 %v3937, %v3943
    %v3950 = vadd.f32 %v3938, %v3944
    %v3951 = vadd.f32 %v3939, %v3945
    %v3952 = vadd.f32 %v3940, %v3946
    %v3953 = vsel %vm1897, %v3947, 0.0
    %3954 = vadd.xlane.f32.xlu0 %v3953
    %v3955 = vpop.xlane.xlu0 %3954
    %v3956 = vsel %vm1897, %v3948, 0.0
    %3957 = vadd.xlane.f32.xlu0 %v3956
    %v3958 = vpop.xlane.xlu0 %3957
    %v3959 = vsel %vm1897, %v3949, 0.0
    %3960 = vadd.xlane.f32.xlu0 %v3959
    %v3961 = vpop.xlane.xlu0 %3960
    %v3962 = vsel %vm1897, %v3950, 0.0
    %3963 = vadd.xlane.f32.xlu0 %v3962
    %v3964 = vpop.xlane.xlu0 %3963
    %v3965 = vsel %vm1897, %v3951, 0.0
    %3966 = vadd.xlane.f32.xlu0 %v3965
    %v3967 = vpop.xlane.xlu0 %3966
    %v3968 = vsel %vm1897, %v3952, 0.0
    %3969 = vadd.xlane.f32.xlu0 %v3968
    %v3970 = vpop.xlane.xlu0 %3969
    %vm3971 = vcmp.eq.s32.totalorder %v50, 1
    %v3972 = vsel %vm3971, 1, 0
    %v3973 = vcvt.s32.f32 %v3972
    %v3974 = vmul.f32 %v3955, %v3973
    %v3975 = vmul.f32 %v3958, %v3973
    %v3976 = vmul.f32 %v3961, %v3973
    %v3977 = vmul.f32 %v3964, %v3973
    %v3978 = vmul.f32 %v3967, %v3973
    %v3979 = vmul.f32 %v3970, %v3973
    %v3980 = vadd.f32 %v3929, %v3974
    %v3981 = vadd.f32 %v3930, %v3975
    %v3982 = vadd.f32 %v3931, %v3976
    %v3983 = vadd.f32 %v3932, %v3977
    %v3984 = vadd.f32 %v3933, %v3978
    %v3985 = vadd.f32 %v3934, %v3979
    %v3986 = vmul.u32 %v46, 24
    %vm3987 = vcmp.ge.s32.totalorder %v50, %v3986
    %v3988 = vadd.s32 %v3986, 24
    %vm3989 = vcmp.lt.s32.totalorder %v50, %v3988
    %vm3990 = vmand %vm3987, %vm3989
    %v3991 = vsel %vm3990, 1, 0
    %v3992 = vcvt.s32.f32 %v3991
    %v3994 = vlaneseq
    %v3995 = vshrl.u32 %v3994, 7
    %v3996 = vsub.s32 0, %v3995
    %v3997 = vrot.slane %v3889, %v3996
    %vm3999 = vcmask 392192
    %v4001 = vsel %vm3999, %v3992, 0
    %4003 = vmatprep.subr.mxu0 0.0
    %4004 = vmatpush1.msra.mxu0 %v3980
    %4005 = vmatprep.subr.mxu0 0.0
    %4006 = vmatpush1.msra.mxu0 %v3981
    %4007 = vmatprep.subr.mxu0 0.0
    %4008 = vmatpush1.msra.mxu0 %v3982
    %4009 = vmatprep.subr.mxu0 0.0
    %4010 = vmatpush1.msra.mxu0 %v3983
    %4011 = vmatprep.subr.mxu0 0.0
    %4012 = vmatpush1.msra.mxu0 %v3984
    %4013 = vmatprep.subr.mxu0 0.0
    %4014 = vmatpush1.msra.mxu0 %v3985
    %4015 = vmatprep.subr.mxu0 0.0
    %4016 = vmatpush1.msra.mxu0 0.0
    %4017 = vmatprep.subr.mxu0 0.0
    %4018 = vmatpush1.msra.mxu0 0.0
    %4019 = vmatprep.subr.mxu0 0.0
    %4020 = vmatpush1.msra.mxu0 0.0
    %4021 = vmatprep.subr.mxu0 0.0
    %4022 = vmatpush1.msra.mxu0 0.0
    %4023 = vmatprep.subr.mxu0 0.0
    %4024 = vmatpush1.msra.mxu0 0.0
    %4025 = vmatprep.subr.mxu0 0.0
    %4026 = vmatpush1.msra.mxu0 0.0
    %4027 = vmatprep.subr.mxu0 0.0
    %4028 = vmatpush1.msra.mxu0 0.0
    %4029 = vmatprep.subr.mxu0 0.0
    %4030 = vmatpush1.msra.mxu0 0.0
    %4031 = vmatprep.subr.mxu0 0.0
    %4032 = vmatpush1.msra.mxu0 0.0
    %4033 = vmatprep.subr.mxu0 0.0
    %4034 = vmatpush1.msra.mxu0 0.0
    %4035 = vmatprep.subr.mxu0 0.0
    %4036 = vmatpush1.msra.mxu0 0.0
    %4037 = vmatprep.subr.mxu0 0.0
    %4038 = vmatpush1.msra.mxu0 0.0
    %4039 = vmatprep.subr.mxu0 0.0
    %4040 = vmatpush1.msra.mxu0 0.0
    %4041 = vmatprep.subr.mxu0 0.0
    %4042 = vmatpush1.msra.mxu0 0.0
    %4043 = vmatprep.subr.mxu0 0.0
    %4044 = vmatpush1.msra.mxu0 0.0
    %4045 = vmatprep.subr.mxu0 0.0
    %4046 = vmatpush1.msra.mxu0 0.0
    %4047 = vmatprep.subr.mxu0 0.0
    %4048 = vmatpush1.msra.mxu0 0.0
    %4049 = vmatprep.subr.mxu0 0.0
    %4050 = vmatpush1.msra.mxu0 0.0
    %4051 = vmatprep.subr.mxu0 0.0
    %4052 = vmatpush1.msra.mxu0 0.0
    %4053 = vmatprep.subr.mxu0 0.0
    %4054 = vmatpush1.msra.mxu0 0.0
    %4055 = vmatprep.subr.mxu0 0.0
    %4056 = vmatpush1.msra.mxu0 0.0
    %4057 = vmatprep.subr.mxu0 0.0
    %4058 = vmatpush1.msra.mxu0 0.0
    %4059 = vmatprep.subr.mxu0 0.0
    %4060 = vmatpush1.msra.mxu0 0.0
    %4061 = vmatprep.subr.mxu0 0.0
    %4062 = vmatpush1.msra.mxu0 0.0
    %4063 = vmatprep.subr.mxu0 0.0
    %4064 = vmatpush1.msra.mxu0 0.0
    %4065 = vmatprep.subr.mxu0 0.0
    %4066 = vmatpush1.msra.mxu0 0.0
    %4067 = vmatprep.mubr.f32.mxu0 0.0
    %4068 = vmatmul.mubr.f32.gmra.mrb[0].mxu0 %v4001
    %v4069 = vpop.f32.mrb[0].mxu0
    %v4070 = vadd.f32 %v3997, %v4069
    %v4071 = vpop.f32.mrb[0].mxu0
    %4072 = vdwg.mxu0
    %vm4073 = vcmask 9216
    %4074 = vst.msk [vmem:[#allocation2] sm:$0x3] %vm4073, %v4070
    // Predicated region
    $region54: #{two_part_forward.1} parent=1 // pred_check
      _
    $region55: #{two_part_forward.1} parent=1 // pred_check_branch
      %4076 = sbr.rel (0) target = $region57
    $region56: #{two_part_forward.1} parent=1 // pred_region
      %s4078 = ssub.s32 32, 32
      %4079 = vsyncadd [#allocation3], %s4078
      %s4081 = sshll.u32 [#allocation2], 4
      %s4082 = int_to_ptr.vmem [resolvable:$true] %s4081
      %4084 = dma.vmem_to_hbm [thread:$0]  %s4082, 32, %s13, [#allocation3]
    $region57: #{two_part_forward.1} parent=1 // pred_fallthru
      _
    // Predicated region
    $region58: #{two_part_forward.1} parent=1 // pred_check
      _
    $region59: #{two_part_forward.1} parent=1 // pred_check_branch
      %4086 = sbr.rel (0) target = $region61
    $region60: #{two_part_forward.1} parent=1 // pred_region
      %4087 = dma.done [#allocation3], 32
    $region61: #{two_part_forward.1} parent=1 // pred_fallthru
      _
    %4088 = vsyncpa [#allocation3], 1

</llo_original>
